<compile_context>
chip_gen: v5e
topology: v5e:2x2
jax: 0.10.0
libtpu: 0.0.40
codegen_flags: <defaults>
</compile_context>

<pallas_src>
import functools

import jax
import jax.numpy as jnp
from jax.experimental import pallas as pl
from jax.experimental.pallas import tpu as pltpu


ACT_DTYPE = jnp.bfloat16   # activation / MXU-operand dtype
MXU_DTYPE = jnp.bfloat16   # packed weight dtype (accumulation stays f32)

_VSPEC = pl.BlockSpec(memory_space=pltpu.MemorySpace.VMEM)


# ----------------------------------------------------------------------------
# Pallas kernels
# ----------------------------------------------------------------------------

def _conv_relu_pool_kernel(p_ref, w_ref, b_ref, o_ref, *, n_rows):
    """Fused conv(2x2, pad=1) + 2x2/2 max-pool + bias + ReLU.

    p_ref: [4*N, K]   pool-window-major im2col patches (4 = 2x2 pool window,
                      N = B*Hp*Wp rows, K = 4*Cin flattened conv taps), bf16
    w_ref: [K, Cout]  conv weight matrix, bf16
    b_ref: [1, Cout]  f32 bias
    o_ref: [N, Cout]  pooled activation, bf16
    """
    # Single MXU matmul over all four pooling-window positions.
    y = jnp.dot(p_ref[...], w_ref[...],
                preferred_element_type=jnp.float32)          # [4N, Cout] f32
    # Max over the 4 window row-blocks (static, aligned row slices).
    m = jnp.maximum(
        jnp.maximum(y[0 * n_rows:1 * n_rows], y[1 * n_rows:2 * n_rows]),
        jnp.maximum(y[2 * n_rows:3 * n_rows], y[3 * n_rows:4 * n_rows]),
    )
    # Bias + ReLU once, after the max (same result since bias is uniform).
    o_ref[...] = jnp.maximum(m + b_ref[...], 0.0).astype(o_ref.dtype)


def _mlp_kernel(x_ref, w1_ref, b1_ref, w2_ref, b2_ref, o_ref):
    """Fused fc1 (+ReLU) and fc2.  Dropout = identity (eval mode).

    x_ref: [B, 1024] bf16 (NHWC flatten order; fc1 rows pre-permuted to match)
    w1_ref: [1024, 512] bf16   b1_ref: [1, 512] f32
    w2_ref: [512, NC]   bf16   b2_ref: [1, NC]  f32
    o_ref:  [B, NC] f32 logits
    """
    h = jnp.dot(x_ref[...], w1_ref[...], preferred_element_type=jnp.float32)
    h = jnp.maximum(h + b1_ref[...], 0.0)                    # ReLU, f32
    # TODO(synk): dropout(p=0.5) -> identity (eval mode)
    y = jnp.dot(h.astype(w2_ref.dtype), w2_ref[...],
                preferred_element_type=jnp.float32)
    o_ref[...] = (y + b2_ref[...]).astype(o_ref.dtype)


def conv_relu_pool(patches, wmat, bias):
    m4, _ = patches.shape
    n = m4 // 4
    cout = wmat.shape[1]
    return pl.pallas_call(
        functools.partial(_conv_relu_pool_kernel, n_rows=n),
        out_shape=jax.ShapeDtypeStruct((n, cout), ACT_DTYPE),
        in_specs=[_VSPEC, _VSPEC, _VSPEC],
        out_specs=_VSPEC,
    )(patches, wmat, bias)


def mlp(x, w1, b1, w2, b2):
    b = x.shape[0]
    nc = w2.shape[1]
    return pl.pallas_call(
        _mlp_kernel,
        out_shape=jax.ShapeDtypeStruct((b, nc), jnp.float32),
        in_specs=[_VSPEC] * 5,
        out_specs=_VSPEC,
    )(x, w1, b1, w2, b2)


# ----------------------------------------------------------------------------
# Plain-JAX glue: pool-window im2col (tiny activations, traced under jit)
# ----------------------------------------------------------------------------

def extract_pool_patches(x):
    """x: [B, H, W, C] NHWC -> patches [4*B*Hp*Wp, 4*C] (window-major rows).

    Conv: kernel 2x2, stride 1, padding 1 -> conv out (H+1, W+1).
    MaxPool: 2x2 stride 2 (floor)          -> pooled (Hp, Wp) = ((H+1)//2, (W+1)//2).
    Row block w = 2*dy+dx holds the conv taps (kh, kw, cin order) feeding conv
    output position (2i+dy, 2j+dx); rows within a block are flat (b, i, j).
    """
    B, H, W, C = x.shape
    xp = jnp.pad(x, ((0, 0), (1, 1), (1, 1), (0, 0)))
    Hp, Wp = (H + 1) // 2, (W + 1) // 2
    windows = []
    for dy in range(2):
        for dx in range(2):
            taps = []
            for kh in range(2):
                for kw in range(2):
                    r0, c0 = dy + kh, dx + kw
                    sl = xp[:, r0:r0 + 2 * Hp:2, c0:c0 + 2 * Wp:2, :]  # [B,Hp,Wp,C]
                    taps.append(sl)
            patch = jnp.stack(taps, axis=-2)                  # [B,Hp,Wp,4,C]
            windows.append(patch.reshape(B * Hp * Wp, 4 * C))
    return jnp.concatenate(windows, axis=0), (B, Hp, Wp)      # [4N, 4C]


# ----------------------------------------------------------------------------
# Parameters: PyTorch-layout init + one-time packing OUTSIDE jit
# ----------------------------------------------------------------------------

def init_params(key, num_classes=4):
    ks = jax.random.split(key, 10)

    def norm(k, shape, fan_in):
        return jax.random.normal(k, shape, jnp.float32) / jnp.sqrt(float(fan_in))

    p = {}
    # conv weights in PyTorch layout [Cout, Cin, kh, kw]
    p["conv1_w"] = norm(ks[0], (16, 3, 2, 2), 3 * 4)
    p["conv1_b"] = norm(ks[1], (16,), 3 * 4)
    p["conv2_w"] = norm(ks[2], (32, 16, 2, 2), 16 * 4)
    p["conv2_b"] = norm(ks[3], (32,), 16 * 4)
    p["conv3_w"] = norm(ks[4], (64, 32, 2, 2), 32 * 4)
    p["conv3_b"] = norm(ks[5], (64,), 32 * 4)
    # linear weights in PyTorch layout [Out, In]
    p["fc1_w"] = norm(ks[6], (512, 64 * 4 * 4), 64 * 4 * 4)
    p["fc1_b"] = norm(ks[7], (512,), 64 * 4 * 4)
    p["fc2_w"] = norm(ks[8], (num_classes, 512), 512)
    p["fc2_b"] = norm(ks[9], (num_classes,), 512)
    return p


def pack_params(raw):
    """One-time weight packing (called OUTSIDE the jitted forward).

    - conv [Cout,Cin,kh,kw] -> [kh*kw*Cin, Cout] matching patch (kh,kw,cin) order
    - fc1  [512, 64*4*4] (NCHW flatten: c,h,w) -> rows permuted to NHWC (h,w,c)
           then transposed -> [1024, 512]
    - fc2  [NC, 512] -> [512, NC]
    - matmul operands cast to bf16; biases kept f32, shaped [1, C]
    """
    def conv_wmat(w):
        cout, cin, kh, kw = w.shape
        return jnp.transpose(w, (2, 3, 1, 0)).reshape(kh * kw * cin, cout).astype(MXU_DTYPE)

    p = {}
    for i in (1, 2, 3):
        p[f"conv{i}_w"] = conv_wmat(raw[f"conv{i}_w"])
        p[f"conv{i}_b"] = raw[f"conv{i}_b"].reshape(1, -1).astype(jnp.float32)

    w1 = raw["fc1_w"].reshape(512, 64, 4, 4)           # [out, c, h, w]
    w1 = jnp.transpose(w1, (0, 2, 3, 1)).reshape(512, 64 * 4 * 4)  # rows -> (h,w,c)
    p["fc1_w"] = jnp.transpose(w1, (1, 0)).astype(MXU_DTYPE)       # [1024, 512]
    p["fc1_b"] = raw["fc1_b"].reshape(1, -1).astype(jnp.float32)
    p["fc2_w"] = jnp.transpose(raw["fc2_w"], (1, 0)).astype(MXU_DTYPE)  # [512, NC]
    p["fc2_b"] = raw["fc2_b"].reshape(1, -1).astype(jnp.float32)
    return p


# ----------------------------------------------------------------------------
# Forward pass (== SmallCNN.forward, eval mode)
# ----------------------------------------------------------------------------

@jax.jit
def small_cnn_forward(x_nchw, packed):
    x = jnp.transpose(x_nchw, (0, 2, 3, 1)).astype(ACT_DTYPE)      # NCHW -> NHWC

    for name in ("conv1", "conv2", "conv3"):
        patches, (B, Hp, Wp) = extract_pool_patches(x)
        out = conv_relu_pool(patches, packed[f"{name}_w"], packed[f"{name}_b"])
        x = out.reshape(B, Hp, Wp, out.shape[-1])                   # bitcast reshape

    # NHWC flatten; fc1 weight rows were pre-permuted to this order, so this
    # matches PyTorch's x.view(-1, 64*4*4) on the NCHW tensor exactly.
    x_flat = x.reshape(x.shape[0], -1)

    # dropout -> identity (eval mode); fc1(+ReLU) and fc2 fused in one kernel.
    return mlp(x_flat, packed["fc1_w"], packed["fc1_b"],
               packed["fc2_w"], packed["fc2_b"])


# ----------------------------------------------------------------------------
# Main
# ----------------------------------------------------------------------------

if __name__ == "__main__":
    key = jax.random.PRNGKey(0)
    k_x, k_p = jax.random.split(key)

    # fc1 expects 64*4*4 features -> input spatial 32x32 (3 channels), batch 2.
    x = jax.random.normal(k_x, (2, 3, 32, 32), jnp.float32)
    raw_params = init_params(k_p, num_classes=4)
    packed_params = pack_params(raw_params)      # one-time packing, outside jit

    logits = small_cnn_forward(x, packed_params)
    logits = jax.block_until_ready(logits)

    assert logits.shape == (2, 4), logits.shape
    assert bool(jnp.all(jnp.isfinite(logits)))
    print("KERNEL_OK")
</pallas_src>

<mosaic_0001>
module attributes {stable_mosaic.version = 11 : i64} {
  func.func @_conv_relu_pool_kernel(%arg0: memref<2048x12xbf16, #tpu.memory_space<vmem>>, %arg1: memref<12x16xbf16, #tpu.memory_space<vmem>>, %arg2: memref<1x16xf32, #tpu.memory_space<vmem>>, %arg3: memref<512x16xbf16, #tpu.memory_space<vmem>>) attributes {dimension_semantics = [], scalar_prefetch = 0 : i64, scratch_operands = 0 : i64, tpu.core_type = #tpu.core_type<tc>} {
    %c0 = arith.constant 0 : index
    %c0_0 = arith.constant 0 : index
    %0 = vector.load %arg0[%c0, %c0_0] : memref<2048x12xbf16, #tpu.memory_space<vmem>>, vector<2048x12xbf16>
    %c0_1 = arith.constant 0 : index
    %c0_2 = arith.constant 0 : index
    %1 = vector.load %arg1[%c0_1, %c0_2] : memref<12x16xbf16, #tpu.memory_space<vmem>>, vector<12x16xbf16>
    %cst = arith.constant dense<0.000000e+00> : vector<2048x16xf32>
    %2 = tpu.matmul %0, %1, %cst {dimension_numbers = #tpu.dot_dimension_numbers<[1], [0], [0], [1], [0, 0, 1, 1], [], []>} : vector<2048x12xbf16>, vector<12x16xbf16>, vector<2048x16xf32> -> vector<2048x16xf32>
    %3 = vector.extract_strided_slice %2 {offsets = [0, 0], sizes = [512, 16], strides = [1, 1]} : vector<2048x16xf32> to vector<512x16xf32>
    %4 = vector.extract_strided_slice %2 {offsets = [512, 0], sizes = [512, 16], strides = [1, 1]} : vector<2048x16xf32> to vector<512x16xf32>
    %5 = arith.maximumf %3, %4 : vector<512x16xf32>
    %6 = vector.extract_strided_slice %2 {offsets = [1024, 0], sizes = [512, 16], strides = [1, 1]} : vector<2048x16xf32> to vector<512x16xf32>
    %7 = vector.extract_strided_slice %2 {offsets = [1536, 0], sizes = [512, 16], strides = [1, 1]} : vector<2048x16xf32> to vector<512x16xf32>
    %8 = arith.maximumf %6, %7 : vector<512x16xf32>
    %9 = arith.maximumf %5, %8 : vector<512x16xf32>
    %c0_3 = arith.constant 0 : index
    %c0_4 = arith.constant 0 : index
    %10 = vector.load %arg2[%c0_3, %c0_4] : memref<1x16xf32, #tpu.memory_space<vmem>>, vector<1x16xf32>
    %11 = vector.broadcast %10 : vector<1x16xf32> to vector<512x16xf32>
    %12 = arith.addf %9, %11 : vector<512x16xf32>
    %cst_5 = arith.constant 0.000000e+00 : f32
    %13 = vector.broadcast %cst_5 : f32 to vector<512x16xf32>
    %14 = arith.maximumf %12, %13 : vector<512x16xf32>
    %15 = arith.truncf %14 : vector<512x16xf32> to vector<512x16xbf16>
    %c0_6 = arith.constant 0 : index
    %c0_7 = arith.constant 0 : index
    %16 = vector.load %arg3[%c0_6, %c0_7] : memref<512x16xbf16, #tpu.memory_space<vmem>>, vector<512x16xbf16>
    tpu.vector_store %arg3[%c0_6, %c0_7], %15 {strides = array<i32>} : memref<512x16xbf16, #tpu.memory_space<vmem>>, vector<512x16xbf16>,
    return
  }
}

module attributes {stable_mosaic.version = 11 : i64} {
  func.func @_conv_relu_pool_kernel(%arg0: memref<512x64xbf16, #tpu.memory_space<vmem>>, %arg1: memref<64x32xbf16, #tpu.memory_space<vmem>>, %arg2: memref<1x32xf32, #tpu.memory_space<vmem>>, %arg3: memref<128x32xbf16, #tpu.memory_space<vmem>>) attributes {dimension_semantics = [], scalar_prefetch = 0 : i64, scratch_operands = 0 : i64, tpu.core_type = #tpu.core_type<tc>} {
    %c0 = arith.constant 0 : index
    %c0_0 = arith.constant 0 : index
    %0 = vector.load %arg0[%c0, %c0_0] : memref<512x64xbf16, #tpu.memory_space<vmem>>, vector<512x64xbf16>
    %c0_1 = arith.constant 0 : index
    %c0_2 = arith.constant 0 : index
    %1 = vector.load %arg1[%c0_1, %c0_2] : memref<64x32xbf16, #tpu.memory_space<vmem>>, vector<64x32xbf16>
    %cst = arith.constant dense<0.000000e+00> : vector<512x32xf32>
    %2 = tpu.matmul %0, %1, %cst {dimension_numbers = #tpu.dot_dimension_numbers<[1], [0], [0], [1], [0, 0, 1, 1], [], []>} : vector<512x64xbf16>, vector<64x32xbf16>, vector<512x32xf32> -> vector<512x32xf32>
    %3 = vector.extract_strided_slice %2 {offsets = [0, 0], sizes = [128, 32], strides = [1, 1]} : vector<512x32xf32> to vector<128x32xf32>
    %4 = vector.extract_strided_slice %2 {offsets = [128, 0], sizes = [128, 32], strides = [1, 1]} : vector<512x32xf32> to vector<128x32xf32>
    %5 = arith.maximumf %3, %4 : vector<128x32xf32>
    %6 = vector.extract_strided_slice %2 {offsets = [256, 0], sizes = [128, 32], strides = [1, 1]} : vector<512x32xf32> to vector<128x32xf32>
    %7 = vector.extract_strided_slice %2 {offsets = [384, 0], sizes = [128, 32], strides = [1, 1]} : vector<512x32xf32> to vector<128x32xf32>
    %8 = arith.maximumf %6, %7 : vector<128x32xf32>
    %9 = arith.maximumf %5, %8 : vector<128x32xf32>
    %c0_3 = arith.constant 0 : index
    %c0_4 = arith.constant 0 : index
    %10 = vector.load %arg2[%c0_3, %c0_4] : memref<1x32xf32, #tpu.memory_space<vmem>>, vector<1x32xf32>
    %11 = vector.broadcast %10 : vector<1x32xf32> to vector<128x32xf32>
    %12 = arith.addf %9, %11 : vector<128x32xf32>
    %cst_5 = arith.constant 0.000000e+00 : f32
    %13 = vector.broadcast %cst_5 : f32 to vector<128x32xf32>
    %14 = arith.maximumf %12, %13 : vector<128x32xf32>
    %15 = arith.truncf %14 : vector<128x32xf32> to vector<128x32xbf16>
    %c0_6 = arith.constant 0 : index
    %c0_7 = arith.constant 0 : index
    %16 = vector.load %arg3[%c0_6, %c0_7] : memref<128x32xbf16, #tpu.memory_space<vmem>>, vector<128x32xbf16>
    tpu.vector_store %arg3[%c0_6, %c0_7], %15 {strides = array<i32>} : memref<128x32xbf16, #tpu.memory_space<vmem>>, vector<128x32xbf16>,
    return
  }
}

module attributes {stable_mosaic.version = 11 : i64} {
  func.func @_conv_relu_pool_kernel(%arg0: memref<128x128xbf16, #tpu.memory_space<vmem>>, %arg1: memref<128x64xbf16, #tpu.memory_space<vmem>>, %arg2: memref<1x64xf32, #tpu.memory_space<vmem>>, %arg3: memref<32x64xbf16, #tpu.memory_space<vmem>>) attributes {dimension_semantics = [], scalar_prefetch = 0 : i64, scratch_operands = 0 : i64, tpu.core_type = #tpu.core_type<tc>} {
    %c0 = arith.constant 0 : index
    %c0_0 = arith.constant 0 : index
    %0 = vector.load %arg0[%c0, %c0_0] : memref<128x128xbf16, #tpu.memory_space<vmem>>, vector<128x128xbf16>
    %c0_1 = arith.constant 0 : index
    %c0_2 = arith.constant 0 : index
    %1 = vector.load %arg1[%c0_1, %c0_2] : memref<128x64xbf16, #tpu.memory_space<vmem>>, vector<128x64xbf16>
    %cst = arith.constant dense<0.000000e+00> : vector<128x64xf32>
    %2 = tpu.matmul %0, %1, %cst {dimension_numbers = #tpu.dot_dimension_numbers<[1], [0], [0], [1], [0, 0, 1, 1], [], []>} : vector<128x128xbf16>, vector<128x64xbf16>, vector<128x64xf32> -> vector<128x64xf32>
    %3 = vector.extract_strided_slice %2 {offsets = [0, 0], sizes = [32, 64], strides = [1, 1]} : vector<128x64xf32> to vector<32x64xf32>
    %4 = vector.extract_strided_slice %2 {offsets = [32, 0], sizes = [32, 64], strides = [1, 1]} : vector<128x64xf32> to vector<32x64xf32>
    %5 = arith.maximumf %3, %4 : vector<32x64xf32>
    %6 = vector.extract_strided_slice %2 {offsets = [64, 0], sizes = [32, 64], strides = [1, 1]} : vector<128x64xf32> to vector<32x64xf32>
    %7 = vector.extract_strided_slice %2 {offsets = [96, 0], sizes = [32, 64], strides = [1, 1]} : vector<128x64xf32> to vector<32x64xf32>
    %8 = arith.maximumf %6, %7 : vector<32x64xf32>
    %9 = arith.maximumf %5, %8 : vector<32x64xf32>
    %c0_3 = arith.constant 0 : index
    %c0_4 = arith.constant 0 : index
    %10 = vector.load %arg2[%c0_3, %c0_4] : memref<1x64xf32, #tpu.memory_space<vmem>>, vector<1x64xf32>
    %11 = vector.broadcast %10 : vector<1x64xf32> to vector<32x64xf32>
    %12 = arith.addf %9, %11 : vector<32x64xf32>
    %cst_5 = arith.constant 0.000000e+00 : f32
    %13 = vector.broadcast %cst_5 : f32 to vector<32x64xf32>
    %14 = arith.maximumf %12, %13 : vector<32x64xf32>
    %15 = arith.truncf %14 : vector<32x64xf32> to vector<32x64xbf16>
    %c0_6 = arith.constant 0 : index
    %c0_7 = arith.constant 0 : index
    %16 = vector.load %arg3[%c0_6, %c0_7] : memref<32x64xbf16, #tpu.memory_space<vmem>>, vector<32x64xbf16>
    tpu.vector_store %arg3[%c0_6, %c0_7], %15 {strides = array<i32>} : memref<32x64xbf16, #tpu.memory_space<vmem>>, vector<32x64xbf16>,
    return
  }
}

module attributes {stable_mosaic.version = 11 : i64} {
  func.func @_mlp_kernel(%arg0: memref<2x1024xbf16, #tpu.memory_space<vmem>>, %arg1: memref<1024x512xbf16, #tpu.memory_space<vmem>>, %arg2: memref<1x512xf32, #tpu.memory_space<vmem>>, %arg3: memref<512x4xbf16, #tpu.memory_space<vmem>>, %arg4: memref<1x4xf32, #tpu.memory_space<vmem>>, %arg5: memref<2x4xf32, #tpu.memory_space<vmem>>) attributes {dimension_semantics = [], scalar_prefetch = 0 : i64, scratch_operands = 0 : i64, tpu.core_type = #tpu.core_type<tc>} {
    %c0 = arith.constant 0 : index
    %c0_0 = arith.constant 0 : index
    %0 = vector.load %arg0[%c0, %c0_0] : memref<2x1024xbf16, #tpu.memory_space<vmem>>, vector<2x1024xbf16>
    %c0_1 = arith.constant 0 : index
    %c0_2 = arith.constant 0 : index
    %1 = vector.load %arg1[%c0_1, %c0_2] : memref<1024x512xbf16, #tpu.memory_space<vmem>>, vector<1024x512xbf16>
    %cst = arith.constant dense<0.000000e+00> : vector<2x512xf32>
    %2 = tpu.matmul %0, %1, %cst {dimension_numbers = #tpu.dot_dimension_numbers<[1], [0], [0], [1], [0, 0, 1, 1], [], []>} : vector<2x1024xbf16>, vector<1024x512xbf16>, vector<2x512xf32> -> vector<2x512xf32>
    %c0_3 = arith.constant 0 : index
    %c0_4 = arith.constant 0 : index
    %3 = vector.load %arg2[%c0_3, %c0_4] : memref<1x512xf32, #tpu.memory_space<vmem>>, vector<1x512xf32>
    %4 = vector.broadcast %3 : vector<1x512xf32> to vector<2x512xf32>
    %5 = arith.addf %2, %4 : vector<2x512xf32>
    %cst_5 = arith.constant 0.000000e+00 : f32
    %6 = vector.broadcast %cst_5 : f32 to vector<2x512xf32>
    %7 = arith.maximumf %5, %6 : vector<2x512xf32>
    %8 = arith.truncf %7 : vector<2x512xf32> to vector<2x512xbf16>
    %c0_6 = arith.constant 0 : index
    %c0_7 = arith.constant 0 : index
    %9 = vector.load %arg3[%c0_6, %c0_7] : memref<512x4xbf16, #tpu.memory_space<vmem>>, vector<512x4xbf16>
    %cst_8 = arith.constant dense<0.000000e+00> : vector<2x4xf32>
    %10 = tpu.matmul %8, %9, %cst_8 {dimension_numbers = #tpu.dot_dimension_numbers<[1], [0], [0], [1], [0, 0, 1, 1], [], []>} : vector<2x512xbf16>, vector<512x4xbf16>, vector<2x4xf32> -> vector<2x4xf32>
    %c0_9 = arith.constant 0 : index
    %c0_10 = arith.constant 0 : index
    %11 = vector.load %arg4[%c0_9, %c0_10] : memref<1x4xf32, #tpu.memory_space<vmem>>, vector<1x4xf32>
    %12 = vector.broadcast %11 : vector<1x4xf32> to vector<2x4xf32>
    %13 = arith.addf %10, %12 : vector<2x4xf32>
    %c0_11 = arith.constant 0 : index
    %c0_12 = arith.constant 0 : index
    %14 = vector.load %arg5[%c0_11, %c0_12] : memref<2x4xf32, #tpu.memory_space<vmem>>, vector<2x4xf32>
    tpu.vector_store %arg5[%c0_11, %c0_12], %13 {strides = array<i32>} : memref<2x4xf32, #tpu.memory_space<vmem>>, vector<2x4xf32>,
    return
  }
}

</mosaic_0001>

<llo_original>
// kernel: small_cnn_forward.4
$region0: #{small_cnn_forward.4}
  #allocation0 [shape = 'u32[]', space=smem, size = 0x4, offset = 0x4, fixed_abs, tag = 'smem constant byte address 0x4 - core index']
  #allocation1 [shape = 'u32[72,128]{1,0:T(1,128)}', space=vmem, size = 0x9000, scoped, tag = 'internal scratch']
  %s0 = inlined_call_operand.vmem [shape: bf16[2048,12], index: 0, kind: input, shape index: {}]
  %s1 = inlined_call_operand.vmem [shape: bf16[12,16], index: 1, kind: input, shape index: {}]
  %s2 = inlined_call_operand.vmem [shape: f32[1,16], index: 2, kind: input, shape index: {}]
  %s3 = inlined_call_operand.vmem [shape: bf16[512,16], index: 3, kind: output, shape index: {}]
  %s4 = sld [smem:[#allocation0]]
  $region22: #{small_cnn_forward.4} parent=0
    _
  %s6 = ssub.s32 1, %s4
  %s7 = scalar_select 0, %s6, %s4
  // Predicated region
  $region2: #{small_cnn_forward.4} parent=0 // pred_check
    _
  $region3: #{small_cnn_forward.4} parent=0 // pred_check_branch
    %9 = sbr.rel (0) target = $region5
  $region4: #{small_cnn_forward.4} parent=0 // pred_region
    _
  $region5: #{small_cnn_forward.4} parent=0 // pred_fallthru
    _
  // Predicated region
  $region6: #{small_cnn_forward.4} parent=0 // pred_check
    _
  $region7: #{small_cnn_forward.4} parent=0 // pred_check_branch
    %11 = sbr.rel (0) target = $region9
  $region8: #{small_cnn_forward.4} parent=0 // pred_region
    _
  $region9: #{small_cnn_forward.4} parent=0 // pred_fallthru
    _
  // Predicated region
  $region10: #{small_cnn_forward.4} parent=0 // pred_check
    _
  $region11: #{small_cnn_forward.4} parent=0 // pred_check_branch
    %13 = sbr.rel (0) target = $region13
  $region12: #{small_cnn_forward.4} parent=0 // pred_region
    _
  $region13: #{small_cnn_forward.4} parent=0 // pred_fallthru
    _
  %v15 = vld [vmem:[%s0] sm:$0xf]
  %v16 = vld [vmem:[%s0 + $0x4] sm:$0xf]
  %v17 = vld [vmem:[%s0 + $0x8] sm:$0xf]
  %v18 = vld [vmem:[%s0 + $0xc] sm:$0xf]
  %v19 = vld [vmem:[%s0 + $0x10] sm:$0xf]
  %v20 = vld [vmem:[%s0 + $0x14] sm:$0xf]
  %v21 = vld [vmem:[%s0 + $0x18] sm:$0xf]
  %v22 = vld [vmem:[%s0 + $0x1c] sm:$0xf]
  %v23 = vld [vmem:[%s0 + $0x20] sm:$0xf]
  %v24 = vld [vmem:[%s0 + $0x24] sm:$0xf]
  %v25 = vld [vmem:[%s0 + $0x28] sm:$0xf]
  %v26 = vld [vmem:[%s0 + $0x2c] sm:$0xf]
  %v27 = vld [vmem:[%s0 + $0x30] sm:$0xf]
  %v28 = vld [vmem:[%s0 + $0x34] sm:$0xf]
  %v29 = vld [vmem:[%s0 + $0x38] sm:$0xf]
  %v30 = vld [vmem:[%s0 + $0x3c] sm:$0xf]
  %v31 = vld [vmem:[%s0 + $0x40] sm:$0xf]
  %v32 = vld [vmem:[%s0 + $0x44] sm:$0xf]
  %v33 = vld [vmem:[%s0 + $0x48] sm:$0xf]
  %v34 = vld [vmem:[%s0 + $0x4c] sm:$0xf]
  %v35 = vld [vmem:[%s0 + $0x50] sm:$0xf]
  %v36 = vld [vmem:[%s0 + $0x54] sm:$0xf]
  %v37 = vld [vmem:[%s0 + $0x58] sm:$0xf]
  %v38 = vld [vmem:[%s0 + $0x5c] sm:$0xf]
  %v39 = vld [vmem:[%s0 + $0x60] sm:$0xf]
  %v40 = vld [vmem:[%s0 + $0x64] sm:$0xf]
  %v41 = vld [vmem:[%s0 + $0x68] sm:$0xf]
  %v42 = vld [vmem:[%s0 + $0x6c] sm:$0xf]
  %v43 = vld [vmem:[%s0 + $0x70] sm:$0xf]
  %v44 = vld [vmem:[%s0 + $0x74] sm:$0xf]
  %v45 = vld [vmem:[%s0 + $0x78] sm:$0xf]
  %v46 = vld [vmem:[%s0 + $0x7c] sm:$0xf]
  %v47 = vld [vmem:[%s0 + $0x80] sm:$0xf]
  %v48 = vld [vmem:[%s0 + $0x84] sm:$0xf]
  %v49 = vld [vmem:[%s0 + $0x88] sm:$0xf]
  %v50 = vld [vmem:[%s0 + $0x8c] sm:$0xf]
  %v51 = vld [vmem:[%s0 + $0x90] sm:$0xf]
  %v52 = vld [vmem:[%s0 + $0x94] sm:$0xf]
  %v53 = vld [vmem:[%s0 + $0x98] sm:$0xf]
  %v54 = vld [vmem:[%s0 + $0x9c] sm:$0xf]
  %v55 = vld [vmem:[%s0 + $0xa0] sm:$0xf]
  %v56 = vld [vmem:[%s0 + $0xa4] sm:$0xf]
  %v57 = vld [vmem:[%s0 + $0xa8] sm:$0xf]
  %v58 = vld [vmem:[%s0 + $0xac] sm:$0xf]
  %v59 = vld [vmem:[%s0 + $0xb0] sm:$0xf]
  %v60 = vld [vmem:[%s0 + $0xb4] sm:$0xf]
  %v61 = vld [vmem:[%s0 + $0xb8] sm:$0xf]
  %v62 = vld [vmem:[%s0 + $0xbc] sm:$0xf]
  %v63 = vld [vmem:[%s0 + $0xc0] sm:$0xf]
  %v64 = vld [vmem:[%s0 + $0xc4] sm:$0xf]
  %v65 = vld [vmem:[%s0 + $0xc8] sm:$0xf]
  %v66 = vld [vmem:[%s0 + $0xcc] sm:$0xf]
  %v67 = vld [vmem:[%s0 + $0xd0] sm:$0xf]
  %v68 = vld [vmem:[%s0 + $0xd4] sm:$0xf]
  %v69 = vld [vmem:[%s0 + $0xd8] sm:$0xf]
  %v70 = vld [vmem:[%s0 + $0xdc] sm:$0xf]
  %v71 = vld [vmem:[%s0 + $0xe0] sm:$0xf]
  %v72 = vld [vmem:[%s0 + $0xe4] sm:$0xf]
  %v73 = vld [vmem:[%s0 + $0xe8] sm:$0xf]
  %v74 = vld [vmem:[%s0 + $0xec] sm:$0xf]
  %v75 = vld [vmem:[%s0 + $0xf0] sm:$0xf]
  %v76 = vld [vmem:[%s0 + $0xf4] sm:$0xf]
  %v77 = vld [vmem:[%s0 + $0xf8] sm:$0xf]
  %v78 = vld [vmem:[%s0 + $0xfc] sm:$0xf]
  %v79 = vld [vmem:[%s0 + $0x100] sm:$0xf]
  %v80 = vld [vmem:[%s0 + $0x104] sm:$0xf]
  %v81 = vld [vmem:[%s0 + $0x108] sm:$0xf]
  %v82 = vld [vmem:[%s0 + $0x10c] sm:$0xf]
  %v83 = vld [vmem:[%s0 + $0x110] sm:$0xf]
  %v84 = vld [vmem:[%s0 + $0x114] sm:$0xf]
  %v85 = vld [vmem:[%s0 + $0x118] sm:$0xf]
  %v86 = vld [vmem:[%s0 + $0x11c] sm:$0xf]
  %v87 = vld [vmem:[%s0 + $0x120] sm:$0xf]
  %v88 = vld [vmem:[%s0 + $0x124] sm:$0xf]
  %v89 = vld [vmem:[%s0 + $0x128] sm:$0xf]
  %v90 = vld [vmem:[%s0 + $0x12c] sm:$0xf]
  %v91 = vld [vmem:[%s0 + $0x130] sm:$0xf]
  %v92 = vld [vmem:[%s0 + $0x134] sm:$0xf]
  %v93 = vld [vmem:[%s0 + $0x138] sm:$0xf]
  %v94 = vld [vmem:[%s0 + $0x13c] sm:$0xf]
  %v95 = vld [vmem:[%s0 + $0x140] sm:$0xf]
  %v96 = vld [vmem:[%s0 + $0x144] sm:$0xf]
  %v97 = vld [vmem:[%s0 + $0x148] sm:$0xf]
  %v98 = vld [vmem:[%s0 + $0x14c] sm:$0xf]
  %v99 = vld [vmem:[%s0 + $0x150] sm:$0xf]
  %v100 = vld [vmem:[%s0 + $0x154] sm:$0xf]
  %v101 = vld [vmem:[%s0 + $0x158] sm:$0xf]
  %v102 = vld [vmem:[%s0 + $0x15c] sm:$0xf]
  %v103 = vld [vmem:[%s0 + $0x160] sm:$0xf]
  %v104 = vld [vmem:[%s0 + $0x164] sm:$0xf]
  %v105 = vld [vmem:[%s0 + $0x168] sm:$0xf]
  %v106 = vld [vmem:[%s0 + $0x16c] sm:$0xf]
  %v107 = vld [vmem:[%s0 + $0x170] sm:$0xf]
  %v108 = vld [vmem:[%s0 + $0x174] sm:$0xf]
  %v109 = vld [vmem:[%s0 + $0x178] sm:$0xf]
  %v110 = vld [vmem:[%s0 + $0x17c] sm:$0xf]
  %v111 = vld [vmem:[%s0 + $0x180] sm:$0xf]
  %v112 = vld [vmem:[%s0 + $0x184] sm:$0xf]
  %v113 = vld [vmem:[%s0 + $0x188] sm:$0xf]
  %v114 = vld [vmem:[%s0 + $0x18c] sm:$0xf]
  %v115 = vld [vmem:[%s0 + $0x190] sm:$0xf]
  %v116 = vld [vmem:[%s0 + $0x194] sm:$0xf]
  %v117 = vld [vmem:[%s0 + $0x198] sm:$0xf]
  %v118 = vld [vmem:[%s0 + $0x19c] sm:$0xf]
  %v119 = vld [vmem:[%s0 + $0x1a0] sm:$0xf]
  %v120 = vld [vmem:[%s0 + $0x1a4] sm:$0xf]
  %v121 = vld [vmem:[%s0 + $0x1a8] sm:$0xf]
  %v122 = vld [vmem:[%s0 + $0x1ac] sm:$0xf]
  %v123 = vld [vmem:[%s0 + $0x1b0] sm:$0xf]
  %v124 = vld [vmem:[%s0 + $0x1b4] sm:$0xf]
  %v125 = vld [vmem:[%s0 + $0x1b8] sm:$0xf]
  %v126 = vld [vmem:[%s0 + $0x1bc] sm:$0xf]
  %v127 = vld [vmem:[%s0 + $0x1c0] sm:$0xf]
  %v128 = vld [vmem:[%s0 + $0x1c4] sm:$0xf]
  %v129 = vld [vmem:[%s0 + $0x1c8] sm:$0xf]
  %v130 = vld [vmem:[%s0 + $0x1cc] sm:$0xf]
  %v131 = vld [vmem:[%s0 + $0x1d0] sm:$0xf]
  %v132 = vld [vmem:[%s0 + $0x1d4] sm:$0xf]
  %v133 = vld [vmem:[%s0 + $0x1d8] sm:$0xf]
  %v134 = vld [vmem:[%s0 + $0x1dc] sm:$0xf]
  %v135 = vld [vmem:[%s0 + $0x1e0] sm:$0xf]
  %v136 = vld [vmem:[%s0 + $0x1e4] sm:$0xf]
  %v137 = vld [vmem:[%s0 + $0x1e8] sm:$0xf]
  %v138 = vld [vmem:[%s0 + $0x1ec] sm:$0xf]
  %v139 = vld [vmem:[%s0 + $0x1f0] sm:$0xf]
  %v140 = vld [vmem:[%s0 + $0x1f4] sm:$0xf]
  %v141 = vld [vmem:[%s0 + $0x1f8] sm:$0xf]
  %v142 = vld [vmem:[%s0 + $0x1fc] sm:$0xf]
  %v143 = vld [vmem:[%s0 + $0x200] sm:$0xf]
  %v144 = vld [vmem:[%s0 + $0x204] sm:$0xf]
  %v145 = vld [vmem:[%s0 + $0x208] sm:$0xf]
  %v146 = vld [vmem:[%s0 + $0x20c] sm:$0xf]
  %v147 = vld [vmem:[%s0 + $0x210] sm:$0xf]
  %v148 = vld [vmem:[%s0 + $0x214] sm:$0xf]
  %v149 = vld [vmem:[%s0 + $0x218] sm:$0xf]
  %v150 = vld [vmem:[%s0 + $0x21c] sm:$0xf]
  %v151 = vld [vmem:[%s0 + $0x220] sm:$0xf]
  %v152 = vld [vmem:[%s0 + $0x224] sm:$0xf]
  %v153 = vld [vmem:[%s0 + $0x228] sm:$0xf]
  %v154 = vld [vmem:[%s0 + $0x22c] sm:$0xf]
  %v155 = vld [vmem:[%s0 + $0x230] sm:$0xf]
  %v156 = vld [vmem:[%s0 + $0x234] sm:$0xf]
  %v157 = vld [vmem:[%s0 + $0x238] sm:$0xf]
  %v158 = vld [vmem:[%s0 + $0x23c] sm:$0xf]
  %v159 = vld [vmem:[%s0 + $0x240] sm:$0xf]
  %v160 = vld [vmem:[%s0 + $0x244] sm:$0xf]
  %v161 = vld [vmem:[%s0 + $0x248] sm:$0xf]
  %v162 = vld [vmem:[%s0 + $0x24c] sm:$0xf]
  %v163 = vld [vmem:[%s0 + $0x250] sm:$0xf]
  %v164 = vld [vmem:[%s0 + $0x254] sm:$0xf]
  %v165 = vld [vmem:[%s0 + $0x258] sm:$0xf]
  %v166 = vld [vmem:[%s0 + $0x25c] sm:$0xf]
  %v167 = vld [vmem:[%s0 + $0x260] sm:$0xf]
  %v168 = vld [vmem:[%s0 + $0x264] sm:$0xf]
  %v169 = vld [vmem:[%s0 + $0x268] sm:$0xf]
  %v170 = vld [vmem:[%s0 + $0x26c] sm:$0xf]
  %v171 = vld [vmem:[%s0 + $0x270] sm:$0xf]
  %v172 = vld [vmem:[%s0 + $0x274] sm:$0xf]
  %v173 = vld [vmem:[%s0 + $0x278] sm:$0xf]
  %v174 = vld [vmem:[%s0 + $0x27c] sm:$0xf]
  %v175 = vld [vmem:[%s0 + $0x280] sm:$0xf]
  %v176 = vld [vmem:[%s0 + $0x284] sm:$0xf]
  %v177 = vld [vmem:[%s0 + $0x288] sm:$0xf]
  %v178 = vld [vmem:[%s0 + $0x28c] sm:$0xf]
  %v179 = vld [vmem:[%s0 + $0x290] sm:$0xf]
  %v180 = vld [vmem:[%s0 + $0x294] sm:$0xf]
  %v181 = vld [vmem:[%s0 + $0x298] sm:$0xf]
  %v182 = vld [vmem:[%s0 + $0x29c] sm:$0xf]
  %v183 = vld [vmem:[%s0 + $0x2a0] sm:$0xf]
  %v184 = vld [vmem:[%s0 + $0x2a4] sm:$0xf]
  %v185 = vld [vmem:[%s0 + $0x2a8] sm:$0xf]
  %v186 = vld [vmem:[%s0 + $0x2ac] sm:$0xf]
  %v187 = vld [vmem:[%s0 + $0x2b0] sm:$0xf]
  %v188 = vld [vmem:[%s0 + $0x2b4] sm:$0xf]
  %v189 = vld [vmem:[%s0 + $0x2b8] sm:$0xf]
  %v190 = vld [vmem:[%s0 + $0x2bc] sm:$0xf]
  %v191 = vld [vmem:[%s0 + $0x2c0] sm:$0xf]
  %v192 = vld [vmem:[%s0 + $0x2c4] sm:$0xf]
  %v193 = vld [vmem:[%s0 + $0x2c8] sm:$0xf]
  %v194 = vld [vmem:[%s0 + $0x2cc] sm:$0xf]
  %v195 = vld [vmem:[%s0 + $0x2d0] sm:$0xf]
  %v196 = vld [vmem:[%s0 + $0x2d4] sm:$0xf]
  %v197 = vld [vmem:[%s0 + $0x2d8] sm:$0xf]
  %v198 = vld [vmem:[%s0 + $0x2dc] sm:$0xf]
  %v199 = vld [vmem:[%s0 + $0x2e0] sm:$0xf]
  %v200 = vld [vmem:[%s0 + $0x2e4] sm:$0xf]
  %v201 = vld [vmem:[%s0 + $0x2e8] sm:$0xf]
  %v202 = vld [vmem:[%s0 + $0x2ec] sm:$0xf]
  %v203 = vld [vmem:[%s0 + $0x2f0] sm:$0xf]
  %v204 = vld [vmem:[%s0 + $0x2f4] sm:$0xf]
  %v205 = vld [vmem:[%s0 + $0x2f8] sm:$0xf]
  %v206 = vld [vmem:[%s0 + $0x2fc] sm:$0xf]
  %v207 = vld [vmem:[%s0 + $0x300] sm:$0xf]
  %v208 = vld [vmem:[%s0 + $0x304] sm:$0xf]
  %v209 = vld [vmem:[%s0 + $0x308] sm:$0xf]
  %v210 = vld [vmem:[%s0 + $0x30c] sm:$0xf]
  %v211 = vld [vmem:[%s0 + $0x310] sm:$0xf]
  %v212 = vld [vmem:[%s0 + $0x314] sm:$0xf]
  %v213 = vld [vmem:[%s0 + $0x318] sm:$0xf]
  %v214 = vld [vmem:[%s0 + $0x31c] sm:$0xf]
  %v215 = vld [vmem:[%s0 + $0x320] sm:$0xf]
  %v216 = vld [vmem:[%s0 + $0x324] sm:$0xf]
  %v217 = vld [vmem:[%s0 + $0x328] sm:$0xf]
  %v218 = vld [vmem:[%s0 + $0x32c] sm:$0xf]
  %v219 = vld [vmem:[%s0 + $0x330] sm:$0xf]
  %v220 = vld [vmem:[%s0 + $0x334] sm:$0xf]
  %v221 = vld [vmem:[%s0 + $0x338] sm:$0xf]
  %v222 = vld [vmem:[%s0 + $0x33c] sm:$0xf]
  %v223 = vld [vmem:[%s0 + $0x340] sm:$0xf]
  %v224 = vld [vmem:[%s0 + $0x344] sm:$0xf]
  %v225 = vld [vmem:[%s0 + $0x348] sm:$0xf]
  %v226 = vld [vmem:[%s0 + $0x34c] sm:$0xf]
  %v227 = vld [vmem:[%s0 + $0x350] sm:$0xf]
  %v228 = vld [vmem:[%s0 + $0x354] sm:$0xf]
  %v229 = vld [vmem:[%s0 + $0x358] sm:$0xf]
  %v230 = vld [vmem:[%s0 + $0x35c] sm:$0xf]
  %v231 = vld [vmem:[%s0 + $0x360] sm:$0xf]
  %v232 = vld [vmem:[%s0 + $0x364] sm:$0xf]
  %v233 = vld [vmem:[%s0 + $0x368] sm:$0xf]
  %v234 = vld [vmem:[%s0 + $0x36c] sm:$0xf]
  %v235 = vld [vmem:[%s0 + $0x370] sm:$0xf]
  %v236 = vld [vmem:[%s0 + $0x374] sm:$0xf]
  %v237 = vld [vmem:[%s0 + $0x378] sm:$0xf]
  %v238 = vld [vmem:[%s0 + $0x37c] sm:$0xf]
  %v239 = vld [vmem:[%s0 + $0x380] sm:$0xf]
  %v240 = vld [vmem:[%s0 + $0x384] sm:$0xf]
  %v241 = vld [vmem:[%s0 + $0x388] sm:$0xf]
  %v242 = vld [vmem:[%s0 + $0x38c] sm:$0xf]
  %v243 = vld [vmem:[%s0 + $0x390] sm:$0xf]
  %v244 = vld [vmem:[%s0 + $0x394] sm:$0xf]
  %v245 = vld [vmem:[%s0 + $0x398] sm:$0xf]
  %v246 = vld [vmem:[%s0 + $0x39c] sm:$0xf]
  %v247 = vld [vmem:[%s0 + $0x3a0] sm:$0xf]
  %v248 = vld [vmem:[%s0 + $0x3a4] sm:$0xf]
  %v249 = vld [vmem:[%s0 + $0x3a8] sm:$0xf]
  %v250 = vld [vmem:[%s0 + $0x3ac] sm:$0xf]
  %v251 = vld [vmem:[%s0 + $0x3b0] sm:$0xf]
  %v252 = vld [vmem:[%s0 + $0x3b4] sm:$0xf]
  %v253 = vld [vmem:[%s0 + $0x3b8] sm:$0xf]
  %v254 = vld [vmem:[%s0 + $0x3bc] sm:$0xf]
  %v255 = vld [vmem:[%s0 + $0x3c0] sm:$0xf]
  %v256 = vld [vmem:[%s0 + $0x3c4] sm:$0xf]
  %v257 = vld [vmem:[%s0 + $0x3c8] sm:$0xf]
  %v258 = vld [vmem:[%s0 + $0x3cc] sm:$0xf]
  %v259 = vld [vmem:[%s0 + $0x3d0] sm:$0xf]
  %v260 = vld [vmem:[%s0 + $0x3d4] sm:$0xf]
  %v261 = vld [vmem:[%s0 + $0x3d8] sm:$0xf]
  %v262 = vld [vmem:[%s0 + $0x3dc] sm:$0xf]
  %v263 = vld [vmem:[%s0 + $0x3e0] sm:$0xf]
  %v264 = vld [vmem:[%s0 + $0x3e4] sm:$0xf]
  %v265 = vld [vmem:[%s0 + $0x3e8] sm:$0xf]
  %v266 = vld [vmem:[%s0 + $0x3ec] sm:$0xf]
  %v267 = vld [vmem:[%s0 + $0x3f0] sm:$0xf]
  %v268 = vld [vmem:[%s0 + $0x3f4] sm:$0xf]
  %v269 = vld [vmem:[%s0 + $0x3f8] sm:$0xf]
  %v270 = vld [vmem:[%s0 + $0x3fc] sm:$0xf]
  %v271 = vld [vmem:[%s1] sm:$0xf]
  %v272 = vld [vmem:[%s1 + $0x4] sm:$0x3]
  %v529 = vunpack.c.l.b16 %v15
  %v530 = vunpack.c.l.b16 %v16
  %v531 = vunpack.c.l.b16 %v17
  %v532 = vunpack.c.l.b16 %v18
  %v533 = vunpack.c.l.b16 %v19
  %v534 = vunpack.c.l.b16 %v20
  %v535 = vunpack.c.l.b16 %v21
  %v536 = vunpack.c.l.b16 %v22
  %v537 = vunpack.c.l.b16 %v23
  %v538 = vunpack.c.l.b16 %v24
  %v539 = vunpack.c.l.b16 %v25
  %v540 = vunpack.c.l.b16 %v26
  %v541 = vunpack.c.l.b16 %v27
  %v542 = vunpack.c.l.b16 %v28
  %v543 = vunpack.c.l.b16 %v29
  %v544 = vunpack.c.l.b16 %v30
  %v545 = vunpack.c.l.b16 %v31
  %v546 = vunpack.c.l.b16 %v32
  %v547 = vunpack.c.l.b16 %v33
  %v548 = vunpack.c.l.b16 %v34
  %v549 = vunpack.c.l.b16 %v35
  %v550 = vunpack.c.l.b16 %v36
  %v551 = vunpack.c.l.b16 %v37
  %v552 = vunpack.c.l.b16 %v38
  %v553 = vunpack.c.l.b16 %v39
  %v554 = vunpack.c.l.b16 %v40
  %v555 = vunpack.c.l.b16 %v41
  %v556 = vunpack.c.l.b16 %v42
  %v557 = vunpack.c.l.b16 %v43
  %v558 = vunpack.c.l.b16 %v44
  %v559 = vunpack.c.l.b16 %v45
  %v560 = vunpack.c.l.b16 %v46
  %v561 = vunpack.c.l.b16 %v47
  %v562 = vunpack.c.l.b16 %v48
  %v563 = vunpack.c.l.b16 %v49
  %v564 = vunpack.c.l.b16 %v50
  %v565 = vunpack.c.l.b16 %v51
  %v566 = vunpack.c.l.b16 %v52
  %v567 = vunpack.c.l.b16 %v53
  %v568 = vunpack.c.l.b16 %v54
  %v569 = vunpack.c.l.b16 %v55
  %v570 = vunpack.c.l.b16 %v56
  %v571 = vunpack.c.l.b16 %v57
  %v572 = vunpack.c.l.b16 %v58
  %v573 = vunpack.c.l.b16 %v59
  %v574 = vunpack.c.l.b16 %v60
  %v575 = vunpack.c.l.b16 %v61
  %v576 = vunpack.c.l.b16 %v62
  %v577 = vunpack.c.l.b16 %v63
  %v578 = vunpack.c.l.b16 %v64
  %v579 = vunpack.c.l.b16 %v65
  %v580 = vunpack.c.l.b16 %v66
  %v581 = vunpack.c.l.b16 %v67
  %v582 = vunpack.c.l.b16 %v68
  %v583 = vunpack.c.l.b16 %v69
  %v584 = vunpack.c.l.b16 %v70
  %v585 = vunpack.c.l.b16 %v71
  %v586 = vunpack.c.l.b16 %v72
  %v587 = vunpack.c.l.b16 %v73
  %v588 = vunpack.c.l.b16 %v74
  %v589 = vunpack.c.l.b16 %v75
  %v590 = vunpack.c.l.b16 %v76
  %v591 = vunpack.c.l.b16 %v77
  %v592 = vunpack.c.l.b16 %v78
  %v593 = vunpack.c.l.b16 %v79
  %v594 = vunpack.c.l.b16 %v80
  %v595 = vunpack.c.l.b16 %v81
  %v596 = vunpack.c.l.b16 %v82
  %v597 = vunpack.c.l.b16 %v83
  %v598 = vunpack.c.l.b16 %v84
  %v599 = vunpack.c.l.b16 %v85
  %v600 = vunpack.c.l.b16 %v86
  %v601 = vunpack.c.l.b16 %v87
  %v602 = vunpack.c.l.b16 %v88
  %v603 = vunpack.c.l.b16 %v89
  %v604 = vunpack.c.l.b16 %v90
  %v605 = vunpack.c.l.b16 %v91
  %v606 = vunpack.c.l.b16 %v92
  %v607 = vunpack.c.l.b16 %v93
  %v608 = vunpack.c.l.b16 %v94
  %v609 = vunpack.c.l.b16 %v95
  %v610 = vunpack.c.l.b16 %v96
  %v611 = vunpack.c.l.b16 %v97
  %v612 = vunpack.c.l.b16 %v98
  %v613 = vunpack.c.l.b16 %v99
  %v614 = vunpack.c.l.b16 %v100
  %v615 = vunpack.c.l.b16 %v101
  %v616 = vunpack.c.l.b16 %v102
  %v617 = vunpack.c.l.b16 %v103
  %v618 = vunpack.c.l.b16 %v104
  %v619 = vunpack.c.l.b16 %v105
  %v620 = vunpack.c.l.b16 %v106
  %v621 = vunpack.c.l.b16 %v107
  %v622 = vunpack.c.l.b16 %v108
  %v623 = vunpack.c.l.b16 %v109
  %v624 = vunpack.c.l.b16 %v110
  %v625 = vunpack.c.l.b16 %v111
  %v626 = vunpack.c.l.b16 %v112
  %v627 = vunpack.c.l.b16 %v113
  %v628 = vunpack.c.l.b16 %v114
  %v629 = vunpack.c.l.b16 %v115
  %v630 = vunpack.c.l.b16 %v116
  %v631 = vunpack.c.l.b16 %v117
  %v632 = vunpack.c.l.b16 %v118
  %v633 = vunpack.c.l.b16 %v119
  %v634 = vunpack.c.l.b16 %v120
  %v635 = vunpack.c.l.b16 %v121
  %v636 = vunpack.c.l.b16 %v122
  %v637 = vunpack.c.l.b16 %v123
  %v638 = vunpack.c.l.b16 %v124
  %v639 = vunpack.c.l.b16 %v125
  %v640 = vunpack.c.l.b16 %v126
  %v641 = vunpack.c.l.b16 %v127
  %v642 = vunpack.c.l.b16 %v128
  %v643 = vunpack.c.l.b16 %v129
  %v644 = vunpack.c.l.b16 %v130
  %v645 = vunpack.c.l.b16 %v131
  %v646 = vunpack.c.l.b16 %v132
  %v647 = vunpack.c.l.b16 %v133
  %v648 = vunpack.c.l.b16 %v134
  %v649 = vunpack.c.l.b16 %v135
  %v650 = vunpack.c.l.b16 %v136
  %v651 = vunpack.c.l.b16 %v137
  %v652 = vunpack.c.l.b16 %v138
  %v653 = vunpack.c.l.b16 %v139
  %v654 = vunpack.c.l.b16 %v140
  %v655 = vunpack.c.l.b16 %v141
  %v656 = vunpack.c.l.b16 %v142
  %v657 = vunpack.c.l.b16 %v143
  %v658 = vunpack.c.l.b16 %v144
  %v659 = vunpack.c.l.b16 %v145
  %v660 = vunpack.c.l.b16 %v146
  %v661 = vunpack.c.l.b16 %v147
  %v662 = vunpack.c.l.b16 %v148
  %v663 = vunpack.c.l.b16 %v149
  %v664 = vunpack.c.l.b16 %v150
  %v665 = vunpack.c.l.b16 %v151
  %v666 = vunpack.c.l.b16 %v152
  %v667 = vunpack.c.l.b16 %v153
  %v668 = vunpack.c.l.b16 %v154
  %v669 = vunpack.c.l.b16 %v155
  %v670 = vunpack.c.l.b16 %v156
  %v671 = vunpack.c.l.b16 %v157
  %v672 = vunpack.c.l.b16 %v158
  %v673 = vunpack.c.l.b16 %v159
  %v674 = vunpack.c.l.b16 %v160
  %v675 = vunpack.c.l.b16 %v161
  %v676 = vunpack.c.l.b16 %v162
  %v677 = vunpack.c.l.b16 %v163
  %v678 = vunpack.c.l.b16 %v164
  %v679 = vunpack.c.l.b16 %v165
  %v680 = vunpack.c.l.b16 %v166
  %v681 = vunpack.c.l.b16 %v167
  %v682 = vunpack.c.l.b16 %v168
  %v683 = vunpack.c.l.b16 %v169
  %v684 = vunpack.c.l.b16 %v170
  %v685 = vunpack.c.l.b16 %v171
  %v686 = vunpack.c.l.b16 %v172
  %v687 = vunpack.c.l.b16 %v173
  %v688 = vunpack.c.l.b16 %v174
  %v689 = vunpack.c.l.b16 %v175
  %v690 = vunpack.c.l.b16 %v176
  %v691 = vunpack.c.l.b16 %v177
  %v692 = vunpack.c.l.b16 %v178
  %v693 = vunpack.c.l.b16 %v179
  %v694 = vunpack.c.l.b16 %v180
  %v695 = vunpack.c.l.b16 %v181
  %v696 = vunpack.c.l.b16 %v182
  %v697 = vunpack.c.l.b16 %v183
  %v698 = vunpack.c.l.b16 %v184
  %v699 = vunpack.c.l.b16 %v185
  %v700 = vunpack.c.l.b16 %v186
  %v701 = vunpack.c.l.b16 %v187
  %v702 = vunpack.c.l.b16 %v188
  %v703 = vunpack.c.l.b16 %v189
  %v704 = vunpack.c.l.b16 %v190
  %v705 = vunpack.c.l.b16 %v191
  %v706 = vunpack.c.l.b16 %v192
  %v707 = vunpack.c.l.b16 %v193
  %v708 = vunpack.c.l.b16 %v194
  %v709 = vunpack.c.l.b16 %v195
  %v710 = vunpack.c.l.b16 %v196
  %v711 = vunpack.c.l.b16 %v197
  %v712 = vunpack.c.l.b16 %v198
  %v713 = vunpack.c.l.b16 %v199
  %v714 = vunpack.c.l.b16 %v200
  %v715 = vunpack.c.l.b16 %v201
  %v716 = vunpack.c.l.b16 %v202
  %v717 = vunpack.c.l.b16 %v203
  %v718 = vunpack.c.l.b16 %v204
  %v719 = vunpack.c.l.b16 %v205
  %v720 = vunpack.c.l.b16 %v206
  %v721 = vunpack.c.l.b16 %v207
  %v722 = vunpack.c.l.b16 %v208
  %v723 = vunpack.c.l.b16 %v209
  %v724 = vunpack.c.l.b16 %v210
  %v725 = vunpack.c.l.b16 %v211
  %v726 = vunpack.c.l.b16 %v212
  %v727 = vunpack.c.l.b16 %v213
  %v728 = vunpack.c.l.b16 %v214
  %v729 = vunpack.c.l.b16 %v215
  %v730 = vunpack.c.l.b16 %v216
  %v731 = vunpack.c.l.b16 %v217
  %v732 = vunpack.c.l.b16 %v218
  %v733 = vunpack.c.l.b16 %v219
  %v734 = vunpack.c.l.b16 %v220
  %v735 = vunpack.c.l.b16 %v221
  %v736 = vunpack.c.l.b16 %v222
  %v737 = vunpack.c.l.b16 %v223
  %v738 = vunpack.c.l.b16 %v224
  %v739 = vunpack.c.l.b16 %v225
  %v740 = vunpack.c.l.b16 %v226
  %v741 = vunpack.c.l.b16 %v227
  %v742 = vunpack.c.l.b16 %v228
  %v743 = vunpack.c.l.b16 %v229
  %v744 = vunpack.c.l.b16 %v230
  %v745 = vunpack.c.l.b16 %v231
  %v746 = vunpack.c.l.b16 %v232
  %v747 = vunpack.c.l.b16 %v233
  %v748 = vunpack.c.l.b16 %v234
  %v749 = vunpack.c.l.b16 %v235
  %v750 = vunpack.c.l.b16 %v236
  %v751 = vunpack.c.l.b16 %v237
  %v752 = vunpack.c.l.b16 %v238
  %v753 = vunpack.c.l.b16 %v239
  %v754 = vunpack.c.l.b16 %v240
  %v755 = vunpack.c.l.b16 %v241
  %v756 = vunpack.c.l.b16 %v242
  %v757 = vunpack.c.l.b16 %v243
  %v758 = vunpack.c.l.b16 %v244
  %v759 = vunpack.c.l.b16 %v245
  %v760 = vunpack.c.l.b16 %v246
  %v761 = vunpack.c.l.b16 %v247
  %v762 = vunpack.c.l.b16 %v248
  %v763 = vunpack.c.l.b16 %v249
  %v764 = vunpack.c.l.b16 %v250
  %v765 = vunpack.c.l.b16 %v251
  %v766 = vunpack.c.l.b16 %v252
  %v767 = vunpack.c.l.b16 %v253
  %v768 = vunpack.c.l.b16 %v254
  %v769 = vunpack.c.l.b16 %v255
  %v770 = vunpack.c.l.b16 %v256
  %v771 = vunpack.c.l.b16 %v257
  %v772 = vunpack.c.l.b16 %v258
  %v773 = vunpack.c.l.b16 %v259
  %v774 = vunpack.c.l.b16 %v260
  %v775 = vunpack.c.l.b16 %v261
  %v776 = vunpack.c.l.b16 %v262
  %v777 = vunpack.c.l.b16 %v263
  %v778 = vunpack.c.l.b16 %v264
  %v779 = vunpack.c.l.b16 %v265
  %v780 = vunpack.c.l.b16 %v266
  %v781 = vunpack.c.l.b16 %v267
  %v782 = vunpack.c.l.b16 %v268
  %v783 = vunpack.c.l.b16 %v269
  %v784 = vunpack.c.l.b16 %v270
  %v785 = vpack.c.b16 %v530, %v529
  %v786 = vpack.c.b16 %v532, %v531
  %v787 = vpack.c.b16 %v534, %v533
  %v788 = vpack.c.b16 %v536, %v535
  %v789 = vpack.c.b16 %v538, %v537
  %v790 = vpack.c.b16 %v540, %v539
  %v791 = vpack.c.b16 %v542, %v541
  %v792 = vpack.c.b16 %v544, %v543
  %v793 = vpack.c.b16 %v546, %v545
  %v794 = vpack.c.b16 %v548, %v547
  %v795 = vpack.c.b16 %v550, %v549
  %v796 = vpack.c.b16 %v552, %v551
  %v797 = vpack.c.b16 %v554, %v553
  %v798 = vpack.c.b16 %v556, %v555
  %v799 = vpack.c.b16 %v558, %v557
  %v800 = vpack.c.b16 %v560, %v559
  %v801 = vpack.c.b16 %v562, %v561
  %v802 = vpack.c.b16 %v564, %v563
  %v803 = vpack.c.b16 %v566, %v565
  %v804 = vpack.c.b16 %v568, %v567
  %v805 = vpack.c.b16 %v570, %v569
  %v806 = vpack.c.b16 %v572, %v571
  %v807 = vpack.c.b16 %v574, %v573
  %v808 = vpack.c.b16 %v576, %v575
  %v809 = vpack.c.b16 %v578, %v577
  %v810 = vpack.c.b16 %v580, %v579
  %v811 = vpack.c.b16 %v582, %v581
  %v812 = vpack.c.b16 %v584, %v583
  %v813 = vpack.c.b16 %v586, %v585
  %v814 = vpack.c.b16 %v588, %v587
  %v815 = vpack.c.b16 %v590, %v589
  %v816 = vpack.c.b16 %v592, %v591
  %v817 = vpack.c.b16 %v594, %v593
  %v818 = vpack.c.b16 %v596, %v595
  %v819 = vpack.c.b16 %v598, %v597
  %v820 = vpack.c.b16 %v600, %v599
  %v821 = vpack.c.b16 %v602, %v601
  %v822 = vpack.c.b16 %v604, %v603
  %v823 = vpack.c.b16 %v606, %v605
  %v824 = vpack.c.b16 %v608, %v607
  %v825 = vpack.c.b16 %v610, %v609
  %v826 = vpack.c.b16 %v612, %v611
  %v827 = vpack.c.b16 %v614, %v613
  %v828 = vpack.c.b16 %v616, %v615
  %v829 = vpack.c.b16 %v618, %v617
  %v830 = vpack.c.b16 %v620, %v619
  %v831 = vpack.c.b16 %v622, %v621
  %v832 = vpack.c.b16 %v624, %v623
  %v833 = vpack.c.b16 %v626, %v625
  %v834 = vpack.c.b16 %v628, %v627
  %v835 = vpack.c.b16 %v630, %v629
  %v836 = vpack.c.b16 %v632, %v631
  %v837 = vpack.c.b16 %v634, %v633
  %v838 = vpack.c.b16 %v636, %v635
  %v839 = vpack.c.b16 %v638, %v637
  %v840 = vpack.c.b16 %v640, %v639
  %v841 = vpack.c.b16 %v642, %v641
  %v842 = vpack.c.b16 %v644, %v643
  %v843 = vpack.c.b16 %v646, %v645
  %v844 = vpack.c.b16 %v648, %v647
  %v845 = vpack.c.b16 %v650, %v649
  %v846 = vpack.c.b16 %v652, %v651
  %v847 = vpack.c.b16 %v654, %v653
  %v848 = vpack.c.b16 %v656, %v655
  %v849 = vpack.c.b16 %v658, %v657
  %v850 = vpack.c.b16 %v660, %v659
  %v851 = vpack.c.b16 %v662, %v661
  %v852 = vpack.c.b16 %v664, %v663
  %v853 = vpack.c.b16 %v666, %v665
  %v854 = vpack.c.b16 %v668, %v667
  %v855 = vpack.c.b16 %v670, %v669
  %v856 = vpack.c.b16 %v672, %v671
  %v857 = vpack.c.b16 %v674, %v673
  %v858 = vpack.c.b16 %v676, %v675
  %v859 = vpack.c.b16 %v678, %v677
  %v860 = vpack.c.b16 %v680, %v679
  %v861 = vpack.c.b16 %v682, %v681
  %v862 = vpack.c.b16 %v684, %v683
  %v863 = vpack.c.b16 %v686, %v685
  %v864 = vpack.c.b16 %v688, %v687
  %v865 = vpack.c.b16 %v690, %v689
  %v866 = vpack.c.b16 %v692, %v691
  %v867 = vpack.c.b16 %v694, %v693
  %v868 = vpack.c.b16 %v696, %v695
  %v869 = vpack.c.b16 %v698, %v697
  %v870 = vpack.c.b16 %v700, %v699
  %v871 = vpack.c.b16 %v702, %v701
  %v872 = vpack.c.b16 %v704, %v703
  %v873 = vpack.c.b16 %v706, %v705
  %v874 = vpack.c.b16 %v708, %v707
  %v875 = vpack.c.b16 %v710, %v709
  %v876 = vpack.c.b16 %v712, %v711
  %v877 = vpack.c.b16 %v714, %v713
  %v878 = vpack.c.b16 %v716, %v715
  %v879 = vpack.c.b16 %v718, %v717
  %v880 = vpack.c.b16 %v720, %v719
  %v881 = vpack.c.b16 %v722, %v721
  %v882 = vpack.c.b16 %v724, %v723
  %v883 = vpack.c.b16 %v726, %v725
  %v884 = vpack.c.b16 %v728, %v727
  %v885 = vpack.c.b16 %v730, %v729
  %v886 = vpack.c.b16 %v732, %v731
  %v887 = vpack.c.b16 %v734, %v733
  %v888 = vpack.c.b16 %v736, %v735
  %v889 = vpack.c.b16 %v738, %v737
  %v890 = vpack.c.b16 %v740, %v739
  %v891 = vpack.c.b16 %v742, %v741
  %v892 = vpack.c.b16 %v744, %v743
  %v893 = vpack.c.b16 %v746, %v745
  %v894 = vpack.c.b16 %v748, %v747
  %v895 = vpack.c.b16 %v750, %v749
  %v896 = vpack.c.b16 %v752, %v751
  %v897 = vpack.c.b16 %v754, %v753
  %v898 = vpack.c.b16 %v756, %v755
  %v899 = vpack.c.b16 %v758, %v757
  %v900 = vpack.c.b16 %v760, %v759
  %v901 = vpack.c.b16 %v762, %v761
  %v902 = vpack.c.b16 %v764, %v763
  %v903 = vpack.c.b16 %v766, %v765
  %v904 = vpack.c.b16 %v768, %v767
  %v905 = vpack.c.b16 %v770, %v769
  %v906 = vpack.c.b16 %v772, %v771
  %v907 = vpack.c.b16 %v774, %v773
  %v908 = vpack.c.b16 %v776, %v775
  %v909 = vpack.c.b16 %v778, %v777
  %v910 = vpack.c.b16 %v780, %v779
  %v911 = vpack.c.b16 %v782, %v781
  %v912 = vpack.c.b16 %v784, %v783
  %v915 = vunpack.c.l.b16 %v271
  %v916 = vunpack.c.l.b16 %v272
  %v917 = vpack.c.b16 %v916, %v915
  %vm918 = vcmask 97280
  %v920 = vsel %vm918, %v785, 0
  %v923 = vsel %vm918, %v786, 0
  %v926 = vsel %vm918, %v787, 0
  %v929 = vsel %vm918, %v788, 0
  %v932 = vsel %vm918, %v789, 0
  %v935 = vsel %vm918, %v790, 0
  %v938 = vsel %vm918, %v791, 0
  %v941 = vsel %vm918, %v792, 0
  %v944 = vsel %vm918, %v793, 0
  %v947 = vsel %vm918, %v794, 0
  %v950 = vsel %vm918, %v795, 0
  %v953 = vsel %vm918, %v796, 0
  %v956 = vsel %vm918, %v797, 0
  %v959 = vsel %vm918, %v798, 0
  %v962 = vsel %vm918, %v799, 0
  %v965 = vsel %vm918, %v800, 0
  %v968 = vsel %vm918, %v801, 0
  %v971 = vsel %vm918, %v802, 0
  %v974 = vsel %vm918, %v803, 0
  %v977 = vsel %vm918, %v804, 0
  %v980 = vsel %vm918, %v805, 0
  %v983 = vsel %vm918, %v806, 0
  %v986 = vsel %vm918, %v807, 0
  %v989 = vsel %vm918, %v808, 0
  %v992 = vsel %vm918, %v809, 0
  %v995 = vsel %vm918, %v810, 0
  %v998 = vsel %vm918, %v811, 0
  %v1001 = vsel %vm918, %v812, 0
  %v1004 = vsel %vm918, %v813, 0
  %v1007 = vsel %vm918, %v814, 0
  %v1010 = vsel %vm918, %v815, 0
  %v1013 = vsel %vm918, %v816, 0
  %v1016 = vsel %vm918, %v817, 0
  %v1019 = vsel %vm918, %v818, 0
  %v1022 = vsel %vm918, %v819, 0
  %v1025 = vsel %vm918, %v820, 0
  %v1028 = vsel %vm918, %v821, 0
  %v1031 = vsel %vm918, %v822, 0
  %v1034 = vsel %vm918, %v823, 0
  %v1037 = vsel %vm918, %v824, 0
  %v1040 = vsel %vm918, %v825, 0
  %v1043 = vsel %vm918, %v826, 0
  %v1046 = vsel %vm918, %v827, 0
  %v1049 = vsel %vm918, %v828, 0
  %v1052 = vsel %vm918, %v829, 0
  %v1055 = vsel %vm918, %v830, 0
  %v1058 = vsel %vm918, %v831, 0
  %v1061 = vsel %vm918, %v832, 0
  %v1064 = vsel %vm918, %v833, 0
  %v1067 = vsel %vm918, %v834, 0
  %v1070 = vsel %vm918, %v835, 0
  %v1073 = vsel %vm918, %v836, 0
  %v1076 = vsel %vm918, %v837, 0
  %v1079 = vsel %vm918, %v838, 0
  %v1082 = vsel %vm918, %v839, 0
  %v1085 = vsel %vm918, %v840, 0
  %v1088 = vsel %vm918, %v841, 0
  %v1091 = vsel %vm918, %v842, 0
  %v1094 = vsel %vm918, %v843, 0
  %v1097 = vsel %vm918, %v844, 0
  %v1100 = vsel %vm918, %v845, 0
  %v1103 = vsel %vm918, %v846, 0
  %v1106 = vsel %vm918, %v847, 0
  %v1109 = vsel %vm918, %v848, 0
  %v1112 = vsel %vm918, %v849, 0
  %v1115 = vsel %vm918, %v850, 0
  %v1118 = vsel %vm918, %v851, 0
  %v1121 = vsel %vm918, %v852, 0
  %v1124 = vsel %vm918, %v853, 0
  %v1127 = vsel %vm918, %v854, 0
  %v1130 = vsel %vm918, %v855, 0
  %v1133 = vsel %vm918, %v856, 0
  %v1136 = vsel %vm918, %v857, 0
  %v1139 = vsel %vm918, %v858, 0
  %v1142 = vsel %vm918, %v859, 0
  %v1145 = vsel %vm918, %v860, 0
  %v1148 = vsel %vm918, %v861, 0
  %v1151 = vsel %vm918, %v862, 0
  %v1154 = vsel %vm918, %v863, 0
  %v1157 = vsel %vm918, %v864, 0
  %v1160 = vsel %vm918, %v865, 0
  %v1163 = vsel %vm918, %v866, 0
  %v1166 = vsel %vm918, %v867, 0
  %v1169 = vsel %vm918, %v868, 0
  %v1172 = vsel %vm918, %v869, 0
  %v1175 = vsel %vm918, %v870, 0
  %v1178 = vsel %vm918, %v871, 0
  %v1181 = vsel %vm918, %v872, 0
  %v1184 = vsel %vm918, %v873, 0
  %v1187 = vsel %vm918, %v874, 0
  %v1190 = vsel %vm918, %v875, 0
  %v1193 = vsel %vm918, %v876, 0
  %v1196 = vsel %vm918, %v877, 0
  %v1199 = vsel %vm918, %v878, 0
  %v1202 = vsel %vm918, %v879, 0
  %v1205 = vsel %vm918, %v880, 0
  %v1208 = vsel %vm918, %v881, 0
  %v1211 = vsel %vm918, %v882, 0
  %v1214 = vsel %vm918, %v883, 0
  %v1217 = vsel %vm918, %v884, 0
  %v1220 = vsel %vm918, %v885, 0
  %v1223 = vsel %vm918, %v886, 0
  %v1226 = vsel %vm918, %v887, 0
  %v1229 = vsel %vm918, %v888, 0
  %v1232 = vsel %vm918, %v889, 0
  %v1235 = vsel %vm918, %v890, 0
  %v1238 = vsel %vm918, %v891, 0
  %v1241 = vsel %vm918, %v892, 0
  %v1244 = vsel %vm918, %v893, 0
  %v1247 = vsel %vm918, %v894, 0
  %v1250 = vsel %vm918, %v895, 0
  %v1253 = vsel %vm918, %v896, 0
  %v1256 = vsel %vm918, %v897, 0
  %v1259 = vsel %vm918, %v898, 0
  %v1262 = vsel %vm918, %v899, 0
  %v1265 = vsel %vm918, %v900, 0
  %v1268 = vsel %vm918, %v901, 0
  %v1271 = vsel %vm918, %v902, 0
  %v1274 = vsel %vm918, %v903, 0
  %v1277 = vsel %vm918, %v904, 0
  %v1280 = vsel %vm918, %v905, 0
  %v1283 = vsel %vm918, %v906, 0
  %v1286 = vsel %vm918, %v907, 0
  %v1289 = vsel %vm918, %v908, 0
  %v1292 = vsel %vm918, %v909, 0
  %v1295 = vsel %vm918, %v910, 0
  %v1298 = vsel %vm918, %v911, 0
  %v1301 = vsel %vm918, %v912, 0
  %vm1303 = vcmask 1045504
  %v1305 = vsel %vm1303, %v917, 0
  %1307 = vmatpush.bf16.msra.mxu0 0
  %1308 = vmatpush.bf16.msra.mxu0 0
  %1309 = vmatpush.bf16.msra.mxu0 0
  %1310 = vmatpush.bf16.msra.mxu0 0
  %1311 = vmatpush.bf16.msra.mxu0 0
  %1312 = vmatpush.bf16.msra.mxu0 0
  %1313 = vmatpush.bf16.msra.mxu0 0
  %1314 = vmatpush.bf16.msra.mxu0 %v1305
  %1315 = vmatmul.bf16.gmra.mxu0 %v920
  %v1316 = vpop.f32.mrf.mxu0
  %v1317 = vadd.f32 0.0, %v1316
  %v1318 = vpop.f32.mrf.mxu0
  %v1319 = vadd.f32 0.0, %v1318
  %1320 = vmatmul.bf16.gmra.mxu0 %v923
  %v1321 = vpop.f32.mrf.mxu0
  %v1322 = vadd.f32 0.0, %v1321
  %v1323 = vpop.f32.mrf.mxu0
  %v1324 = vadd.f32 0.0, %v1323
  %1325 = vmatmul.bf16.gmra.mxu0 %v926
  %v1326 = vpop.f32.mrf.mxu0
  %v1327 = vadd.f32 0.0, %v1326
  %v1328 = vpop.f32.mrf.mxu0
  %v1329 = vadd.f32 0.0, %v1328
  %1330 = vmatmul.bf16.gmra.mxu0 %v929
  %v1331 = vpop.f32.mrf.mxu0
  %v1332 = vadd.f32 0.0, %v1331
  %v1333 = vpop.f32.mrf.mxu0
  %v1334 = vadd.f32 0.0, %v1333
  %1335 = vmatmul.bf16.gmra.mxu0 %v932
  %v1336 = vpop.f32.mrf.mxu0
  %v1337 = vadd.f32 0.0, %v1336
  %v1338 = vpop.f32.mrf.mxu0
  %v1339 = vadd.f32 0.0, %v1338
  %1340 = vmatmul.bf16.gmra.mxu0 %v935
  %v1341 = vpop.f32.mrf.mxu0
  %v1342 = vadd.f32 0.0, %v1341
  %v1343 = vpop.f32.mrf.mxu0
  %v1344 = vadd.f32 0.0, %v1343
  %1345 = vmatmul.bf16.gmra.mxu0 %v938
  %v1346 = vpop.f32.mrf.mxu0
  %v1347 = vadd.f32 0.0, %v1346
  %v1348 = vpop.f32.mrf.mxu0
  %v1349 = vadd.f32 0.0, %v1348
  %1350 = vmatmul.bf16.gmra.mxu0 %v941
  %v1351 = vpop.f32.mrf.mxu0
  %v1352 = vadd.f32 0.0, %v1351
  %v1353 = vpop.f32.mrf.mxu0
  %v1354 = vadd.f32 0.0, %v1353
  %1355 = vmatmul.bf16.gmra.mxu0 %v944
  %v1356 = vpop.f32.mrf.mxu0
  %v1357 = vadd.f32 0.0, %v1356
  %v1358 = vpop.f32.mrf.mxu0
  %v1359 = vadd.f32 0.0, %v1358
  %1360 = vmatmul.bf16.gmra.mxu0 %v947
  %v1361 = vpop.f32.mrf.mxu0
  %v1362 = vadd.f32 0.0, %v1361
  %v1363 = vpop.f32.mrf.mxu0
  %v1364 = vadd.f32 0.0, %v1363
  %1365 = vmatmul.bf16.gmra.mxu0 %v950
  %v1366 = vpop.f32.mrf.mxu0
  %v1367 = vadd.f32 0.0, %v1366
  %v1368 = vpop.f32.mrf.mxu0
  %v1369 = vadd.f32 0.0, %v1368
  %1370 = vmatmul.bf16.gmra.mxu0 %v953
  %v1371 = vpop.f32.mrf.mxu0
  %v1372 = vadd.f32 0.0, %v1371
  %v1373 = vpop.f32.mrf.mxu0
  %v1374 = vadd.f32 0.0, %v1373
  %1375 = vmatmul.bf16.gmra.mxu0 %v956
  %v1376 = vpop.f32.mrf.mxu0
  %v1377 = vadd.f32 0.0, %v1376
  %v1378 = vpop.f32.mrf.mxu0
  %v1379 = vadd.f32 0.0, %v1378
  %1380 = vmatmul.bf16.gmra.mxu0 %v959
  %v1381 = vpop.f32.mrf.mxu0
  %v1382 = vadd.f32 0.0, %v1381
  %v1383 = vpop.f32.mrf.mxu0
  %v1384 = vadd.f32 0.0, %v1383
  %1385 = vmatmul.bf16.gmra.mxu0 %v962
  %v1386 = vpop.f32.mrf.mxu0
  %v1387 = vadd.f32 0.0, %v1386
  %v1388 = vpop.f32.mrf.mxu0
  %v1389 = vadd.f32 0.0, %v1388
  %1390 = vmatmul.bf16.gmra.mxu0 %v965
  %v1391 = vpop.f32.mrf.mxu0
  %v1392 = vadd.f32 0.0, %v1391
  %v1393 = vpop.f32.mrf.mxu0
  %v1394 = vadd.f32 0.0, %v1393
  %1395 = vmatmul.bf16.gmra.mxu0 %v968
  %v1396 = vpop.f32.mrf.mxu0
  %v1397 = vadd.f32 0.0, %v1396
  %v1398 = vpop.f32.mrf.mxu0
  %v1399 = vadd.f32 0.0, %v1398
  %1400 = vmatmul.bf16.gmra.mxu0 %v971
  %v1401 = vpop.f32.mrf.mxu0
  %v1402 = vadd.f32 0.0, %v1401
  %v1403 = vpop.f32.mrf.mxu0
  %v1404 = vadd.f32 0.0, %v1403
  %1405 = vmatmul.bf16.gmra.mxu0 %v974
  %v1406 = vpop.f32.mrf.mxu0
  %v1407 = vadd.f32 0.0, %v1406
  %v1408 = vpop.f32.mrf.mxu0
  %v1409 = vadd.f32 0.0, %v1408
  %1410 = vmatmul.bf16.gmra.mxu0 %v977
  %v1411 = vpop.f32.mrf.mxu0
  %v1412 = vadd.f32 0.0, %v1411
  %v1413 = vpop.f32.mrf.mxu0
  %v1414 = vadd.f32 0.0, %v1413
  %1415 = vmatmul.bf16.gmra.mxu0 %v980
  %v1416 = vpop.f32.mrf.mxu0
  %v1417 = vadd.f32 0.0, %v1416
  %v1418 = vpop.f32.mrf.mxu0
  %v1419 = vadd.f32 0.0, %v1418
  %1420 = vmatmul.bf16.gmra.mxu0 %v983
  %v1421 = vpop.f32.mrf.mxu0
  %v1422 = vadd.f32 0.0, %v1421
  %v1423 = vpop.f32.mrf.mxu0
  %v1424 = vadd.f32 0.0, %v1423
  %1425 = vmatmul.bf16.gmra.mxu0 %v986
  %v1426 = vpop.f32.mrf.mxu0
  %v1427 = vadd.f32 0.0, %v1426
  %v1428 = vpop.f32.mrf.mxu0
  %v1429 = vadd.f32 0.0, %v1428
  %1430 = vmatmul.bf16.gmra.mxu0 %v989
  %v1431 = vpop.f32.mrf.mxu0
  %v1432 = vadd.f32 0.0, %v1431
  %v1433 = vpop.f32.mrf.mxu0
  %v1434 = vadd.f32 0.0, %v1433
  %1435 = vmatmul.bf16.gmra.mxu0 %v992
  %v1436 = vpop.f32.mrf.mxu0
  %v1437 = vadd.f32 0.0, %v1436
  %v1438 = vpop.f32.mrf.mxu0
  %v1439 = vadd.f32 0.0, %v1438
  %1440 = vmatmul.bf16.gmra.mxu0 %v995
  %v1441 = vpop.f32.mrf.mxu0
  %v1442 = vadd.f32 0.0, %v1441
  %v1443 = vpop.f32.mrf.mxu0
  %v1444 = vadd.f32 0.0, %v1443
  %1445 = vmatmul.bf16.gmra.mxu0 %v998
  %v1446 = vpop.f32.mrf.mxu0
  %v1447 = vadd.f32 0.0, %v1446
  %v1448 = vpop.f32.mrf.mxu0
  %v1449 = vadd.f32 0.0, %v1448
  %1450 = vmatmul.bf16.gmra.mxu0 %v1001
  %v1451 = vpop.f32.mrf.mxu0
  %v1452 = vadd.f32 0.0, %v1451
  %v1453 = vpop.f32.mrf.mxu0
  %v1454 = vadd.f32 0.0, %v1453
  %1455 = vmatmul.bf16.gmra.mxu0 %v1004
  %v1456 = vpop.f32.mrf.mxu0
  %v1457 = vadd.f32 0.0, %v1456
  %v1458 = vpop.f32.mrf.mxu0
  %v1459 = vadd.f32 0.0, %v1458
  %1460 = vmatmul.bf16.gmra.mxu0 %v1007
  %v1461 = vpop.f32.mrf.mxu0
  %v1462 = vadd.f32 0.0, %v1461
  %v1463 = vpop.f32.mrf.mxu0
  %v1464 = vadd.f32 0.0, %v1463
  %1465 = vmatmul.bf16.gmra.mxu0 %v1010
  %v1466 = vpop.f32.mrf.mxu0
  %v1467 = vadd.f32 0.0, %v1466
  %v1468 = vpop.f32.mrf.mxu0
  %v1469 = vadd.f32 0.0, %v1468
  %1470 = vmatmul.bf16.gmra.mxu0 %v1013
  %v1471 = vpop.f32.mrf.mxu0
  %v1472 = vadd.f32 0.0, %v1471
  %v1473 = vpop.f32.mrf.mxu0
  %v1474 = vadd.f32 0.0, %v1473
  %1475 = vmatmul.bf16.gmra.mxu0 %v1016
  %v1476 = vpop.f32.mrf.mxu0
  %v1477 = vadd.f32 0.0, %v1476
  %v1478 = vpop.f32.mrf.mxu0
  %v1479 = vadd.f32 0.0, %v1478
  %1480 = vmatmul.bf16.gmra.mxu0 %v1019
  %v1481 = vpop.f32.mrf.mxu0
  %v1482 = vadd.f32 0.0, %v1481
  %v1483 = vpop.f32.mrf.mxu0
  %v1484 = vadd.f32 0.0, %v1483
  %1485 = vmatmul.bf16.gmra.mxu0 %v1022
  %v1486 = vpop.f32.mrf.mxu0
  %v1487 = vadd.f32 0.0, %v1486
  %v1488 = vpop.f32.mrf.mxu0
  %v1489 = vadd.f32 0.0, %v1488
  %1490 = vmatmul.bf16.gmra.mxu0 %v1025
  %v1491 = vpop.f32.mrf.mxu0
  %v1492 = vadd.f32 0.0, %v1491
  %v1493 = vpop.f32.mrf.mxu0
  %v1494 = vadd.f32 0.0, %v1493
  %1495 = vmatmul.bf16.gmra.mxu0 %v1028
  %v1496 = vpop.f32.mrf.mxu0
  %v1497 = vadd.f32 0.0, %v1496
  %v1498 = vpop.f32.mrf.mxu0
  %v1499 = vadd.f32 0.0, %v1498
  %1500 = vmatmul.bf16.gmra.mxu0 %v1031
  %v1501 = vpop.f32.mrf.mxu0
  %v1502 = vadd.f32 0.0, %v1501
  %v1503 = vpop.f32.mrf.mxu0
  %v1504 = vadd.f32 0.0, %v1503
  %1505 = vmatmul.bf16.gmra.mxu0 %v1034
  %v1506 = vpop.f32.mrf.mxu0
  %v1507 = vadd.f32 0.0, %v1506
  %v1508 = vpop.f32.mrf.mxu0
  %v1509 = vadd.f32 0.0, %v1508
  %1510 = vmatmul.bf16.gmra.mxu0 %v1037
  %v1511 = vpop.f32.mrf.mxu0
  %v1512 = vadd.f32 0.0, %v1511
  %v1513 = vpop.f32.mrf.mxu0
  %v1514 = vadd.f32 0.0, %v1513
  %1515 = vmatmul.bf16.gmra.mxu0 %v1040
  %v1516 = vpop.f32.mrf.mxu0
  %v1517 = vadd.f32 0.0, %v1516
  %v1518 = vpop.f32.mrf.mxu0
  %v1519 = vadd.f32 0.0, %v1518
  %1520 = vmatmul.bf16.gmra.mxu0 %v1043
  %v1521 = vpop.f32.mrf.mxu0
  %v1522 = vadd.f32 0.0, %v1521
  %v1523 = vpop.f32.mrf.mxu0
  %v1524 = vadd.f32 0.0, %v1523
  %1525 = vmatmul.bf16.gmra.mxu0 %v1046
  %v1526 = vpop.f32.mrf.mxu0
  %v1527 = vadd.f32 0.0, %v1526
  %v1528 = vpop.f32.mrf.mxu0
  %v1529 = vadd.f32 0.0, %v1528
  %1530 = vmatmul.bf16.gmra.mxu0 %v1049
  %v1531 = vpop.f32.mrf.mxu0
  %v1532 = vadd.f32 0.0, %v1531
  %v1533 = vpop.f32.mrf.mxu0
  %v1534 = vadd.f32 0.0, %v1533
  %1535 = vmatmul.bf16.gmra.mxu0 %v1052
  %v1536 = vpop.f32.mrf.mxu0
  %v1537 = vadd.f32 0.0, %v1536
  %v1538 = vpop.f32.mrf.mxu0
  %v1539 = vadd.f32 0.0, %v1538
  %1540 = vmatmul.bf16.gmra.mxu0 %v1055
  %v1541 = vpop.f32.mrf.mxu0
  %v1542 = vadd.f32 0.0, %v1541
  %v1543 = vpop.f32.mrf.mxu0
  %v1544 = vadd.f32 0.0, %v1543
  %1545 = vmatmul.bf16.gmra.mxu0 %v1058
  %v1546 = vpop.f32.mrf.mxu0
  %v1547 = vadd.f32 0.0, %v1546
  %v1548 = vpop.f32.mrf.mxu0
  %v1549 = vadd.f32 0.0, %v1548
  %1550 = vmatmul.bf16.gmra.mxu0 %v1061
  %v1551 = vpop.f32.mrf.mxu0
  %v1552 = vadd.f32 0.0, %v1551
  %v1553 = vpop.f32.mrf.mxu0
  %v1554 = vadd.f32 0.0, %v1553
  %1555 = vmatmul.bf16.gmra.mxu0 %v1064
  %v1556 = vpop.f32.mrf.mxu0
  %v1557 = vadd.f32 0.0, %v1556
  %v1558 = vpop.f32.mrf.mxu0
  %v1559 = vadd.f32 0.0, %v1558
  %1560 = vmatmul.bf16.gmra.mxu0 %v1067
  %v1561 = vpop.f32.mrf.mxu0
  %v1562 = vadd.f32 0.0, %v1561
  %v1563 = vpop.f32.mrf.mxu0
  %v1564 = vadd.f32 0.0, %v1563
  %1565 = vmatmul.bf16.gmra.mxu0 %v1070
  %v1566 = vpop.f32.mrf.mxu0
  %v1567 = vadd.f32 0.0, %v1566
  %v1568 = vpop.f32.mrf.mxu0
  %v1569 = vadd.f32 0.0, %v1568
  %1570 = vmatmul.bf16.gmra.mxu0 %v1073
  %v1571 = vpop.f32.mrf.mxu0
  %v1572 = vadd.f32 0.0, %v1571
  %v1573 = vpop.f32.mrf.mxu0
  %v1574 = vadd.f32 0.0, %v1573
  %1575 = vmatmul.bf16.gmra.mxu0 %v1076
  %v1576 = vpop.f32.mrf.mxu0
  %v1577 = vadd.f32 0.0, %v1576
  %v1578 = vpop.f32.mrf.mxu0
  %v1579 = vadd.f32 0.0, %v1578
  %1580 = vmatmul.bf16.gmra.mxu0 %v1079
  %v1581 = vpop.f32.mrf.mxu0
  %v1582 = vadd.f32 0.0, %v1581
  %v1583 = vpop.f32.mrf.mxu0
  %v1584 = vadd.f32 0.0, %v1583
  %1585 = vmatmul.bf16.gmra.mxu0 %v1082
  %v1586 = vpop.f32.mrf.mxu0
  %v1587 = vadd.f32 0.0, %v1586
  %v1588 = vpop.f32.mrf.mxu0
  %v1589 = vadd.f32 0.0, %v1588
  %1590 = vmatmul.bf16.gmra.mxu0 %v1085
  %v1591 = vpop.f32.mrf.mxu0
  %v1592 = vadd.f32 0.0, %v1591
  %v1593 = vpop.f32.mrf.mxu0
  %v1594 = vadd.f32 0.0, %v1593
  %1595 = vmatmul.bf16.gmra.mxu0 %v1088
  %v1596 = vpop.f32.mrf.mxu0
  %v1597 = vadd.f32 0.0, %v1596
  %v1598 = vpop.f32.mrf.mxu0
  %v1599 = vadd.f32 0.0, %v1598
  %1600 = vmatmul.bf16.gmra.mxu0 %v1091
  %v1601 = vpop.f32.mrf.mxu0
  %v1602 = vadd.f32 0.0, %v1601
  %v1603 = vpop.f32.mrf.mxu0
  %v1604 = vadd.f32 0.0, %v1603
  %1605 = vmatmul.bf16.gmra.mxu0 %v1094
  %v1606 = vpop.f32.mrf.mxu0
  %v1607 = vadd.f32 0.0, %v1606
  %v1608 = vpop.f32.mrf.mxu0
  %v1609 = vadd.f32 0.0, %v1608
  %1610 = vmatmul.bf16.gmra.mxu0 %v1097
  %v1611 = vpop.f32.mrf.mxu0
  %v1612 = vadd.f32 0.0, %v1611
  %v1613 = vpop.f32.mrf.mxu0
  %v1614 = vadd.f32 0.0, %v1613
  %1615 = vmatmul.bf16.gmra.mxu0 %v1100
  %v1616 = vpop.f32.mrf.mxu0
  %v1617 = vadd.f32 0.0, %v1616
  %v1618 = vpop.f32.mrf.mxu0
  %v1619 = vadd.f32 0.0, %v1618
  %1620 = vmatmul.bf16.gmra.mxu0 %v1103
  %v1621 = vpop.f32.mrf.mxu0
  %v1622 = vadd.f32 0.0, %v1621
  %v1623 = vpop.f32.mrf.mxu0
  %v1624 = vadd.f32 0.0, %v1623
  %1625 = vmatmul.bf16.gmra.mxu0 %v1106
  %v1626 = vpop.f32.mrf.mxu0
  %v1627 = vadd.f32 0.0, %v1626
  %v1628 = vpop.f32.mrf.mxu0
  %v1629 = vadd.f32 0.0, %v1628
  %1630 = vmatmul.bf16.gmra.mxu0 %v1109
  %v1631 = vpop.f32.mrf.mxu0
  %v1632 = vadd.f32 0.0, %v1631
  %v1633 = vpop.f32.mrf.mxu0
  %v1634 = vadd.f32 0.0, %v1633
  %1635 = vmatmul.bf16.gmra.mxu0 %v1112
  %v1636 = vpop.f32.mrf.mxu0
  %v1637 = vadd.f32 0.0, %v1636
  %v1638 = vpop.f32.mrf.mxu0
  %v1639 = vadd.f32 0.0, %v1638
  %1640 = vmatmul.bf16.gmra.mxu0 %v1115
  %v1641 = vpop.f32.mrf.mxu0
  %v1642 = vadd.f32 0.0, %v1641
  %v1643 = vpop.f32.mrf.mxu0
  %v1644 = vadd.f32 0.0, %v1643
  %1645 = vmatmul.bf16.gmra.mxu0 %v1118
  %v1646 = vpop.f32.mrf.mxu0
  %v1647 = vadd.f32 0.0, %v1646
  %v1648 = vpop.f32.mrf.mxu0
  %v1649 = vadd.f32 0.0, %v1648
  %1650 = vmatmul.bf16.gmra.mxu0 %v1121
  %v1651 = vpop.f32.mrf.mxu0
  %v1652 = vadd.f32 0.0, %v1651
  %v1653 = vpop.f32.mrf.mxu0
  %v1654 = vadd.f32 0.0, %v1653
  %1655 = vmatmul.bf16.gmra.mxu0 %v1124
  %v1656 = vpop.f32.mrf.mxu0
  %v1657 = vadd.f32 0.0, %v1656
  %v1658 = vpop.f32.mrf.mxu0
  %v1659 = vadd.f32 0.0, %v1658
  %1660 = vmatmul.bf16.gmra.mxu0 %v1127
  %v1661 = vpop.f32.mrf.mxu0
  %v1662 = vadd.f32 0.0, %v1661
  %v1663 = vpop.f32.mrf.mxu0
  %v1664 = vadd.f32 0.0, %v1663
  %1665 = vmatmul.bf16.gmra.mxu0 %v1130
  %v1666 = vpop.f32.mrf.mxu0
  %v1667 = vadd.f32 0.0, %v1666
  %v1668 = vpop.f32.mrf.mxu0
  %v1669 = vadd.f32 0.0, %v1668
  %1670 = vmatmul.bf16.gmra.mxu0 %v1133
  %v1671 = vpop.f32.mrf.mxu0
  %v1672 = vadd.f32 0.0, %v1671
  %v1673 = vpop.f32.mrf.mxu0
  %v1674 = vadd.f32 0.0, %v1673
  %1675 = vmatmul.bf16.gmra.mxu0 %v1136
  %v1676 = vpop.f32.mrf.mxu0
  %v1677 = vadd.f32 0.0, %v1676
  %v1678 = vpop.f32.mrf.mxu0
  %v1679 = vadd.f32 0.0, %v1678
  %1680 = vmatmul.bf16.gmra.mxu0 %v1139
  %v1681 = vpop.f32.mrf.mxu0
  %v1682 = vadd.f32 0.0, %v1681
  %v1683 = vpop.f32.mrf.mxu0
  %v1684 = vadd.f32 0.0, %v1683
  %1685 = vmatmul.bf16.gmra.mxu0 %v1142
  %v1686 = vpop.f32.mrf.mxu0
  %v1687 = vadd.f32 0.0, %v1686
  %v1688 = vpop.f32.mrf.mxu0
  %v1689 = vadd.f32 0.0, %v1688
  %1690 = vmatmul.bf16.gmra.mxu0 %v1145
  %v1691 = vpop.f32.mrf.mxu0
  %v1692 = vadd.f32 0.0, %v1691
  %v1693 = vpop.f32.mrf.mxu0
  %v1694 = vadd.f32 0.0, %v1693
  %1695 = vmatmul.bf16.gmra.mxu0 %v1148
  %v1696 = vpop.f32.mrf.mxu0
  %v1697 = vadd.f32 0.0, %v1696
  %v1698 = vpop.f32.mrf.mxu0
  %v1699 = vadd.f32 0.0, %v1698
  %1700 = vmatmul.bf16.gmra.mxu0 %v1151
  %v1701 = vpop.f32.mrf.mxu0
  %v1702 = vadd.f32 0.0, %v1701
  %v1703 = vpop.f32.mrf.mxu0
  %v1704 = vadd.f32 0.0, %v1703
  %1705 = vmatmul.bf16.gmra.mxu0 %v1154
  %v1706 = vpop.f32.mrf.mxu0
  %v1707 = vadd.f32 0.0, %v1706
  %v1708 = vpop.f32.mrf.mxu0
  %v1709 = vadd.f32 0.0, %v1708
  %1710 = vmatmul.bf16.gmra.mxu0 %v1157
  %v1711 = vpop.f32.mrf.mxu0
  %v1712 = vadd.f32 0.0, %v1711
  %v1713 = vpop.f32.mrf.mxu0
  %v1714 = vadd.f32 0.0, %v1713
  %1715 = vmatmul.bf16.gmra.mxu0 %v1160
  %v1716 = vpop.f32.mrf.mxu0
  %v1717 = vadd.f32 0.0, %v1716
  %v1718 = vpop.f32.mrf.mxu0
  %v1719 = vadd.f32 0.0, %v1718
  %1720 = vmatmul.bf16.gmra.mxu0 %v1163
  %v1721 = vpop.f32.mrf.mxu0
  %v1722 = vadd.f32 0.0, %v1721
  %v1723 = vpop.f32.mrf.mxu0
  %v1724 = vadd.f32 0.0, %v1723
  %1725 = vmatmul.bf16.gmra.mxu0 %v1166
  %v1726 = vpop.f32.mrf.mxu0
  %v1727 = vadd.f32 0.0, %v1726
  %v1728 = vpop.f32.mrf.mxu0
  %v1729 = vadd.f32 0.0, %v1728
  %1730 = vmatmul.bf16.gmra.mxu0 %v1169
  %v1731 = vpop.f32.mrf.mxu0
  %v1732 = vadd.f32 0.0, %v1731
  %v1733 = vpop.f32.mrf.mxu0
  %v1734 = vadd.f32 0.0, %v1733
  %1735 = vmatmul.bf16.gmra.mxu0 %v1172
  %v1736 = vpop.f32.mrf.mxu0
  %v1737 = vadd.f32 0.0, %v1736
  %v1738 = vpop.f32.mrf.mxu0
  %v1739 = vadd.f32 0.0, %v1738
  %1740 = vmatmul.bf16.gmra.mxu0 %v1175
  %v1741 = vpop.f32.mrf.mxu0
  %v1742 = vadd.f32 0.0, %v1741
  %v1743 = vpop.f32.mrf.mxu0
  %v1744 = vadd.f32 0.0, %v1743
  %1745 = vmatmul.bf16.gmra.mxu0 %v1178
  %v1746 = vpop.f32.mrf.mxu0
  %v1747 = vadd.f32 0.0, %v1746
  %v1748 = vpop.f32.mrf.mxu0
  %v1749 = vadd.f32 0.0, %v1748
  %1750 = vmatmul.bf16.gmra.mxu0 %v1181
  %v1751 = vpop.f32.mrf.mxu0
  %v1752 = vadd.f32 0.0, %v1751
  %v1753 = vpop.f32.mrf.mxu0
  %v1754 = vadd.f32 0.0, %v1753
  %1755 = vmatmul.bf16.gmra.mxu0 %v1184
  %v1756 = vpop.f32.mrf.mxu0
  %v1757 = vadd.f32 0.0, %v1756
  %v1758 = vpop.f32.mrf.mxu0
  %v1759 = vadd.f32 0.0, %v1758
  %1760 = vmatmul.bf16.gmra.mxu0 %v1187
  %v1761 = vpop.f32.mrf.mxu0
  %v1762 = vadd.f32 0.0, %v1761
  %v1763 = vpop.f32.mrf.mxu0
  %v1764 = vadd.f32 0.0, %v1763
  %1765 = vmatmul.bf16.gmra.mxu0 %v1190
  %v1766 = vpop.f32.mrf.mxu0
  %v1767 = vadd.f32 0.0, %v1766
  %v1768 = vpop.f32.mrf.mxu0
  %v1769 = vadd.f32 0.0, %v1768
  %1770 = vmatmul.bf16.gmra.mxu0 %v1193
  %v1771 = vpop.f32.mrf.mxu0
  %v1772 = vadd.f32 0.0, %v1771
  %v1773 = vpop.f32.mrf.mxu0
  %v1774 = vadd.f32 0.0, %v1773
  %1775 = vmatmul.bf16.gmra.mxu0 %v1196
  %v1776 = vpop.f32.mrf.mxu0
  %v1777 = vadd.f32 0.0, %v1776
  %v1778 = vpop.f32.mrf.mxu0
  %v1779 = vadd.f32 0.0, %v1778
  %1780 = vmatmul.bf16.gmra.mxu0 %v1199
  %v1781 = vpop.f32.mrf.mxu0
  %v1782 = vadd.f32 0.0, %v1781
  %v1783 = vpop.f32.mrf.mxu0
  %v1784 = vadd.f32 0.0, %v1783
  %1785 = vmatmul.bf16.gmra.mxu0 %v1202
  %v1786 = vpop.f32.mrf.mxu0
  %v1787 = vadd.f32 0.0, %v1786
  %v1788 = vpop.f32.mrf.mxu0
  %v1789 = vadd.f32 0.0, %v1788
  %1790 = vmatmul.bf16.gmra.mxu0 %v1205
  %v1791 = vpop.f32.mrf.mxu0
  %v1792 = vadd.f32 0.0, %v1791
  %v1793 = vpop.f32.mrf.mxu0
  %v1794 = vadd.f32 0.0, %v1793
  %1795 = vmatmul.bf16.gmra.mxu0 %v1208
  %v1796 = vpop.f32.mrf.mxu0
  %v1797 = vadd.f32 0.0, %v1796
  %v1798 = vpop.f32.mrf.mxu0
  %v1799 = vadd.f32 0.0, %v1798
  %1800 = vmatmul.bf16.gmra.mxu0 %v1211
  %v1801 = vpop.f32.mrf.mxu0
  %v1802 = vadd.f32 0.0, %v1801
  %v1803 = vpop.f32.mrf.mxu0
  %v1804 = vadd.f32 0.0, %v1803
  %1805 = vmatmul.bf16.gmra.mxu0 %v1214
  %v1806 = vpop.f32.mrf.mxu0
  %v1807 = vadd.f32 0.0, %v1806
  %v1808 = vpop.f32.mrf.mxu0
  %v1809 = vadd.f32 0.0, %v1808
  %1810 = vmatmul.bf16.gmra.mxu0 %v1217
  %v1811 = vpop.f32.mrf.mxu0
  %v1812 = vadd.f32 0.0, %v1811
  %v1813 = vpop.f32.mrf.mxu0
  %v1814 = vadd.f32 0.0, %v1813
  %1815 = vmatmul.bf16.gmra.mxu0 %v1220
  %v1816 = vpop.f32.mrf.mxu0
  %v1817 = vadd.f32 0.0, %v1816
  %v1818 = vpop.f32.mrf.mxu0
  %v1819 = vadd.f32 0.0, %v1818
  %1820 = vmatmul.bf16.gmra.mxu0 %v1223
  %v1821 = vpop.f32.mrf.mxu0
  %v1822 = vadd.f32 0.0, %v1821
  %v1823 = vpop.f32.mrf.mxu0
  %v1824 = vadd.f32 0.0, %v1823
  %1825 = vmatmul.bf16.gmra.mxu0 %v1226
  %v1826 = vpop.f32.mrf.mxu0
  %v1827 = vadd.f32 0.0, %v1826
  %v1828 = vpop.f32.mrf.mxu0
  %v1829 = vadd.f32 0.0, %v1828
  %1830 = vmatmul.bf16.gmra.mxu0 %v1229
  %v1831 = vpop.f32.mrf.mxu0
  %v1832 = vadd.f32 0.0, %v1831
  %v1833 = vpop.f32.mrf.mxu0
  %v1834 = vadd.f32 0.0, %v1833
  %1835 = vmatmul.bf16.gmra.mxu0 %v1232
  %v1836 = vpop.f32.mrf.mxu0
  %v1837 = vadd.f32 0.0, %v1836
  %v1838 = vpop.f32.mrf.mxu0
  %v1839 = vadd.f32 0.0, %v1838
  %1840 = vmatmul.bf16.gmra.mxu0 %v1235
  %v1841 = vpop.f32.mrf.mxu0
  %v1842 = vadd.f32 0.0, %v1841
  %v1843 = vpop.f32.mrf.mxu0
  %v1844 = vadd.f32 0.0, %v1843
  %1845 = vmatmul.bf16.gmra.mxu0 %v1238
  %v1846 = vpop.f32.mrf.mxu0
  %v1847 = vadd.f32 0.0, %v1846
  %v1848 = vpop.f32.mrf.mxu0
  %v1849 = vadd.f32 0.0, %v1848
  %1850 = vmatmul.bf16.gmra.mxu0 %v1241
  %v1851 = vpop.f32.mrf.mxu0
  %v1852 = vadd.f32 0.0, %v1851
  %v1853 = vpop.f32.mrf.mxu0
  %v1854 = vadd.f32 0.0, %v1853
  %1855 = vmatmul.bf16.gmra.mxu0 %v1244
  %v1856 = vpop.f32.mrf.mxu0
  %v1857 = vadd.f32 0.0, %v1856
  %v1858 = vpop.f32.mrf.mxu0
  %v1859 = vadd.f32 0.0, %v1858
  %1860 = vmatmul.bf16.gmra.mxu0 %v1247
  %v1861 = vpop.f32.mrf.mxu0
  %v1862 = vadd.f32 0.0, %v1861
  %v1863 = vpop.f32.mrf.mxu0
  %v1864 = vadd.f32 0.0, %v1863
  %1865 = vmatmul.bf16.gmra.mxu0 %v1250
  %v1866 = vpop.f32.mrf.mxu0
  %v1867 = vadd.f32 0.0, %v1866
  %v1868 = vpop.f32.mrf.mxu0
  %v1869 = vadd.f32 0.0, %v1868
  %1870 = vmatmul.bf16.gmra.mxu0 %v1253
  %v1871 = vpop.f32.mrf.mxu0
  %v1872 = vadd.f32 0.0, %v1871
  %v1873 = vpop.f32.mrf.mxu0
  %v1874 = vadd.f32 0.0, %v1873
  %1875 = vmatmul.bf16.gmra.mxu0 %v1256
  %v1876 = vpop.f32.mrf.mxu0
  %v1877 = vadd.f32 0.0, %v1876
  %v1878 = vpop.f32.mrf.mxu0
  %v1879 = vadd.f32 0.0, %v1878
  %1880 = vmatmul.bf16.gmra.mxu0 %v1259
  %v1881 = vpop.f32.mrf.mxu0
  %v1882 = vadd.f32 0.0, %v1881
  %v1883 = vpop.f32.mrf.mxu0
  %v1884 = vadd.f32 0.0, %v1883
  %1885 = vmatmul.bf16.gmra.mxu0 %v1262
  %v1886 = vpop.f32.mrf.mxu0
  %v1887 = vadd.f32 0.0, %v1886
  %v1888 = vpop.f32.mrf.mxu0
  %v1889 = vadd.f32 0.0, %v1888
  %1890 = vmatmul.bf16.gmra.mxu0 %v1265
  %v1891 = vpop.f32.mrf.mxu0
  %v1892 = vadd.f32 0.0, %v1891
  %v1893 = vpop.f32.mrf.mxu0
  %v1894 = vadd.f32 0.0, %v1893
  %1895 = vmatmul.bf16.gmra.mxu0 %v1268
  %v1896 = vpop.f32.mrf.mxu0
  %v1897 = vadd.f32 0.0, %v1896
  %v1898 = vpop.f32.mrf.mxu0
  %v1899 = vadd.f32 0.0, %v1898
  %1900 = vmatmul.bf16.gmra.mxu0 %v1271
  %v1901 = vpop.f32.mrf.mxu0
  %v1902 = vadd.f32 0.0, %v1901
  %v1903 = vpop.f32.mrf.mxu0
  %v1904 = vadd.f32 0.0, %v1903
  %1905 = vmatmul.bf16.gmra.mxu0 %v1274
  %v1906 = vpop.f32.mrf.mxu0
  %v1907 = vadd.f32 0.0, %v1906
  %v1908 = vpop.f32.mrf.mxu0
  %v1909 = vadd.f32 0.0, %v1908
  %1910 = vmatmul.bf16.gmra.mxu0 %v1277
  %v1911 = vpop.f32.mrf.mxu0
  %v1912 = vadd.f32 0.0, %v1911
  %v1913 = vpop.f32.mrf.mxu0
  %v1914 = vadd.f32 0.0, %v1913
  %1915 = vmatmul.bf16.gmra.mxu0 %v1280
  %v1916 = vpop.f32.mrf.mxu0
  %v1917 = vadd.f32 0.0, %v1916
  %v1918 = vpop.f32.mrf.mxu0
  %v1919 = vadd.f32 0.0, %v1918
  %1920 = vmatmul.bf16.gmra.mxu0 %v1283
  %v1921 = vpop.f32.mrf.mxu0
  %v1922 = vadd.f32 0.0, %v1921
  %v1923 = vpop.f32.mrf.mxu0
  %v1924 = vadd.f32 0.0, %v1923
  %1925 = vmatmul.bf16.gmra.mxu0 %v1286
  %v1926 = vpop.f32.mrf.mxu0
  %v1927 = vadd.f32 0.0, %v1926
  %v1928 = vpop.f32.mrf.mxu0
  %v1929 = vadd.f32 0.0, %v1928
  %1930 = vmatmul.bf16.gmra.mxu0 %v1289
  %v1931 = vpop.f32.mrf.mxu0
  %v1932 = vadd.f32 0.0, %v1931
  %v1933 = vpop.f32.mrf.mxu0
  %v1934 = vadd.f32 0.0, %v1933
  %1935 = vmatmul.bf16.gmra.mxu0 %v1292
  %v1936 = vpop.f32.mrf.mxu0
  %v1937 = vadd.f32 0.0, %v1936
  %v1938 = vpop.f32.mrf.mxu0
  %v1939 = vadd.f32 0.0, %v1938
  %1940 = vmatmul.bf16.gmra.mxu0 %v1295
  %v1941 = vpop.f32.mrf.mxu0
  %v1942 = vadd.f32 0.0, %v1941
  %v1943 = vpop.f32.mrf.mxu0
  %v1944 = vadd.f32 0.0, %v1943
  %1945 = vmatmul.bf16.gmra.mxu0 %v1298
  %v1946 = vpop.f32.mrf.mxu0
  %v1947 = vadd.f32 0.0, %v1946
  %v1948 = vpop.f32.mrf.mxu0
  %v1949 = vadd.f32 0.0, %v1948
  %1950 = vmatmul.bf16.gmra.mxu0 %v1301
  %v1951 = vpop.f32.mrf.mxu0
  %v1952 = vadd.f32 0.0, %v1951
  %v1953 = vpop.f32.mrf.mxu0
  %v1954 = vadd.f32 0.0, %v1953
  %1955 = vdwg.mxu0
  %v1956 = vmax.f32 %v1317, %v1477
  %v1957 = vmax.f32 %v1319, %v1479
  %v1958 = vmax.f32 %v1322, %v1482
  %v1959 = vmax.f32 %v1324, %v1484
  %v1960 = vmax.f32 %v1327, %v1487
  %v1961 = vmax.f32 %v1329, %v1489
  %v1962 = vmax.f32 %v1332, %v1492
  %v1963 = vmax.f32 %v1334, %v1494
  %v1964 = vmax.f32 %v1337, %v1497
  %v1965 = vmax.f32 %v1339, %v1499
  %v1966 = vmax.f32 %v1342, %v1502
  %v1967 = vmax.f32 %v1344, %v1504
  %v1968 = vmax.f32 %v1347, %v1507
  %v1969 = vmax.f32 %v1349, %v1509
  %v1970 = vmax.f32 %v1352, %v1512
  %v1971 = vmax.f32 %v1354, %v1514
  %v1972 = vmax.f32 %v1357, %v1517
  %v1973 = vmax.f32 %v1359, %v1519
  %v1974 = vmax.f32 %v1362, %v1522
  %v1975 = vmax.f32 %v1364, %v1524
  %v1976 = vmax.f32 %v1367, %v1527
  %v1977 = vmax.f32 %v1369, %v1529
  %v1978 = vmax.f32 %v1372, %v1532
  %v1979 = vmax.f32 %v1374, %v1534
  %v1980 = vmax.f32 %v1377, %v1537
  %v1981 = vmax.f32 %v1379, %v1539
  %v1982 = vmax.f32 %v1382, %v1542
  %v1983 = vmax.f32 %v1384, %v1544
  %v1984 = vmax.f32 %v1387, %v1547
  %v1985 = vmax.f32 %v1389, %v1549
  %v1986 = vmax.f32 %v1392, %v1552
  %v1987 = vmax.f32 %v1394, %v1554
  %v1988 = vmax.f32 %v1397, %v1557
  %v1989 = vmax.f32 %v1399, %v1559
  %v1990 = vmax.f32 %v1402, %v1562
  %v1991 = vmax.f32 %v1404, %v1564
  %v1992 = vmax.f32 %v1407, %v1567
  %v1993 = vmax.f32 %v1409, %v1569
  %v1994 = vmax.f32 %v1412, %v1572
  %v1995 = vmax.f32 %v1414, %v1574
  %v1996 = vmax.f32 %v1417, %v1577
  %v1997 = vmax.f32 %v1419, %v1579
  %v1998 = vmax.f32 %v1422, %v1582
  %v1999 = vmax.f32 %v1424, %v1584
  %v2000 = vmax.f32 %v1427, %v1587
  %v2001 = vmax.f32 %v1429, %v1589
  %v2002 = vmax.f32 %v1432, %v1592
  %v2003 = vmax.f32 %v1434, %v1594
  %v2004 = vmax.f32 %v1437, %v1597
  %v2005 = vmax.f32 %v1439, %v1599
  %v2006 = vmax.f32 %v1442, %v1602
  %v2007 = vmax.f32 %v1444, %v1604
  %v2008 = vmax.f32 %v1447, %v1607
  %v2009 = vmax.f32 %v1449, %v1609
  %v2010 = vmax.f32 %v1452, %v1612
  %v2011 = vmax.f32 %v1454, %v1614
  %v2012 = vmax.f32 %v1457, %v1617
  %v2013 = vmax.f32 %v1459, %v1619
  %v2014 = vmax.f32 %v1462, %v1622
  %v2015 = vmax.f32 %v1464, %v1624
  %v2016 = vmax.f32 %v1467, %v1627
  %v2017 = vmax.f32 %v1469, %v1629
  %v2018 = vmax.f32 %v1472, %v1632
  %v2019 = vmax.f32 %v1474, %v1634
  %v2020 = vmax.f32 %v1637, %v1797
  %v2021 = vmax.f32 %v1639, %v1799
  %v2022 = vmax.f32 %v1642, %v1802
  %v2023 = vmax.f32 %v1644, %v1804
  %v2024 = vmax.f32 %v1647, %v1807
  %v2025 = vmax.f32 %v1649, %v1809
  %v2026 = vmax.f32 %v1652, %v1812
  %v2027 = vmax.f32 %v1654, %v1814
  %v2028 = vmax.f32 %v1657, %v1817
  %v2029 = vmax.f32 %v1659, %v1819
  %v2030 = vmax.f32 %v1662, %v1822
  %v2031 = vmax.f32 %v1664, %v1824
  %v2032 = vmax.f32 %v1667, %v1827
  %v2033 = vmax.f32 %v1669, %v1829
  %v2034 = vmax.f32 %v1672, %v1832
  %v2035 = vmax.f32 %v1674, %v1834
  %v2036 = vmax.f32 %v1677, %v1837
  %v2037 = vmax.f32 %v1679, %v1839
  %v2038 = vmax.f32 %v1682, %v1842
  %v2039 = vmax.f32 %v1684, %v1844
  %v2040 = vmax.f32 %v1687, %v1847
  %v2041 = vmax.f32 %v1689, %v1849
  %v2042 = vmax.f32 %v1692, %v1852
  %v2043 = vmax.f32 %v1694, %v1854
  %v2044 = vmax.f32 %v1697, %v1857
  %v2045 = vmax.f32 %v1699, %v1859
  %v2046 = vmax.f32 %v1702, %v1862
  %v2047 = vmax.f32 %v1704, %v1864
  %v2048 = vmax.f32 %v1707, %v1867
  %v2049 = vmax.f32 %v1709, %v1869
  %v2050 = vmax.f32 %v1712, %v1872
  %v2051 = vmax.f32 %v1714, %v1874
  %v2052 = vmax.f32 %v1717, %v1877
  %v2053 = vmax.f32 %v1719, %v1879
  %v2054 = vmax.f32 %v1722, %v1882
  %v2055 = vmax.f32 %v1724, %v1884
  %v2056 = vmax.f32 %v1727, %v1887
  %v2057 = vmax.f32 %v1729, %v1889
  %v2058 = vmax.f32 %v1732, %v1892
  %v2059 = vmax.f32 %v1734, %v1894
  %v2060 = vmax.f32 %v1737, %v1897
  %v2061 = vmax.f32 %v1739, %v1899
  %v2062 = vmax.f32 %v1742, %v1902
  %v2063 = vmax.f32 %v1744, %v1904
  %v2064 = vmax.f32 %v1747, %v1907
  %v2065 = vmax.f32 %v1749, %v1909
  %v2066 = vmax.f32 %v1752, %v1912
  %v2067 = vmax.f32 %v1754, %v1914
  %v2068 = vmax.f32 %v1757, %v1917
  %v2069 = vmax.f32 %v1759, %v1919
  %v2070 = vmax.f32 %v1762, %v1922
  %v2071 = vmax.f32 %v1764, %v1924
  %v2072 = vmax.f32 %v1767, %v1927
  %v2073 = vmax.f32 %v1769, %v1929
  %v2074 = vmax.f32 %v1772, %v1932
  %v2075 = vmax.f32 %v1774, %v1934
  %v2076 = vmax.f32 %v1777, %v1937
  %v2077 = vmax.f32 %v1779, %v1939
  %v2078 = vmax.f32 %v1782, %v1942
  %v2079 = vmax.f32 %v1784, %v1944
  %v2080 = vmax.f32 %v1787, %v1947
  %v2081 = vmax.f32 %v1789, %v1949
  %v2082 = vmax.f32 %v1792, %v1952
  %v2083 = vmax.f32 %v1794, %v1954
  %v2084 = vmax.f32 %v1956, %v2020
  %v2085 = vmax.f32 %v1957, %v2021
  %v2086 = vmax.f32 %v1958, %v2022
  %v2087 = vmax.f32 %v1959, %v2023
  %v2088 = vmax.f32 %v1960, %v2024
  %v2089 = vmax.f32 %v1961, %v2025
  %v2090 = vmax.f32 %v1962, %v2026
  %v2091 = vmax.f32 %v1963, %v2027
  %v2092 = vmax.f32 %v1964, %v2028
  %v2093 = vmax.f32 %v1965, %v2029
  %v2094 = vmax.f32 %v1966, %v2030
  %v2095 = vmax.f32 %v1967, %v2031
  %v2096 = vmax.f32 %v1968, %v2032
  %v2097 = vmax.f32 %v1969, %v2033
  %v2098 = vmax.f32 %v1970, %v2034
  %v2099 = vmax.f32 %v1971, %v2035
  %v2100 = vmax.f32 %v1972, %v2036
  %v2101 = vmax.f32 %v1973, %v2037
  %v2102 = vmax.f32 %v1974, %v2038
  %v2103 = vmax.f32 %v1975, %v2039
  %v2104 = vmax.f32 %v1976, %v2040
  %v2105 = vmax.f32 %v1977, %v2041
  %v2106 = vmax.f32 %v1978, %v2042
  %v2107 = vmax.f32 %v1979, %v2043
  %v2108 = vmax.f32 %v1980, %v2044
  %v2109 = vmax.f32 %v1981, %v2045
  %v2110 = vmax.f32 %v1982, %v2046
  %v2111 = vmax.f32 %v1983, %v2047
  %v2112 = vmax.f32 %v1984, %v2048
  %v2113 = vmax.f32 %v1985, %v2049
  %v2114 = vmax.f32 %v1986, %v2050
  %v2115 = vmax.f32 %v1987, %v2051
  %v2116 = vmax.f32 %v1988, %v2052
  %v2117 = vmax.f32 %v1989, %v2053
  %v2118 = vmax.f32 %v1990, %v2054
  %v2119 = vmax.f32 %v1991, %v2055
  %v2120 = vmax.f32 %v1992, %v2056
  %v2121 = vmax.f32 %v1993, %v2057
  %v2122 = vmax.f32 %v1994, %v2058
  %v2123 = vmax.f32 %v1995, %v2059
  %v2124 = vmax.f32 %v1996, %v2060
  %v2125 = vmax.f32 %v1997, %v2061
  %v2126 = vmax.f32 %v1998, %v2062
  %v2127 = vmax.f32 %v1999, %v2063
  %v2128 = vmax.f32 %v2000, %v2064
  %v2129 = vmax.f32 %v2001, %v2065
  %v2130 = vmax.f32 %v2002, %v2066
  %v2131 = vmax.f32 %v2003, %v2067
  %v2132 = vmax.f32 %v2004, %v2068
  %v2133 = vmax.f32 %v2005, %v2069
  %v2134 = vmax.f32 %v2006, %v2070
  %v2135 = vmax.f32 %v2007, %v2071
  %v2136 = vmax.f32 %v2008, %v2072
  %v2137 = vmax.f32 %v2009, %v2073
  %v2138 = vmax.f32 %v2010, %v2074
  %v2139 = vmax.f32 %v2011, %v2075
  %v2140 = vmax.f32 %v2012, %v2076
  %v2141 = vmax.f32 %v2013, %v2077
  %v2142 = vmax.f32 %v2014, %v2078
  %v2143 = vmax.f32 %v2015, %v2079
  %v2144 = vmax.f32 %v2016, %v2080
  %v2145 = vmax.f32 %v2017, %v2081
  %v2146 = vmax.f32 %v2018, %v2082
  %v2147 = vmax.f32 %v2019, %v2083
  %v2148 = vld [vmem:[%s2] sm:$0x1]
  %v2150 = vperm.slane %v2148, 0
  %v2152 = vadd.f32 %v2084, %v2150
  %v2153 = vadd.f32 %v2085, %v2150
  %v2154 = vadd.f32 %v2086, %v2150
  %v2155 = vadd.f32 %v2087, %v2150
  %v2156 = vadd.f32 %v2088, %v2150
  %v2157 = vadd.f32 %v2089, %v2150
  %v2158 = vadd.f32 %v2090, %v2150
  %v2159 = vadd.f32 %v2091, %v2150
  %v2160 = vadd.f32 %v2092, %v2150
  %v2161 = vadd.f32 %v2093, %v2150
  %v2162 = vadd.f32 %v2094, %v2150
  %v2163 = vadd.f32 %v2095, %v2150
  %v2164 = vadd.f32 %v2096, %v2150
  %v2165 = vadd.f32 %v2097, %v2150
  %v2166 = vadd.f32 %v2098, %v2150
  %v2167 = vadd.f32 %v2099, %v2150
  %v2168 = vadd.f32 %v2100, %v2150
  %v2169 = vadd.f32 %v2101, %v2150
  %v2170 = vadd.f32 %v2102, %v2150
  %v2171 = vadd.f32 %v2103, %v2150
  %v2172 = vadd.f32 %v2104, %v2150
  %v2173 = vadd.f32 %v2105, %v2150
  %v2174 = vadd.f32 %v2106, %v2150
  %v2175 = vadd.f32 %v2107, %v2150
  %v2176 = vadd.f32 %v2108, %v2150
  %v2177 = vadd.f32 %v2109, %v2150
  %v2178 = vadd.f32 %v2110, %v2150
  %v2179 = vadd.f32 %v2111, %v2150
  %v2180 = vadd.f32 %v2112, %v2150
  %v2181 = vadd.f32 %v2113, %v2150
  %v2182 = vadd.f32 %v2114, %v2150
  %v2183 = vadd.f32 %v2115, %v2150
  %v2184 = vadd.f32 %v2116, %v2150
  %v2185 = vadd.f32 %v2117, %v2150
  %v2186 = vadd.f32 %v2118, %v2150
  %v2187 = vadd.f32 %v2119, %v2150
  %v2188 = vadd.f32 %v2120, %v2150
  %v2189 = vadd.f32 %v2121, %v2150
  %v2190 = vadd.f32 %v2122, %v2150
  %v2191 = vadd.f32 %v2123, %v2150
  %v2192 = vadd.f32 %v2124, %v2150
  %v2193 = vadd.f32 %v2125, %v2150
  %v2194 = vadd.f32 %v2126, %v2150
  %v2195 = vadd.f32 %v2127, %v2150
  %v2196 = vadd.f32 %v2128, %v2150
  %v2197 = vadd.f32 %v2129, %v2150
  %v2198 = vadd.f32 %v2130, %v2150
  %v2199 = vadd.f32 %v2131, %v2150
  %v2200 = vadd.f32 %v2132, %v2150
  %v2201 = vadd.f32 %v2133, %v2150
  %v2202 = vadd.f32 %v2134, %v2150
  %v2203 = vadd.f32 %v2135, %v2150
  %v2204 = vadd.f32 %v2136, %v2150
  %v2205 = vadd.f32 %v2137, %v2150
  %v2206 = vadd.f32 %v2138, %v2150
  %v2207 = vadd.f32 %v2139, %v2150
  %v2208 = vadd.f32 %v2140, %v2150
  %v2209 = vadd.f32 %v2141, %v2150
  %v2210 = vadd.f32 %v2142, %v2150
  %v2211 = vadd.f32 %v2143, %v2150
  %v2212 = vadd.f32 %v2144, %v2150
  %v2213 = vadd.f32 %v2145, %v2150
  %v2214 = vadd.f32 %v2146, %v2150
  %v2215 = vadd.f32 %v2147, %v2150
  %v2216 = vmax.f32 %v2152, 0.0
  %v2217 = vmax.f32 %v2153, 0.0
  %v2218 = vmax.f32 %v2154, 0.0
  %v2219 = vmax.f32 %v2155, 0.0
  %v2220 = vmax.f32 %v2156, 0.0
  %v2221 = vmax.f32 %v2157, 0.0
  %v2222 = vmax.f32 %v2158, 0.0
  %v2223 = vmax.f32 %v2159, 0.0
  %v2224 = vmax.f32 %v2160, 0.0
  %v2225 = vmax.f32 %v2161, 0.0
  %v2226 = vmax.f32 %v2162, 0.0
  %v2227 = vmax.f32 %v2163, 0.0
  %v2228 = vmax.f32 %v2164, 0.0
  %v2229 = vmax.f32 %v2165, 0.0
  %v2230 = vmax.f32 %v2166, 0.0
  %v2231 = vmax.f32 %v2167, 0.0
  %v2232 = vmax.f32 %v2168, 0.0
  %v2233 = vmax.f32 %v2169, 0.0
  %v2234 = vmax.f32 %v2170, 0.0
  %v2235 = vmax.f32 %v2171, 0.0
  %v2236 = vmax.f32 %v2172, 0.0
  %v2237 = vmax.f32 %v2173, 0.0
  %v2238 = vmax.f32 %v2174, 0.0
  %v2239 = vmax.f32 %v2175, 0.0
  %v2240 = vmax.f32 %v2176, 0.0
  %v2241 = vmax.f32 %v2177, 0.0
  %v2242 = vmax.f32 %v2178, 0.0
  %v2243 = vmax.f32 %v2179, 0.0
  %v2244 = vmax.f32 %v2180, 0.0
  %v2245 = vmax.f32 %v2181, 0.0
  %v2246 = vmax.f32 %v2182, 0.0
  %v2247 = vmax.f32 %v2183, 0.0
  %v2248 = vmax.f32 %v2184, 0.0
  %v2249 = vmax.f32 %v2185, 0.0
  %v2250 = vmax.f32 %v2186, 0.0
  %v2251 = vmax.f32 %v2187, 0.0
  %v2252 = vmax.f32 %v2188, 0.0
  %v2253 = vmax.f32 %v2189, 0.0
  %v2254 = vmax.f32 %v2190, 0.0
  %v2255 = vmax.f32 %v2191, 0.0
  %v2256 = vmax.f32 %v2192, 0.0
  %v2257 = vmax.f32 %v2193, 0.0
  %v2258 = vmax.f32 %v2194, 0.0
  %v2259 = vmax.f32 %v2195, 0.0
  %v2260 = vmax.f32 %v2196, 0.0
  %v2261 = vmax.f32 %v2197, 0.0
  %v2262 = vmax.f32 %v2198, 0.0
  %v2263 = vmax.f32 %v2199, 0.0
  %v2264 = vmax.f32 %v2200, 0.0
  %v2265 = vmax.f32 %v2201, 0.0
  %v2266 = vmax.f32 %v2202, 0.0
  %v2267 = vmax.f32 %v2203, 0.0
  %v2268 = vmax.f32 %v2204, 0.0
  %v2269 = vmax.f32 %v2205, 0.0
  %v2270 = vmax.f32 %v2206, 0.0
  %v2271 = vmax.f32 %v2207, 0.0
  %v2272 = vmax.f32 %v2208, 0.0
  %v2273 = vmax.f32 %v2209, 0.0
  %v2274 = vmax.f32 %v2210, 0.0
  %v2275 = vmax.f32 %v2211, 0.0
  %v2276 = vmax.f32 %v2212, 0.0
  %v2277 = vmax.f32 %v2213, 0.0
  %v2278 = vmax.f32 %v2214, 0.0
  %v2279 = vmax.f32 %v2215, 0.0
  %v2280 = vpack.c.bf16 %v2216, %v2216
  %v2281 = vpack.c.bf16 %v2217, %v2217
  %v2282 = vpack.c.bf16 %v2218, %v2218
  %v2283 = vpack.c.bf16 %v2219, %v2219
  %v2284 = vpack.c.bf16 %v2220, %v2220
  %v2285 = vpack.c.bf16 %v2221, %v2221
  %v2286 = vpack.c.bf16 %v2222, %v2222
  %v2287 = vpack.c.bf16 %v2223, %v2223
  %v2288 = vpack.c.bf16 %v2224, %v2224
  %v2289 = vpack.c.bf16 %v2225, %v2225
  %v2290 = vpack.c.bf16 %v2226, %v2226
  %v2291 = vpack.c.bf16 %v2227, %v2227
  %v2292 = vpack.c.bf16 %v2228, %v2228
  %v2293 = vpack.c.bf16 %v2229, %v2229
  %v2294 = vpack.c.bf16 %v2230, %v2230
  %v2295 = vpack.c.bf16 %v2231, %v2231
  %v2296 = vpack.c.bf16 %v2232, %v2232
  %v2297 = vpack.c.bf16 %v2233, %v2233
  %v2298 = vpack.c.bf16 %v2234, %v2234
  %v2299 = vpack.c.bf16 %v2235, %v2235
  %v2300 = vpack.c.bf16 %v2236, %v2236
  %v2301 = vpack.c.bf16 %v2237, %v2237
  %v2302 = vpack.c.bf16 %v2238, %v2238
  %v2303 = vpack.c.bf16 %v2239, %v2239
  %v2304 = vpack.c.bf16 %v2240, %v2240
  %v2305 = vpack.c.bf16 %v2241, %v2241
  %v2306 = vpack.c.bf16 %v2242, %v2242
  %v2307 = vpack.c.bf16 %v2243, %v2243
  %v2308 = vpack.c.bf16 %v2244, %v2244
  %v2309 = vpack.c.bf16 %v2245, %v2245
  %v2310 = vpack.c.bf16 %v2246, %v2246
  %v2311 = vpack.c.bf16 %v2247, %v2247
  %v2312 = vpack.c.bf16 %v2248, %v2248
  %v2313 = vpack.c.bf16 %v2249, %v2249
  %v2314 = vpack.c.bf16 %v2250, %v2250
  %v2315 = vpack.c.bf16 %v2251, %v2251
  %v2316 = vpack.c.bf16 %v2252, %v2252
  %v2317 = vpack.c.bf16 %v2253, %v2253
  %v2318 = vpack.c.bf16 %v2254, %v2254
  %v2319 = vpack.c.bf16 %v2255, %v2255
  %v2320 = vpack.c.bf16 %v2256, %v2256
  %v2321 = vpack.c.bf16 %v2257, %v2257
  %v2322 = vpack.c.bf16 %v2258, %v2258
  %v2323 = vpack.c.bf16 %v2259, %v2259
  %v2324 = vpack.c.bf16 %v2260, %v2260
  %v2325 = vpack.c.bf16 %v2261, %v2261
  %v2326 = vpack.c.bf16 %v2262, %v2262
  %v2327 = vpack.c.bf16 %v2263, %v2263
  %v2328 = vpack.c.bf16 %v2264, %v2264
  %v2329 = vpack.c.bf16 %v2265, %v2265
  %v2330 = vpack.c.bf16 %v2266, %v2266
  %v2331 = vpack.c.bf16 %v2267, %v2267
  %v2332 = vpack.c.bf16 %v2268, %v2268
  %v2333 = vpack.c.bf16 %v2269, %v2269
  %v2334 = vpack.c.bf16 %v2270, %v2270
  %v2335 = vpack.c.bf16 %v2271, %v2271
  %v2336 = vpack.c.bf16 %v2272, %v2272
  %v2337 = vpack.c.bf16 %v2273, %v2273
  %v2338 = vpack.c.bf16 %v2274, %v2274
  %v2339 = vpack.c.bf16 %v2275, %v2275
  %v2340 = vpack.c.bf16 %v2276, %v2276
  %v2341 = vpack.c.bf16 %v2277, %v2277
  %v2342 = vpack.c.bf16 %v2278, %v2278
  %v2343 = vpack.c.bf16 %v2279, %v2279
  %vm2344 = vcmask 125952
  %2345 = vst.msk [vmem:[%s3] sm:$0xf] %vm2344, %v2280
  %2346 = vst.msk [vmem:[%s3 + $0x4] sm:$0xf] %vm2344, %v2281
  %2347 = vst.msk [vmem:[%s3 + $0x8] sm:$0xf] %vm2344, %v2282
  %2348 = vst.msk [vmem:[%s3 + $0xc] sm:$0xf] %vm2344, %v2283
  %2349 = vst.msk [vmem:[%s3 + $0x10] sm:$0xf] %vm2344, %v2284
  %2350 = vst.msk [vmem:[%s3 + $0x14] sm:$0xf] %vm2344, %v2285
  %2351 = vst.msk [vmem:[%s3 + $0x18] sm:$0xf] %vm2344, %v2286
  %2352 = vst.msk [vmem:[%s3 + $0x1c] sm:$0xf] %vm2344, %v2287
  %2353 = vst.msk [vmem:[%s3 + $0x20] sm:$0xf] %vm2344, %v2288
  %2354 = vst.msk [vmem:[%s3 + $0x24] sm:$0xf] %vm2344, %v2289
  %2355 = vst.msk [vmem:[%s3 + $0x28] sm:$0xf] %vm2344, %v2290
  %2356 = vst.msk [vmem:[%s3 + $0x2c] sm:$0xf] %vm2344, %v2291
  %2357 = vst.msk [vmem:[%s3 + $0x30] sm:$0xf] %vm2344, %v2292
  %2358 = vst.msk [vmem:[%s3 + $0x34] sm:$0xf] %vm2344, %v2293
  %2359 = vst.msk [vmem:[%s3 + $0x38] sm:$0xf] %vm2344, %v2294
  %2360 = vst.msk [vmem:[%s3 + $0x3c] sm:$0xf] %vm2344, %v2295
  %2361 = vst.msk [vmem:[%s3 + $0x40] sm:$0xf] %vm2344, %v2296
  %2362 = vst.msk [vmem:[%s3 + $0x44] sm:$0xf] %vm2344, %v2297
  %2363 = vst.msk [vmem:[%s3 + $0x48] sm:$0xf] %vm2344, %v2298
  %2364 = vst.msk [vmem:[%s3 + $0x4c] sm:$0xf] %vm2344, %v2299
  %2365 = vst.msk [vmem:[%s3 + $0x50] sm:$0xf] %vm2344, %v2300
  %2366 = vst.msk [vmem:[%s3 + $0x54] sm:$0xf] %vm2344, %v2301
  %2367 = vst.msk [vmem:[%s3 + $0x58] sm:$0xf] %vm2344, %v2302
  %2368 = vst.msk [vmem:[%s3 + $0x5c] sm:$0xf] %vm2344, %v2303
  %2369 = vst.msk [vmem:[%s3 + $0x60] sm:$0xf] %vm2344, %v2304
  %2370 = vst.msk [vmem:[%s3 + $0x64] sm:$0xf] %vm2344, %v2305
  %2371 = vst.msk [vmem:[%s3 + $0x68] sm:$0xf] %vm2344, %v2306
  %2372 = vst.msk [vmem:[%s3 + $0x6c] sm:$0xf] %vm2344, %v2307
  %2373 = vst.msk [vmem:[%s3 + $0x70] sm:$0xf] %vm2344, %v2308
  %2374 = vst.msk [vmem:[%s3 + $0x74] sm:$0xf] %vm2344, %v2309
  %2375 = vst.msk [vmem:[%s3 + $0x78] sm:$0xf] %vm2344, %v2310
  %2376 = vst.msk [vmem:[%s3 + $0x7c] sm:$0xf] %vm2344, %v2311
  %2377 = vst.msk [vmem:[%s3 + $0x80] sm:$0xf] %vm2344, %v2312
  %2378 = vst.msk [vmem:[%s3 + $0x84] sm:$0xf] %vm2344, %v2313
  %2379 = vst.msk [vmem:[%s3 + $0x88] sm:$0xf] %vm2344, %v2314
  %2380 = vst.msk [vmem:[%s3 + $0x8c] sm:$0xf] %vm2344, %v2315
  %2381 = vst.msk [vmem:[%s3 + $0x90] sm:$0xf] %vm2344, %v2316
  %2382 = vst.msk [vmem:[%s3 + $0x94] sm:$0xf] %vm2344, %v2317
  %2383 = vst.msk [vmem:[%s3 + $0x98] sm:$0xf] %vm2344, %v2318
  %2384 = vst.msk [vmem:[%s3 + $0x9c] sm:$0xf] %vm2344, %v2319
  %2385 = vst.msk [vmem:[%s3 + $0xa0] sm:$0xf] %vm2344, %v2320
  %2386 = vst.msk [vmem:[%s3 + $0xa4] sm:$0xf] %vm2344, %v2321
  %2387 = vst.msk [vmem:[%s3 + $0xa8] sm:$0xf] %vm2344, %v2322
  %2388 = vst.msk [vmem:[%s3 + $0xac] sm:$0xf] %vm2344, %v2323
  %2389 = vst.msk [vmem:[%s3 + $0xb0] sm:$0xf] %vm2344, %v2324
  %2390 = vst.msk [vmem:[%s3 + $0xb4] sm:$0xf] %vm2344, %v2325
  %2391 = vst.msk [vmem:[%s3 + $0xb8] sm:$0xf] %vm2344, %v2326
  %2392 = vst.msk [vmem:[%s3 + $0xbc] sm:$0xf] %vm2344, %v2327
  %2393 = vst.msk [vmem:[%s3 + $0xc0] sm:$0xf] %vm2344, %v2328
  %2394 = vst.msk [vmem:[%s3 + $0xc4] sm:$0xf] %vm2344, %v2329
  %2395 = vst.msk [vmem:[%s3 + $0xc8] sm:$0xf] %vm2344, %v2330
  %2396 = vst.msk [vmem:[%s3 + $0xcc] sm:$0xf] %vm2344, %v2331
  %2397 = vst.msk [vmem:[%s3 + $0xd0] sm:$0xf] %vm2344, %v2332
  %2398 = vst.msk [vmem:[%s3 + $0xd4] sm:$0xf] %vm2344, %v2333
  %2399 = vst.msk [vmem:[%s3 + $0xd8] sm:$0xf] %vm2344, %v2334
  %2400 = vst.msk [vmem:[%s3 + $0xdc] sm:$0xf] %vm2344, %v2335
  %2401 = vst.msk [vmem:[%s3 + $0xe0] sm:$0xf] %vm2344, %v2336
  %2402 = vst.msk [vmem:[%s3 + $0xe4] sm:$0xf] %vm2344, %v2337
  %2403 = vst.msk [vmem:[%s3 + $0xe8] sm:$0xf] %vm2344, %v2338
  %2404 = vst.msk [vmem:[%s3 + $0xec] sm:$0xf] %vm2344, %v2339
  %2405 = vst.msk [vmem:[%s3 + $0xf0] sm:$0xf] %vm2344, %v2340
  %2406 = vst.msk [vmem:[%s3 + $0xf4] sm:$0xf] %vm2344, %v2341
  %2407 = vst.msk [vmem:[%s3 + $0xf8] sm:$0xf] %vm2344, %v2342
  %2408 = vst.msk [vmem:[%s3 + $0xfc] sm:$0xf] %vm2344, %v2343
  // Predicated region
  $region14: #{small_cnn_forward.4} parent=0 // pred_check
    _
  $region15: #{small_cnn_forward.4} parent=0 // pred_check_branch
    %2410 = sbr.rel (0) target = $region17
  $region16: #{small_cnn_forward.4} parent=0 // pred_region
    _
  $region17: #{small_cnn_forward.4} parent=0 // pred_fallthru
    _
  // Predicated region
  $region18: #{small_cnn_forward.4} parent=0 // pred_check
    _
  $region19: #{small_cnn_forward.4} parent=0 // pred_check_branch
    %2412 = sbr.rel (0) target = $region21
  $region20: #{small_cnn_forward.4} parent=0 // pred_region
    _
  $region21: #{small_cnn_forward.4} parent=0 // pred_fallthru
    _

// kernel: small_cnn_forward.5
$region0: #{small_cnn_forward.5}
  #allocation0 [shape = 'u32[]', space=smem, size = 0x4, offset = 0x4, fixed_abs, tag = 'smem constant byte address 0x4 - core index']
  #allocation1 [shape = 'u32[72,128]{1,0:T(1,128)}', space=vmem, size = 0x9000, scoped, tag = 'internal scratch']
  %s0 = inlined_call_operand.vmem [shape: bf16[512,64], index: 0, kind: input, shape index: {}]
  %s1 = inlined_call_operand.vmem [shape: bf16[64,32], index: 1, kind: input, shape index: {}]
  %s2 = inlined_call_operand.vmem [shape: f32[1,32], index: 2, kind: input, shape index: {}]
  %s3 = inlined_call_operand.vmem [shape: bf16[128,32], index: 3, kind: output, shape index: {}]
  %s4 = sld [smem:[#allocation0]]
  $region22: #{small_cnn_forward.5} parent=0
    _
  %s6 = ssub.s32 1, %s4
  %s7 = scalar_select 0, %s6, %s4
  // Predicated region
  $region2: #{small_cnn_forward.5} parent=0 // pred_check
    _
  $region3: #{small_cnn_forward.5} parent=0 // pred_check_branch
    %9 = sbr.rel (0) target = $region5
  $region4: #{small_cnn_forward.5} parent=0 // pred_region
    _
  $region5: #{small_cnn_forward.5} parent=0 // pred_fallthru
    _
  // Predicated region
  $region6: #{small_cnn_forward.5} parent=0 // pred_check
    _
  $region7: #{small_cnn_forward.5} parent=0 // pred_check_branch
    %11 = sbr.rel (0) target = $region9
  $region8: #{small_cnn_forward.5} parent=0 // pred_region
    _
  $region9: #{small_cnn_forward.5} parent=0 // pred_fallthru
    _
  // Predicated region
  $region10: #{small_cnn_forward.5} parent=0 // pred_check
    _
  $region11: #{small_cnn_forward.5} parent=0 // pred_check_branch
    %13 = sbr.rel (0) target = $region13
  $region12: #{small_cnn_forward.5} parent=0 // pred_region
    _
  $region13: #{small_cnn_forward.5} parent=0 // pred_fallthru
    _
  %v15 = vld [vmem:[%s0] sm:$0xf]
  %v16 = vld [vmem:[%s0 + $0x4] sm:$0xf]
  %v17 = vld [vmem:[%s0 + $0x8] sm:$0xf]
  %v18 = vld [vmem:[%s0 + $0xc] sm:$0xf]
  %v19 = vld [vmem:[%s0 + $0x10] sm:$0xf]
  %v20 = vld [vmem:[%s0 + $0x14] sm:$0xf]
  %v21 = vld [vmem:[%s0 + $0x18] sm:$0xf]
  %v22 = vld [vmem:[%s0 + $0x1c] sm:$0xf]
  %v23 = vld [vmem:[%s0 + $0x20] sm:$0xf]
  %v24 = vld [vmem:[%s0 + $0x24] sm:$0xf]
  %v25 = vld [vmem:[%s0 + $0x28] sm:$0xf]
  %v26 = vld [vmem:[%s0 + $0x2c] sm:$0xf]
  %v27 = vld [vmem:[%s0 + $0x30] sm:$0xf]
  %v28 = vld [vmem:[%s0 + $0x34] sm:$0xf]
  %v29 = vld [vmem:[%s0 + $0x38] sm:$0xf]
  %v30 = vld [vmem:[%s0 + $0x3c] sm:$0xf]
  %v31 = vld [vmem:[%s0 + $0x40] sm:$0xf]
  %v32 = vld [vmem:[%s0 + $0x44] sm:$0xf]
  %v33 = vld [vmem:[%s0 + $0x48] sm:$0xf]
  %v34 = vld [vmem:[%s0 + $0x4c] sm:$0xf]
  %v35 = vld [vmem:[%s0 + $0x50] sm:$0xf]
  %v36 = vld [vmem:[%s0 + $0x54] sm:$0xf]
  %v37 = vld [vmem:[%s0 + $0x58] sm:$0xf]
  %v38 = vld [vmem:[%s0 + $0x5c] sm:$0xf]
  %v39 = vld [vmem:[%s0 + $0x60] sm:$0xf]
  %v40 = vld [vmem:[%s0 + $0x64] sm:$0xf]
  %v41 = vld [vmem:[%s0 + $0x68] sm:$0xf]
  %v42 = vld [vmem:[%s0 + $0x6c] sm:$0xf]
  %v43 = vld [vmem:[%s0 + $0x70] sm:$0xf]
  %v44 = vld [vmem:[%s0 + $0x74] sm:$0xf]
  %v45 = vld [vmem:[%s0 + $0x78] sm:$0xf]
  %v46 = vld [vmem:[%s0 + $0x7c] sm:$0xf]
  %v47 = vld [vmem:[%s0 + $0x80] sm:$0xf]
  %v48 = vld [vmem:[%s0 + $0x84] sm:$0xf]
  %v49 = vld [vmem:[%s0 + $0x88] sm:$0xf]
  %v50 = vld [vmem:[%s0 + $0x8c] sm:$0xf]
  %v51 = vld [vmem:[%s0 + $0x90] sm:$0xf]
  %v52 = vld [vmem:[%s0 + $0x94] sm:$0xf]
  %v53 = vld [vmem:[%s0 + $0x98] sm:$0xf]
  %v54 = vld [vmem:[%s0 + $0x9c] sm:$0xf]
  %v55 = vld [vmem:[%s0 + $0xa0] sm:$0xf]
  %v56 = vld [vmem:[%s0 + $0xa4] sm:$0xf]
  %v57 = vld [vmem:[%s0 + $0xa8] sm:$0xf]
  %v58 = vld [vmem:[%s0 + $0xac] sm:$0xf]
  %v59 = vld [vmem:[%s0 + $0xb0] sm:$0xf]
  %v60 = vld [vmem:[%s0 + $0xb4] sm:$0xf]
  %v61 = vld [vmem:[%s0 + $0xb8] sm:$0xf]
  %v62 = vld [vmem:[%s0 + $0xbc] sm:$0xf]
  %v63 = vld [vmem:[%s0 + $0xc0] sm:$0xf]
  %v64 = vld [vmem:[%s0 + $0xc4] sm:$0xf]
  %v65 = vld [vmem:[%s0 + $0xc8] sm:$0xf]
  %v66 = vld [vmem:[%s0 + $0xcc] sm:$0xf]
  %v67 = vld [vmem:[%s0 + $0xd0] sm:$0xf]
  %v68 = vld [vmem:[%s0 + $0xd4] sm:$0xf]
  %v69 = vld [vmem:[%s0 + $0xd8] sm:$0xf]
  %v70 = vld [vmem:[%s0 + $0xdc] sm:$0xf]
  %v71 = vld [vmem:[%s0 + $0xe0] sm:$0xf]
  %v72 = vld [vmem:[%s0 + $0xe4] sm:$0xf]
  %v73 = vld [vmem:[%s0 + $0xe8] sm:$0xf]
  %v74 = vld [vmem:[%s0 + $0xec] sm:$0xf]
  %v75 = vld [vmem:[%s0 + $0xf0] sm:$0xf]
  %v76 = vld [vmem:[%s0 + $0xf4] sm:$0xf]
  %v77 = vld [vmem:[%s0 + $0xf8] sm:$0xf]
  %v78 = vld [vmem:[%s0 + $0xfc] sm:$0xf]
  %v79 = vld [vmem:[%s1] sm:$0xf]
  %v80 = vld [vmem:[%s1 + $0x4] sm:$0xf]
  %v81 = vld [vmem:[%s1 + $0x8] sm:$0xf]
  %v82 = vld [vmem:[%s1 + $0xc] sm:$0xf]
  %v83 = vld [vmem:[%s1 + $0x10] sm:$0xf]
  %v84 = vld [vmem:[%s1 + $0x14] sm:$0xf]
  %v85 = vld [vmem:[%s1 + $0x18] sm:$0xf]
  %v86 = vld [vmem:[%s1 + $0x1c] sm:$0xf]
  %v151 = vunpack.c.l.b16 %v15
  %v152 = vunpack.c.l.b16 %v16
  %v153 = vunpack.c.l.b16 %v17
  %v154 = vunpack.c.l.b16 %v18
  %v155 = vunpack.c.l.b16 %v19
  %v156 = vunpack.c.l.b16 %v20
  %v157 = vunpack.c.l.b16 %v21
  %v158 = vunpack.c.l.b16 %v22
  %v159 = vunpack.c.l.b16 %v23
  %v160 = vunpack.c.l.b16 %v24
  %v161 = vunpack.c.l.b16 %v25
  %v162 = vunpack.c.l.b16 %v26
  %v163 = vunpack.c.l.b16 %v27
  %v164 = vunpack.c.l.b16 %v28
  %v165 = vunpack.c.l.b16 %v29
  %v166 = vunpack.c.l.b16 %v30
  %v167 = vunpack.c.l.b16 %v31
  %v168 = vunpack.c.l.b16 %v32
  %v169 = vunpack.c.l.b16 %v33
  %v170 = vunpack.c.l.b16 %v34
  %v171 = vunpack.c.l.b16 %v35
  %v172 = vunpack.c.l.b16 %v36
  %v173 = vunpack.c.l.b16 %v37
  %v174 = vunpack.c.l.b16 %v38
  %v175 = vunpack.c.l.b16 %v39
  %v176 = vunpack.c.l.b16 %v40
  %v177 = vunpack.c.l.b16 %v41
  %v178 = vunpack.c.l.b16 %v42
  %v179 = vunpack.c.l.b16 %v43
  %v180 = vunpack.c.l.b16 %v44
  %v181 = vunpack.c.l.b16 %v45
  %v182 = vunpack.c.l.b16 %v46
  %v183 = vunpack.c.l.b16 %v47
  %v184 = vunpack.c.l.b16 %v48
  %v185 = vunpack.c.l.b16 %v49
  %v186 = vunpack.c.l.b16 %v50
  %v187 = vunpack.c.l.b16 %v51
  %v188 = vunpack.c.l.b16 %v52
  %v189 = vunpack.c.l.b16 %v53
  %v190 = vunpack.c.l.b16 %v54
  %v191 = vunpack.c.l.b16 %v55
  %v192 = vunpack.c.l.b16 %v56
  %v193 = vunpack.c.l.b16 %v57
  %v194 = vunpack.c.l.b16 %v58
  %v195 = vunpack.c.l.b16 %v59
  %v196 = vunpack.c.l.b16 %v60
  %v197 = vunpack.c.l.b16 %v61
  %v198 = vunpack.c.l.b16 %v62
  %v199 = vunpack.c.l.b16 %v63
  %v200 = vunpack.c.l.b16 %v64
  %v201 = vunpack.c.l.b16 %v65
  %v202 = vunpack.c.l.b16 %v66
  %v203 = vunpack.c.l.b16 %v67
  %v204 = vunpack.c.l.b16 %v68
  %v205 = vunpack.c.l.b16 %v69
  %v206 = vunpack.c.l.b16 %v70
  %v207 = vunpack.c.l.b16 %v71
  %v208 = vunpack.c.l.b16 %v72
  %v209 = vunpack.c.l.b16 %v73
  %v210 = vunpack.c.l.b16 %v74
  %v211 = vunpack.c.l.b16 %v75
  %v212 = vunpack.c.l.b16 %v76
  %v213 = vunpack.c.l.b16 %v77
  %v214 = vunpack.c.l.b16 %v78
  %v215 = vpack.c.b16 %v152, %v151
  %v216 = vpack.c.b16 %v154, %v153
  %v217 = vpack.c.b16 %v156, %v155
  %v218 = vpack.c.b16 %v158, %v157
  %v219 = vpack.c.b16 %v160, %v159
  %v220 = vpack.c.b16 %v162, %v161
  %v221 = vpack.c.b16 %v164, %v163
  %v222 = vpack.c.b16 %v166, %v165
  %v223 = vpack.c.b16 %v168, %v167
  %v224 = vpack.c.b16 %v170, %v169
  %v225 = vpack.c.b16 %v172, %v171
  %v226 = vpack.c.b16 %v174, %v173
  %v227 = vpack.c.b16 %v176, %v175
  %v228 = vpack.c.b16 %v178, %v177
  %v229 = vpack.c.b16 %v180, %v179
  %v230 = vpack.c.b16 %v182, %v181
  %v231 = vpack.c.b16 %v184, %v183
  %v232 = vpack.c.b16 %v186, %v185
  %v233 = vpack.c.b16 %v188, %v187
  %v234 = vpack.c.b16 %v190, %v189
  %v235 = vpack.c.b16 %v192, %v191
  %v236 = vpack.c.b16 %v194, %v193
  %v237 = vpack.c.b16 %v196, %v195
  %v238 = vpack.c.b16 %v198, %v197
  %v239 = vpack.c.b16 %v200, %v199
  %v240 = vpack.c.b16 %v202, %v201
  %v241 = vpack.c.b16 %v204, %v203
  %v242 = vpack.c.b16 %v206, %v205
  %v243 = vpack.c.b16 %v208, %v207
  %v244 = vpack.c.b16 %v210, %v209
  %v245 = vpack.c.b16 %v212, %v211
  %v246 = vpack.c.b16 %v214, %v213
  %v255 = vunpack.c.l.b16 %v79
  %v256 = vunpack.c.l.b16 %v80
  %v257 = vunpack.c.l.b16 %v81
  %v258 = vunpack.c.l.b16 %v82
  %v259 = vunpack.c.l.b16 %v83
  %v260 = vunpack.c.l.b16 %v84
  %v261 = vunpack.c.l.b16 %v85
  %v262 = vunpack.c.l.b16 %v86
  %v263 = vpack.c.b16 %v256, %v255
  %v264 = vpack.c.b16 %v258, %v257
  %v265 = vpack.c.b16 %v260, %v259
  %v266 = vpack.c.b16 %v262, %v261
  %vm271 = vcmask 523264
  %v273 = vsel %vm271, %v215, 0
  %v276 = vsel %vm271, %v216, 0
  %v279 = vsel %vm271, %v217, 0
  %v282 = vsel %vm271, %v218, 0
  %v285 = vsel %vm271, %v219, 0
  %v288 = vsel %vm271, %v220, 0
  %v291 = vsel %vm271, %v221, 0
  %v294 = vsel %vm271, %v222, 0
  %v297 = vsel %vm271, %v223, 0
  %v300 = vsel %vm271, %v224, 0
  %v303 = vsel %vm271, %v225, 0
  %v306 = vsel %vm271, %v226, 0
  %v309 = vsel %vm271, %v227, 0
  %v312 = vsel %vm271, %v228, 0
  %v315 = vsel %vm271, %v229, 0
  %v318 = vsel %vm271, %v230, 0
  %v321 = vsel %vm271, %v231, 0
  %v324 = vsel %vm271, %v232, 0
  %v327 = vsel %vm271, %v233, 0
  %v330 = vsel %vm271, %v234, 0
  %v333 = vsel %vm271, %v235, 0
  %v336 = vsel %vm271, %v236, 0
  %v339 = vsel %vm271, %v237, 0
  %v342 = vsel %vm271, %v238, 0
  %v345 = vsel %vm271, %v239, 0
  %v348 = vsel %vm271, %v240, 0
  %v351 = vsel %vm271, %v241, 0
  %v354 = vsel %vm271, %v242, 0
  %v357 = vsel %vm271, %v243, 0
  %v360 = vsel %vm271, %v244, 0
  %v363 = vsel %vm271, %v245, 0
  %v366 = vsel %vm271, %v246, 0
  %368 = vmatpush.bf16.msra.mxu0 0
  %369 = vmatpush.bf16.msra.mxu0 0
  %370 = vmatpush.bf16.msra.mxu0 0
  %371 = vmatpush.bf16.msra.mxu0 0
  %372 = vmatpush.bf16.msra.mxu0 %v266
  %373 = vmatpush.bf16.msra.mxu0 %v265
  %374 = vmatpush.bf16.msra.mxu0 %v264
  %375 = vmatpush.bf16.msra.mxu0 %v263
  %376 = vmatmul.bf16.gmra.mxu0 %v273
  %v377 = vpop.f32.mrf.mxu0
  %v378 = vadd.f32 0.0, %v377
  %v379 = vpop.f32.mrf.mxu0
  %v380 = vadd.f32 0.0, %v379
  %381 = vmatmul.bf16.gmra.mxu0 %v276
  %v382 = vpop.f32.mrf.mxu0
  %v383 = vadd.f32 0.0, %v382
  %v384 = vpop.f32.mrf.mxu0
  %v385 = vadd.f32 0.0, %v384
  %386 = vmatmul.bf16.gmra.mxu0 %v279
  %v387 = vpop.f32.mrf.mxu0
  %v388 = vadd.f32 0.0, %v387
  %v389 = vpop.f32.mrf.mxu0
  %v390 = vadd.f32 0.0, %v389
  %391 = vmatmul.bf16.gmra.mxu0 %v282
  %v392 = vpop.f32.mrf.mxu0
  %v393 = vadd.f32 0.0, %v392
  %v394 = vpop.f32.mrf.mxu0
  %v395 = vadd.f32 0.0, %v394
  %396 = vmatmul.bf16.gmra.mxu0 %v285
  %v397 = vpop.f32.mrf.mxu0
  %v398 = vadd.f32 0.0, %v397
  %v399 = vpop.f32.mrf.mxu0
  %v400 = vadd.f32 0.0, %v399
  %401 = vmatmul.bf16.gmra.mxu0 %v288
  %v402 = vpop.f32.mrf.mxu0
  %v403 = vadd.f32 0.0, %v402
  %v404 = vpop.f32.mrf.mxu0
  %v405 = vadd.f32 0.0, %v404
  %406 = vmatmul.bf16.gmra.mxu0 %v291
  %v407 = vpop.f32.mrf.mxu0
  %v408 = vadd.f32 0.0, %v407
  %v409 = vpop.f32.mrf.mxu0
  %v410 = vadd.f32 0.0, %v409
  %411 = vmatmul.bf16.gmra.mxu0 %v294
  %v412 = vpop.f32.mrf.mxu0
  %v413 = vadd.f32 0.0, %v412
  %v414 = vpop.f32.mrf.mxu0
  %v415 = vadd.f32 0.0, %v414
  %416 = vmatmul.bf16.gmra.mxu0 %v297
  %v417 = vpop.f32.mrf.mxu0
  %v418 = vadd.f32 0.0, %v417
  %v419 = vpop.f32.mrf.mxu0
  %v420 = vadd.f32 0.0, %v419
  %421 = vmatmul.bf16.gmra.mxu0 %v300
  %v422 = vpop.f32.mrf.mxu0
  %v423 = vadd.f32 0.0, %v422
  %v424 = vpop.f32.mrf.mxu0
  %v425 = vadd.f32 0.0, %v424
  %426 = vmatmul.bf16.gmra.mxu0 %v303
  %v427 = vpop.f32.mrf.mxu0
  %v428 = vadd.f32 0.0, %v427
  %v429 = vpop.f32.mrf.mxu0
  %v430 = vadd.f32 0.0, %v429
  %431 = vmatmul.bf16.gmra.mxu0 %v306
  %v432 = vpop.f32.mrf.mxu0
  %v433 = vadd.f32 0.0, %v432
  %v434 = vpop.f32.mrf.mxu0
  %v435 = vadd.f32 0.0, %v434
  %436 = vmatmul.bf16.gmra.mxu0 %v309
  %v437 = vpop.f32.mrf.mxu0
  %v438 = vadd.f32 0.0, %v437
  %v439 = vpop.f32.mrf.mxu0
  %v440 = vadd.f32 0.0, %v439
  %441 = vmatmul.bf16.gmra.mxu0 %v312
  %v442 = vpop.f32.mrf.mxu0
  %v443 = vadd.f32 0.0, %v442
  %v444 = vpop.f32.mrf.mxu0
  %v445 = vadd.f32 0.0, %v444
  %446 = vmatmul.bf16.gmra.mxu0 %v315
  %v447 = vpop.f32.mrf.mxu0
  %v448 = vadd.f32 0.0, %v447
  %v449 = vpop.f32.mrf.mxu0
  %v450 = vadd.f32 0.0, %v449
  %451 = vmatmul.bf16.gmra.mxu0 %v318
  %v452 = vpop.f32.mrf.mxu0
  %v453 = vadd.f32 0.0, %v452
  %v454 = vpop.f32.mrf.mxu0
  %v455 = vadd.f32 0.0, %v454
  %456 = vmatmul.bf16.gmra.mxu0 %v321
  %v457 = vpop.f32.mrf.mxu0
  %v458 = vadd.f32 0.0, %v457
  %v459 = vpop.f32.mrf.mxu0
  %v460 = vadd.f32 0.0, %v459
  %461 = vmatmul.bf16.gmra.mxu0 %v324
  %v462 = vpop.f32.mrf.mxu0
  %v463 = vadd.f32 0.0, %v462
  %v464 = vpop.f32.mrf.mxu0
  %v465 = vadd.f32 0.0, %v464
  %466 = vmatmul.bf16.gmra.mxu0 %v327
  %v467 = vpop.f32.mrf.mxu0
  %v468 = vadd.f32 0.0, %v467
  %v469 = vpop.f32.mrf.mxu0
  %v470 = vadd.f32 0.0, %v469
  %471 = vmatmul.bf16.gmra.mxu0 %v330
  %v472 = vpop.f32.mrf.mxu0
  %v473 = vadd.f32 0.0, %v472
  %v474 = vpop.f32.mrf.mxu0
  %v475 = vadd.f32 0.0, %v474
  %476 = vmatmul.bf16.gmra.mxu0 %v333
  %v477 = vpop.f32.mrf.mxu0
  %v478 = vadd.f32 0.0, %v477
  %v479 = vpop.f32.mrf.mxu0
  %v480 = vadd.f32 0.0, %v479
  %481 = vmatmul.bf16.gmra.mxu0 %v336
  %v482 = vpop.f32.mrf.mxu0
  %v483 = vadd.f32 0.0, %v482
  %v484 = vpop.f32.mrf.mxu0
  %v485 = vadd.f32 0.0, %v484
  %486 = vmatmul.bf16.gmra.mxu0 %v339
  %v487 = vpop.f32.mrf.mxu0
  %v488 = vadd.f32 0.0, %v487
  %v489 = vpop.f32.mrf.mxu0
  %v490 = vadd.f32 0.0, %v489
  %491 = vmatmul.bf16.gmra.mxu0 %v342
  %v492 = vpop.f32.mrf.mxu0
  %v493 = vadd.f32 0.0, %v492
  %v494 = vpop.f32.mrf.mxu0
  %v495 = vadd.f32 0.0, %v494
  %496 = vmatmul.bf16.gmra.mxu0 %v345
  %v497 = vpop.f32.mrf.mxu0
  %v498 = vadd.f32 0.0, %v497
  %v499 = vpop.f32.mrf.mxu0
  %v500 = vadd.f32 0.0, %v499
  %501 = vmatmul.bf16.gmra.mxu0 %v348
  %v502 = vpop.f32.mrf.mxu0
  %v503 = vadd.f32 0.0, %v502
  %v504 = vpop.f32.mrf.mxu0
  %v505 = vadd.f32 0.0, %v504
  %506 = vmatmul.bf16.gmra.mxu0 %v351
  %v507 = vpop.f32.mrf.mxu0
  %v508 = vadd.f32 0.0, %v507
  %v509 = vpop.f32.mrf.mxu0
  %v510 = vadd.f32 0.0, %v509
  %511 = vmatmul.bf16.gmra.mxu0 %v354
  %v512 = vpop.f32.mrf.mxu0
  %v513 = vadd.f32 0.0, %v512
  %v514 = vpop.f32.mrf.mxu0
  %v515 = vadd.f32 0.0, %v514
  %516 = vmatmul.bf16.gmra.mxu0 %v357
  %v517 = vpop.f32.mrf.mxu0
  %v518 = vadd.f32 0.0, %v517
  %v519 = vpop.f32.mrf.mxu0
  %v520 = vadd.f32 0.0, %v519
  %521 = vmatmul.bf16.gmra.mxu0 %v360
  %v522 = vpop.f32.mrf.mxu0
  %v523 = vadd.f32 0.0, %v522
  %v524 = vpop.f32.mrf.mxu0
  %v525 = vadd.f32 0.0, %v524
  %526 = vmatmul.bf16.gmra.mxu0 %v363
  %v527 = vpop.f32.mrf.mxu0
  %v528 = vadd.f32 0.0, %v527
  %v529 = vpop.f32.mrf.mxu0
  %v530 = vadd.f32 0.0, %v529
  %531 = vmatmul.bf16.gmra.mxu0 %v366
  %v532 = vpop.f32.mrf.mxu0
  %v533 = vadd.f32 0.0, %v532
  %v534 = vpop.f32.mrf.mxu0
  %v535 = vadd.f32 0.0, %v534
  %536 = vdwg.mxu0
  %v537 = vmax.f32 %v378, %v418
  %v538 = vmax.f32 %v380, %v420
  %v539 = vmax.f32 %v383, %v423
  %v540 = vmax.f32 %v385, %v425
  %v541 = vmax.f32 %v388, %v428
  %v542 = vmax.f32 %v390, %v430
  %v543 = vmax.f32 %v393, %v433
  %v544 = vmax.f32 %v395, %v435
  %v545 = vmax.f32 %v398, %v438
  %v546 = vmax.f32 %v400, %v440
  %v547 = vmax.f32 %v403, %v443
  %v548 = vmax.f32 %v405, %v445
  %v549 = vmax.f32 %v408, %v448
  %v550 = vmax.f32 %v410, %v450
  %v551 = vmax.f32 %v413, %v453
  %v552 = vmax.f32 %v415, %v455
  %v553 = vmax.f32 %v458, %v498
  %v554 = vmax.f32 %v460, %v500
  %v555 = vmax.f32 %v463, %v503
  %v556 = vmax.f32 %v465, %v505
  %v557 = vmax.f32 %v468, %v508
  %v558 = vmax.f32 %v470, %v510
  %v559 = vmax.f32 %v473, %v513
  %v560 = vmax.f32 %v475, %v515
  %v561 = vmax.f32 %v478, %v518
  %v562 = vmax.f32 %v480, %v520
  %v563 = vmax.f32 %v483, %v523
  %v564 = vmax.f32 %v485, %v525
  %v565 = vmax.f32 %v488, %v528
  %v566 = vmax.f32 %v490, %v530
  %v567 = vmax.f32 %v493, %v533
  %v568 = vmax.f32 %v495, %v535
  %v569 = vmax.f32 %v537, %v553
  %v570 = vmax.f32 %v538, %v554
  %v571 = vmax.f32 %v539, %v555
  %v572 = vmax.f32 %v540, %v556
  %v573 = vmax.f32 %v541, %v557
  %v574 = vmax.f32 %v542, %v558
  %v575 = vmax.f32 %v543, %v559
  %v576 = vmax.f32 %v544, %v560
  %v577 = vmax.f32 %v545, %v561
  %v578 = vmax.f32 %v546, %v562
  %v579 = vmax.f32 %v547, %v563
  %v580 = vmax.f32 %v548, %v564
  %v581 = vmax.f32 %v549, %v565
  %v582 = vmax.f32 %v550, %v566
  %v583 = vmax.f32 %v551, %v567
  %v584 = vmax.f32 %v552, %v568
  %v585 = vld [vmem:[%s2] sm:$0x1]
  %v587 = vperm.slane %v585, 0
  %v589 = vadd.f32 %v569, %v587
  %v590 = vadd.f32 %v570, %v587
  %v591 = vadd.f32 %v571, %v587
  %v592 = vadd.f32 %v572, %v587
  %v593 = vadd.f32 %v573, %v587
  %v594 = vadd.f32 %v574, %v587
  %v595 = vadd.f32 %v575, %v587
  %v596 = vadd.f32 %v576, %v587
  %v597 = vadd.f32 %v577, %v587
  %v598 = vadd.f32 %v578, %v587
  %v599 = vadd.f32 %v579, %v587
  %v600 = vadd.f32 %v580, %v587
  %v601 = vadd.f32 %v581, %v587
  %v602 = vadd.f32 %v582, %v587
  %v603 = vadd.f32 %v583, %v587
  %v604 = vadd.f32 %v584, %v587
  %v605 = vmax.f32 %v589, 0.0
  %v606 = vmax.f32 %v590, 0.0
  %v607 = vmax.f32 %v591, 0.0
  %v608 = vmax.f32 %v592, 0.0
  %v609 = vmax.f32 %v593, 0.0
  %v610 = vmax.f32 %v594, 0.0
  %v611 = vmax.f32 %v595, 0.0
  %v612 = vmax.f32 %v596, 0.0
  %v613 = vmax.f32 %v597, 0.0
  %v614 = vmax.f32 %v598, 0.0
  %v615 = vmax.f32 %v599, 0.0
  %v616 = vmax.f32 %v600, 0.0
  %v617 = vmax.f32 %v601, 0.0
  %v618 = vmax.f32 %v602, 0.0
  %v619 = vmax.f32 %v603, 0.0
  %v620 = vmax.f32 %v604, 0.0
  %v621 = vpack.c.bf16 %v605, %v605
  %v622 = vpack.c.bf16 %v606, %v606
  %v623 = vpack.c.bf16 %v607, %v607
  %v624 = vpack.c.bf16 %v608, %v608
  %v625 = vpack.c.bf16 %v609, %v609
  %v626 = vpack.c.bf16 %v610, %v610
  %v627 = vpack.c.bf16 %v611, %v611
  %v628 = vpack.c.bf16 %v612, %v612
  %v629 = vpack.c.bf16 %v613, %v613
  %v630 = vpack.c.bf16 %v614, %v614
  %v631 = vpack.c.bf16 %v615, %v615
  %v632 = vpack.c.bf16 %v616, %v616
  %v633 = vpack.c.bf16 %v617, %v617
  %v634 = vpack.c.bf16 %v618, %v618
  %v635 = vpack.c.bf16 %v619, %v619
  %v636 = vpack.c.bf16 %v620, %v620
  %vm637 = vcmask 257024
  %638 = vst.msk [vmem:[%s3] sm:$0xf] %vm637, %v621
  %639 = vst.msk [vmem:[%s3 + $0x4] sm:$0xf] %vm637, %v622
  %640 = vst.msk [vmem:[%s3 + $0x8] sm:$0xf] %vm637, %v623
  %641 = vst.msk [vmem:[%s3 + $0xc] sm:$0xf] %vm637, %v624
  %642 = vst.msk [vmem:[%s3 + $0x10] sm:$0xf] %vm637, %v625
  %643 = vst.msk [vmem:[%s3 + $0x14] sm:$0xf] %vm637, %v626
  %644 = vst.msk [vmem:[%s3 + $0x18] sm:$0xf] %vm637, %v627
  %645 = vst.msk [vmem:[%s3 + $0x1c] sm:$0xf] %vm637, %v628
  %646 = vst.msk [vmem:[%s3 + $0x20] sm:$0xf] %vm637, %v629
  %647 = vst.msk [vmem:[%s3 + $0x24] sm:$0xf] %vm637, %v630
  %648 = vst.msk [vmem:[%s3 + $0x28] sm:$0xf] %vm637, %v631
  %649 = vst.msk [vmem:[%s3 + $0x2c] sm:$0xf] %vm637, %v632
  %650 = vst.msk [vmem:[%s3 + $0x30] sm:$0xf] %vm637, %v633
  %651 = vst.msk [vmem:[%s3 + $0x34] sm:$0xf] %vm637, %v634
  %652 = vst.msk [vmem:[%s3 + $0x38] sm:$0xf] %vm637, %v635
  %653 = vst.msk [vmem:[%s3 + $0x3c] sm:$0xf] %vm637, %v636
  // Predicated region
  $region14: #{small_cnn_forward.5} parent=0 // pred_check
    _
  $region15: #{small_cnn_forward.5} parent=0 // pred_check_branch
    %655 = sbr.rel (0) target = $region17
  $region16: #{small_cnn_forward.5} parent=0 // pred_region
    _
  $region17: #{small_cnn_forward.5} parent=0 // pred_fallthru
    _
  // Predicated region
  $region18: #{small_cnn_forward.5} parent=0 // pred_check
    _
  $region19: #{small_cnn_forward.5} parent=0 // pred_check_branch
    %657 = sbr.rel (0) target = $region21
  $region20: #{small_cnn_forward.5} parent=0 // pred_region
    _
  $region21: #{small_cnn_forward.5} parent=0 // pred_fallthru
    _

// kernel: small_cnn_forward.6
$region0: #{small_cnn_forward.6}
  #allocation0 [shape = 'u32[]', space=smem, size = 0x4, offset = 0x4, fixed_abs, tag = 'smem constant byte address 0x4 - core index']
  #allocation1 [shape = 'u32[72,128]{1,0:T(1,128)}', space=vmem, size = 0x9000, scoped, tag = 'internal scratch']
  %s0 = inlined_call_operand.vmem [shape: bf16[128,128], index: 0, kind: input, shape index: {}]
  %s1 = inlined_call_operand.vmem [shape: bf16[128,64], index: 1, kind: input, shape index: {}]
  %s2 = inlined_call_operand.vmem [shape: f32[1,64], index: 2, kind: input, shape index: {}]
  %s3 = inlined_call_operand.vmem [shape: bf16[32,64], index: 3, kind: output, shape index: {}]
  %s4 = sld [smem:[#allocation0]]
  $region22: #{small_cnn_forward.6} parent=0
    _
  %s6 = ssub.s32 1, %s4
  %s7 = scalar_select 0, %s6, %s4
  // Predicated region
  $region2: #{small_cnn_forward.6} parent=0 // pred_check
    _
  $region3: #{small_cnn_forward.6} parent=0 // pred_check_branch
    %9 = sbr.rel (0) target = $region5
  $region4: #{small_cnn_forward.6} parent=0 // pred_region
    _
  $region5: #{small_cnn_forward.6} parent=0 // pred_fallthru
    _
  // Predicated region
  $region6: #{small_cnn_forward.6} parent=0 // pred_check
    _
  $region7: #{small_cnn_forward.6} parent=0 // pred_check_branch
    %11 = sbr.rel (0) target = $region9
  $region8: #{small_cnn_forward.6} parent=0 // pred_region
    _
  $region9: #{small_cnn_forward.6} parent=0 // pred_fallthru
    _
  // Predicated region
  $region10: #{small_cnn_forward.6} parent=0 // pred_check
    _
  $region11: #{small_cnn_forward.6} parent=0 // pred_check_branch
    %13 = sbr.rel (0) target = $region13
  $region12: #{small_cnn_forward.6} parent=0 // pred_region
    _
  $region13: #{small_cnn_forward.6} parent=0 // pred_fallthru
    _
  %v14 = vld [vmem:[%s0] sm:$0xf]
  %v15 = vld [vmem:[%s0 + $0x4] sm:$0xf]
  %v16 = vld [vmem:[%s0 + $0x8] sm:$0xf]
  %v17 = vld [vmem:[%s0 + $0xc] sm:$0xf]
  %v18 = vld [vmem:[%s0 + $0x10] sm:$0xf]
  %v19 = vld [vmem:[%s0 + $0x14] sm:$0xf]
  %v20 = vld [vmem:[%s0 + $0x18] sm:$0xf]
  %v21 = vld [vmem:[%s0 + $0x1c] sm:$0xf]
  %v22 = vld [vmem:[%s0 + $0x20] sm:$0xf]
  %v23 = vld [vmem:[%s0 + $0x24] sm:$0xf]
  %v24 = vld [vmem:[%s0 + $0x28] sm:$0xf]
  %v25 = vld [vmem:[%s0 + $0x2c] sm:$0xf]
  %v26 = vld [vmem:[%s0 + $0x30] sm:$0xf]
  %v27 = vld [vmem:[%s0 + $0x34] sm:$0xf]
  %v28 = vld [vmem:[%s0 + $0x38] sm:$0xf]
  %v29 = vld [vmem:[%s0 + $0x3c] sm:$0xf]
  %v30 = vld [vmem:[%s1] sm:$0xf]
  %v31 = vld [vmem:[%s1 + $0x4] sm:$0xf]
  %v32 = vld [vmem:[%s1 + $0x8] sm:$0xf]
  %v33 = vld [vmem:[%s1 + $0xc] sm:$0xf]
  %v34 = vld [vmem:[%s1 + $0x10] sm:$0xf]
  %v35 = vld [vmem:[%s1 + $0x14] sm:$0xf]
  %v36 = vld [vmem:[%s1 + $0x18] sm:$0xf]
  %v37 = vld [vmem:[%s1 + $0x1c] sm:$0xf]
  %v38 = vld [vmem:[%s1 + $0x20] sm:$0xf]
  %v39 = vld [vmem:[%s1 + $0x24] sm:$0xf]
  %v40 = vld [vmem:[%s1 + $0x28] sm:$0xf]
  %v41 = vld [vmem:[%s1 + $0x2c] sm:$0xf]
  %v42 = vld [vmem:[%s1 + $0x30] sm:$0xf]
  %v43 = vld [vmem:[%s1 + $0x34] sm:$0xf]
  %v44 = vld [vmem:[%s1 + $0x38] sm:$0xf]
  %v45 = vld [vmem:[%s1 + $0x3c] sm:$0xf]
  %v62 = vunpack.c.l.b16 %v14
  %v63 = vunpack.c.l.b16 %v15
  %v64 = vunpack.c.l.b16 %v16
  %v65 = vunpack.c.l.b16 %v17
  %v66 = vunpack.c.l.b16 %v18
  %v67 = vunpack.c.l.b16 %v19
  %v68 = vunpack.c.l.b16 %v20
  %v69 = vunpack.c.l.b16 %v21
  %v70 = vunpack.c.l.b16 %v22
  %v71 = vunpack.c.l.b16 %v23
  %v72 = vunpack.c.l.b16 %v24
  %v73 = vunpack.c.l.b16 %v25
  %v74 = vunpack.c.l.b16 %v26
  %v75 = vunpack.c.l.b16 %v27
  %v76 = vunpack.c.l.b16 %v28
  %v77 = vunpack.c.l.b16 %v29
  %v78 = vpack.c.b16 %v63, %v62
  %v79 = vpack.c.b16 %v65, %v64
  %v80 = vpack.c.b16 %v67, %v66
  %v81 = vpack.c.b16 %v69, %v68
  %v82 = vpack.c.b16 %v71, %v70
  %v83 = vpack.c.b16 %v73, %v72
  %v84 = vpack.c.b16 %v75, %v74
  %v85 = vpack.c.b16 %v77, %v76
  %v110 = vunpack.c.l.b16 %v30
  %v111 = vunpack.c.l.b16 %v31
  %v112 = vunpack.c.l.b16 %v32
  %v113 = vunpack.c.l.b16 %v33
  %v114 = vunpack.c.l.b16 %v34
  %v115 = vunpack.c.l.b16 %v35
  %v116 = vunpack.c.l.b16 %v36
  %v117 = vunpack.c.l.b16 %v37
  %v118 = vunpack.c.l.b16 %v38
  %v119 = vunpack.c.l.b16 %v39
  %v120 = vunpack.c.l.b16 %v40
  %v121 = vunpack.c.l.b16 %v41
  %v122 = vunpack.c.l.b16 %v42
  %v123 = vunpack.c.l.b16 %v43
  %v124 = vunpack.c.l.b16 %v44
  %v125 = vunpack.c.l.b16 %v45
  %v126 = vpack.c.b16 %v111, %v110
  %v127 = vpack.c.b16 %v113, %v112
  %v128 = vpack.c.b16 %v115, %v114
  %v129 = vpack.c.b16 %v117, %v116
  %v130 = vpack.c.b16 %v119, %v118
  %v131 = vpack.c.b16 %v121, %v120
  %v132 = vpack.c.b16 %v123, %v122
  %v133 = vpack.c.b16 %v125, %v124
  %142 = vmatpush.bf16.msra.mxu0 %v133
  %143 = vmatpush.bf16.msra.mxu0 %v132
  %144 = vmatpush.bf16.msra.mxu0 %v131
  %145 = vmatpush.bf16.msra.mxu0 %v130
  %146 = vmatpush.bf16.msra.mxu0 %v129
  %147 = vmatpush.bf16.msra.mxu0 %v128
  %148 = vmatpush.bf16.msra.mxu0 %v127
  %149 = vmatpush.bf16.msra.mxu0 %v126
  %150 = vmatmul.bf16.gmra.mxu0 %v78
  %v151 = vpop.f32.mrf.mxu0
  %v152 = vadd.f32 0.0, %v151
  %v153 = vpop.f32.mrf.mxu0
  %v154 = vadd.f32 0.0, %v153
  %155 = vmatmul.bf16.gmra.mxu0 %v79
  %v156 = vpop.f32.mrf.mxu0
  %v157 = vadd.f32 0.0, %v156
  %v158 = vpop.f32.mrf.mxu0
  %v159 = vadd.f32 0.0, %v158
  %160 = vmatmul.bf16.gmra.mxu0 %v80
  %v161 = vpop.f32.mrf.mxu0
  %v162 = vadd.f32 0.0, %v161
  %v163 = vpop.f32.mrf.mxu0
  %v164 = vadd.f32 0.0, %v163
  %165 = vmatmul.bf16.gmra.mxu0 %v81
  %v166 = vpop.f32.mrf.mxu0
  %v167 = vadd.f32 0.0, %v166
  %v168 = vpop.f32.mrf.mxu0
  %v169 = vadd.f32 0.0, %v168
  %170 = vmatmul.bf16.gmra.mxu0 %v82
  %v171 = vpop.f32.mrf.mxu0
  %v172 = vadd.f32 0.0, %v171
  %v173 = vpop.f32.mrf.mxu0
  %v174 = vadd.f32 0.0, %v173
  %175 = vmatmul.bf16.gmra.mxu0 %v83
  %v176 = vpop.f32.mrf.mxu0
  %v177 = vadd.f32 0.0, %v176
  %v178 = vpop.f32.mrf.mxu0
  %v179 = vadd.f32 0.0, %v178
  %180 = vmatmul.bf16.gmra.mxu0 %v84
  %v181 = vpop.f32.mrf.mxu0
  %v182 = vadd.f32 0.0, %v181
  %v183 = vpop.f32.mrf.mxu0
  %v184 = vadd.f32 0.0, %v183
  %185 = vmatmul.bf16.gmra.mxu0 %v85
  %v186 = vpop.f32.mrf.mxu0
  %v187 = vadd.f32 0.0, %v186
  %v188 = vpop.f32.mrf.mxu0
  %v189 = vadd.f32 0.0, %v188
  %190 = vdwg.mxu0
  %v191 = vmax.f32 %v152, %v162
  %v192 = vmax.f32 %v154, %v164
  %v193 = vmax.f32 %v157, %v167
  %v194 = vmax.f32 %v159, %v169
  %v195 = vmax.f32 %v172, %v182
  %v196 = vmax.f32 %v174, %v184
  %v197 = vmax.f32 %v177, %v187
  %v198 = vmax.f32 %v179, %v189
  %v199 = vmax.f32 %v191, %v195
  %v200 = vmax.f32 %v192, %v196
  %v201 = vmax.f32 %v193, %v197
  %v202 = vmax.f32 %v194, %v198
  %v203 = vld [vmem:[%s2] sm:$0x1]
  %v205 = vperm.slane %v203, 0
  %v207 = vadd.f32 %v199, %v205
  %v208 = vadd.f32 %v200, %v205
  %v209 = vadd.f32 %v201, %v205
  %v210 = vadd.f32 %v202, %v205
  %v211 = vmax.f32 %v207, 0.0
  %v212 = vmax.f32 %v208, 0.0
  %v213 = vmax.f32 %v209, 0.0
  %v214 = vmax.f32 %v210, 0.0
  %v215 = vpack.c.bf16 %v211, %v211
  %v216 = vpack.c.bf16 %v212, %v212
  %v217 = vpack.c.bf16 %v213, %v213
  %v218 = vpack.c.bf16 %v214, %v214
  %vm219 = vcmask 519168
  %220 = vst.msk [vmem:[%s3] sm:$0xf] %vm219, %v215
  %221 = vst.msk [vmem:[%s3 + $0x4] sm:$0xf] %vm219, %v216
  %222 = vst.msk [vmem:[%s3 + $0x8] sm:$0xf] %vm219, %v217
  %223 = vst.msk [vmem:[%s3 + $0xc] sm:$0xf] %vm219, %v218
  // Predicated region
  $region14: #{small_cnn_forward.6} parent=0 // pred_check
    _
  $region15: #{small_cnn_forward.6} parent=0 // pred_check_branch
    %225 = sbr.rel (0) target = $region17
  $region16: #{small_cnn_forward.6} parent=0 // pred_region
    _
  $region17: #{small_cnn_forward.6} parent=0 // pred_fallthru
    _
  // Predicated region
  $region18: #{small_cnn_forward.6} parent=0 // pred_check
    _
  $region19: #{small_cnn_forward.6} parent=0 // pred_check_branch
    %227 = sbr.rel (0) target = $region21
  $region20: #{small_cnn_forward.6} parent=0 // pred_region
    _
  $region21: #{small_cnn_forward.6} parent=0 // pred_fallthru
    _

// kernel: small_cnn_forward.7
$region0: #{small_cnn_forward.7}
  #allocation0 [shape = 'u32[]', space=smem, size = 0x4, offset = 0x4, fixed_abs, tag = 'smem constant byte address 0x4 - core index']
  #allocation1 [shape = 'u32[72,128]{1,0:T(1,128)}', space=vmem, size = 0x9000, scoped, tag = 'internal scratch']
  %s0 = inlined_call_operand.vmem [shape: bf16[2,1024], index: 0, kind: input, shape index: {}]
  %s1 = inlined_call_operand.vmem [shape: bf16[1024,512], index: 1, kind: input, shape index: {}]
  %s2 = inlined_call_operand.vmem [shape: f32[1,512], index: 2, kind: input, shape index: {}]
  %s3 = inlined_call_operand.vmem [shape: bf16[512,4], index: 3, kind: input, shape index: {}]
  %s4 = inlined_call_operand.vmem [shape: f32[1,4], index: 4, kind: input, shape index: {}]
  %s5 = inlined_call_operand.hbm [shape: f32[2,4], index: 5, kind: output, shape index: {}]
  %s6 = sld [smem:[#allocation0]]
  $region30: #{small_cnn_forward.7} parent=0
    _
  %s8 = ssub.s32 1, %s6
  %s9 = scalar_select 0, %s8, %s6
  $region1: #{small_cnn_forward.7} parent=0
    #allocation2 [shape = 'u8[1024]{0}', space=vmem, size = 0x400, scoped, tag = 'output window, operand 0, single buffered']
    #allocation3 [shape = 's32[1]{0}', space=sflag, size = 0x4, scoped, tag = 'scoped memory for small_cnn_forward.7']
    %10 = vsyncpa [#allocation3], 0
    // Predicated region
    $region2: #{small_cnn_forward.7} parent=1 // pred_check
      _
    $region3: #{small_cnn_forward.7} parent=1 // pred_check_branch
      %12 = sbr.rel (0) target = $region5
    $region4: #{small_cnn_forward.7} parent=1 // pred_region
      _
    $region5: #{small_cnn_forward.7} parent=1 // pred_fallthru
      _
    // Predicated region
    $region6: #{small_cnn_forward.7} parent=1 // pred_check
      _
    $region7: #{small_cnn_forward.7} parent=1 // pred_check_branch
      %14 = sbr.rel (0) target = $region9
    $region8: #{small_cnn_forward.7} parent=1 // pred_region
      _
    $region9: #{small_cnn_forward.7} parent=1 // pred_fallthru
      _
    // Predicated region
    $region10: #{small_cnn_forward.7} parent=1 // pred_check
      _
    $region11: #{small_cnn_forward.7} parent=1 // pred_check_branch
      %16 = sbr.rel (0) target = $region13
    $region12: #{small_cnn_forward.7} parent=1 // pred_region
      _
    $region13: #{small_cnn_forward.7} parent=1 // pred_fallthru
      _
    // Predicated region
    $region14: #{small_cnn_forward.7} parent=1 // pred_check
      _
    $region15: #{small_cnn_forward.7} parent=1 // pred_check_branch
      %18 = sbr.rel (0) target = $region17
    $region16: #{small_cnn_forward.7} parent=1 // pred_region
      _
    $region17: #{small_cnn_forward.7} parent=1 // pred_fallthru
      _
    // Predicated region
    $region18: #{small_cnn_forward.7} parent=1 // pred_check
      _
    $region19: #{small_cnn_forward.7} parent=1 // pred_check_branch
      %20 = sbr.rel (0) target = $region21
    $region20: #{small_cnn_forward.7} parent=1 // pred_region
      _
    $region21: #{small_cnn_forward.7} parent=1 // pred_fallthru
      _
    %v21 = vld [vmem:[%s0] sm:$0xff]
    %v22 = vld [vmem:[%s1] sm:$0xff]
    %v23 = vld [vmem:[%s1 + $0x8] sm:$0xff]
    %v24 = vld [vmem:[%s1 + $0x10] sm:$0xff]
    %v25 = vld [vmem:[%s1 + $0x18] sm:$0xff]
    %v26 = vld [vmem:[%s1 + $0x20] sm:$0xff]
    %v27 = vld [vmem:[%s1 + $0x28] sm:$0xff]
    %v28 = vld [vmem:[%s1 + $0x30] sm:$0xff]
    %v29 = vld [vmem:[%s1 + $0x38] sm:$0xff]
    %v30 = vld [vmem:[%s1 + $0x40] sm:$0xff]
    %v31 = vld [vmem:[%s1 + $0x48] sm:$0xff]
    %v32 = vld [vmem:[%s1 + $0x50] sm:$0xff]
    %v33 = vld [vmem:[%s1 + $0x58] sm:$0xff]
    %v34 = vld [vmem:[%s1 + $0x60] sm:$0xff]
    %v35 = vld [vmem:[%s1 + $0x68] sm:$0xff]
    %v36 = vld [vmem:[%s1 + $0x70] sm:$0xff]
    %v37 = vld [vmem:[%s1 + $0x78] sm:$0xff]
    %v38 = vld [vmem:[%s1 + $0x80] sm:$0xff]
    %v39 = vld [vmem:[%s1 + $0x88] sm:$0xff]
    %v40 = vld [vmem:[%s1 + $0x90] sm:$0xff]
    %v41 = vld [vmem:[%s1 + $0x98] sm:$0xff]
    %v42 = vld [vmem:[%s1 + $0xa0] sm:$0xff]
    %v43 = vld [vmem:[%s1 + $0xa8] sm:$0xff]
    %v44 = vld [vmem:[%s1 + $0xb0] sm:$0xff]
    %v45 = vld [vmem:[%s1 + $0xb8] sm:$0xff]
    %v46 = vld [vmem:[%s1 + $0xc0] sm:$0xff]
    %v47 = vld [vmem:[%s1 + $0xc8] sm:$0xff]
    %v48 = vld [vmem:[%s1 + $0xd0] sm:$0xff]
    %v49 = vld [vmem:[%s1 + $0xd8] sm:$0xff]
    %v50 = vld [vmem:[%s1 + $0xe0] sm:$0xff]
    %v51 = vld [vmem:[%s1 + $0xe8] sm:$0xff]
    %v52 = vld [vmem:[%s1 + $0xf0] sm:$0xff]
    %v53 = vld [vmem:[%s1 + $0xf8] sm:$0xff]
    %v54 = vld [vmem:[%s1 + $0x100] sm:$0xff]
    %v55 = vld [vmem:[%s1 + $0x108] sm:$0xff]
    %v56 = vld [vmem:[%s1 + $0x110] sm:$0xff]
    %v57 = vld [vmem:[%s1 + $0x118] sm:$0xff]
    %v58 = vld [vmem:[%s1 + $0x120] sm:$0xff]
    %v59 = vld [vmem:[%s1 + $0x128] sm:$0xff]
    %v60 = vld [vmem:[%s1 + $0x130] sm:$0xff]
    %v61 = vld [vmem:[%s1 + $0x138] sm:$0xff]
    %v62 = vld [vmem:[%s1 + $0x140] sm:$0xff]
    %v63 = vld [vmem:[%s1 + $0x148] sm:$0xff]
    %v64 = vld [vmem:[%s1 + $0x150] sm:$0xff]
    %v65 = vld [vmem:[%s1 + $0x158] sm:$0xff]
    %v66 = vld [vmem:[%s1 + $0x160] sm:$0xff]
    %v67 = vld [vmem:[%s1 + $0x168] sm:$0xff]
    %v68 = vld [vmem:[%s1 + $0x170] sm:$0xff]
    %v69 = vld [vmem:[%s1 + $0x178] sm:$0xff]
    %v70 = vld [vmem:[%s1 + $0x180] sm:$0xff]
    %v71 = vld [vmem:[%s1 + $0x188] sm:$0xff]
    %v72 = vld [vmem:[%s1 + $0x190] sm:$0xff]
    %v73 = vld [vmem:[%s1 + $0x198] sm:$0xff]
    %v74 = vld [vmem:[%s1 + $0x1a0] sm:$0xff]
    %v75 = vld [vmem:[%s1 + $0x1a8] sm:$0xff]
    %v76 = vld [vmem:[%s1 + $0x1b0] sm:$0xff]
    %v77 = vld [vmem:[%s1 + $0x1b8] sm:$0xff]
    %v78 = vld [vmem:[%s1 + $0x1c0] sm:$0xff]
    %v79 = vld [vmem:[%s1 + $0x1c8] sm:$0xff]
    %v80 = vld [vmem:[%s1 + $0x1d0] sm:$0xff]
    %v81 = vld [vmem:[%s1 + $0x1d8] sm:$0xff]
    %v82 = vld [vmem:[%s1 + $0x1e0] sm:$0xff]
    %v83 = vld [vmem:[%s1 + $0x1e8] sm:$0xff]
    %v84 = vld [vmem:[%s1 + $0x1f0] sm:$0xff]
    %v85 = vld [vmem:[%s1 + $0x1f8] sm:$0xff]
    %v86 = vld [vmem:[%s1 + $0x200] sm:$0xff]
    %v87 = vld [vmem:[%s1 + $0x208] sm:$0xff]
    %v88 = vld [vmem:[%s1 + $0x210] sm:$0xff]
    %v89 = vld [vmem:[%s1 + $0x218] sm:$0xff]
    %v90 = vld [vmem:[%s1 + $0x220] sm:$0xff]
    %v91 = vld [vmem:[%s1 + $0x228] sm:$0xff]
    %v92 = vld [vmem:[%s1 + $0x230] sm:$0xff]
    %v93 = vld [vmem:[%s1 + $0x238] sm:$0xff]
    %v94 = vld [vmem:[%s1 + $0x240] sm:$0xff]
    %v95 = vld [vmem:[%s1 + $0x248] sm:$0xff]
    %v96 = vld [vmem:[%s1 + $0x250] sm:$0xff]
    %v97 = vld [vmem:[%s1 + $0x258] sm:$0xff]
    %v98 = vld [vmem:[%s1 + $0x260] sm:$0xff]
    %v99 = vld [vmem:[%s1 + $0x268] sm:$0xff]
    %v100 = vld [vmem:[%s1 + $0x270] sm:$0xff]
    %v101 = vld [vmem:[%s1 + $0x278] sm:$0xff]
    %v102 = vld [vmem:[%s1 + $0x280] sm:$0xff]
    %v103 = vld [vmem:[%s1 + $0x288] sm:$0xff]
    %v104 = vld [vmem:[%s1 + $0x290] sm:$0xff]
    %v105 = vld [vmem:[%s1 + $0x298] sm:$0xff]
    %v106 = vld [vmem:[%s1 + $0x2a0] sm:$0xff]
    %v107 = vld [vmem:[%s1 + $0x2a8] sm:$0xff]
    %v108 = vld [vmem:[%s1 + $0x2b0] sm:$0xff]
    %v109 = vld [vmem:[%s1 + $0x2b8] sm:$0xff]
    %v110 = vld [vmem:[%s1 + $0x2c0] sm:$0xff]
    %v111 = vld [vmem:[%s1 + $0x2c8] sm:$0xff]
    %v112 = vld [vmem:[%s1 + $0x2d0] sm:$0xff]
    %v113 = vld [vmem:[%s1 + $0x2d8] sm:$0xff]
    %v114 = vld [vmem:[%s1 + $0x2e0] sm:$0xff]
    %v115 = vld [vmem:[%s1 + $0x2e8] sm:$0xff]
    %v116 = vld [vmem:[%s1 + $0x2f0] sm:$0xff]
    %v117 = vld [vmem:[%s1 + $0x2f8] sm:$0xff]
    %v118 = vld [vmem:[%s1 + $0x300] sm:$0xff]
    %v119 = vld [vmem:[%s1 + $0x308] sm:$0xff]
    %v120 = vld [vmem:[%s1 + $0x310] sm:$0xff]
    %v121 = vld [vmem:[%s1 + $0x318] sm:$0xff]
    %v122 = vld [vmem:[%s1 + $0x320] sm:$0xff]
    %v123 = vld [vmem:[%s1 + $0x328] sm:$0xff]
    %v124 = vld [vmem:[%s1 + $0x330] sm:$0xff]
    %v125 = vld [vmem:[%s1 + $0x338] sm:$0xff]
    %v126 = vld [vmem:[%s1 + $0x340] sm:$0xff]
    %v127 = vld [vmem:[%s1 + $0x348] sm:$0xff]
    %v128 = vld [vmem:[%s1 + $0x350] sm:$0xff]
    %v129 = vld [vmem:[%s1 + $0x358] sm:$0xff]
    %v130 = vld [vmem:[%s1 + $0x360] sm:$0xff]
    %v131 = vld [vmem:[%s1 + $0x368] sm:$0xff]
    %v132 = vld [vmem:[%s1 + $0x370] sm:$0xff]
    %v133 = vld [vmem:[%s1 + $0x378] sm:$0xff]
    %v134 = vld [vmem:[%s1 + $0x380] sm:$0xff]
    %v135 = vld [vmem:[%s1 + $0x388] sm:$0xff]
    %v136 = vld [vmem:[%s1 + $0x390] sm:$0xff]
    %v137 = vld [vmem:[%s1 + $0x398] sm:$0xff]
    %v138 = vld [vmem:[%s1 + $0x3a0] sm:$0xff]
    %v139 = vld [vmem:[%s1 + $0x3a8] sm:$0xff]
    %v140 = vld [vmem:[%s1 + $0x3b0] sm:$0xff]
    %v141 = vld [vmem:[%s1 + $0x3b8] sm:$0xff]
    %v142 = vld [vmem:[%s1 + $0x3c0] sm:$0xff]
    %v143 = vld [vmem:[%s1 + $0x3c8] sm:$0xff]
    %v144 = vld [vmem:[%s1 + $0x3d0] sm:$0xff]
    %v145 = vld [vmem:[%s1 + $0x3d8] sm:$0xff]
    %v146 = vld [vmem:[%s1 + $0x3e0] sm:$0xff]
    %v147 = vld [vmem:[%s1 + $0x3e8] sm:$0xff]
    %v148 = vld [vmem:[%s1 + $0x3f0] sm:$0xff]
    %v149 = vld [vmem:[%s1 + $0x3f8] sm:$0xff]
    %v150 = vld [vmem:[%s1 + $0x400] sm:$0xff]
    %v151 = vld [vmem:[%s1 + $0x408] sm:$0xff]
    %v152 = vld [vmem:[%s1 + $0x410] sm:$0xff]
    %v153 = vld [vmem:[%s1 + $0x418] sm:$0xff]
    %v154 = vld [vmem:[%s1 + $0x420] sm:$0xff]
    %v155 = vld [vmem:[%s1 + $0x428] sm:$0xff]
    %v156 = vld [vmem:[%s1 + $0x430] sm:$0xff]
    %v157 = vld [vmem:[%s1 + $0x438] sm:$0xff]
    %v158 = vld [vmem:[%s1 + $0x440] sm:$0xff]
    %v159 = vld [vmem:[%s1 + $0x448] sm:$0xff]
    %v160 = vld [vmem:[%s1 + $0x450] sm:$0xff]
    %v161 = vld [vmem:[%s1 + $0x458] sm:$0xff]
    %v162 = vld [vmem:[%s1 + $0x460] sm:$0xff]
    %v163 = vld [vmem:[%s1 + $0x468] sm:$0xff]
    %v164 = vld [vmem:[%s1 + $0x470] sm:$0xff]
    %v165 = vld [vmem:[%s1 + $0x478] sm:$0xff]
    %v166 = vld [vmem:[%s1 + $0x480] sm:$0xff]
    %v167 = vld [vmem:[%s1 + $0x488] sm:$0xff]
    %v168 = vld [vmem:[%s1 + $0x490] sm:$0xff]
    %v169 = vld [vmem:[%s1 + $0x498] sm:$0xff]
    %v170 = vld [vmem:[%s1 + $0x4a0] sm:$0xff]
    %v171 = vld [vmem:[%s1 + $0x4a8] sm:$0xff]
    %v172 = vld [vmem:[%s1 + $0x4b0] sm:$0xff]
    %v173 = vld [vmem:[%s1 + $0x4b8] sm:$0xff]
    %v174 = vld [vmem:[%s1 + $0x4c0] sm:$0xff]
    %v175 = vld [vmem:[%s1 + $0x4c8] sm:$0xff]
    %v176 = vld [vmem:[%s1 + $0x4d0] sm:$0xff]
    %v177 = vld [vmem:[%s1 + $0x4d8] sm:$0xff]
    %v178 = vld [vmem:[%s1 + $0x4e0] sm:$0xff]
    %v179 = vld [vmem:[%s1 + $0x4e8] sm:$0xff]
    %v180 = vld [vmem:[%s1 + $0x4f0] sm:$0xff]
    %v181 = vld [vmem:[%s1 + $0x4f8] sm:$0xff]
    %v182 = vld [vmem:[%s1 + $0x500] sm:$0xff]
    %v183 = vld [vmem:[%s1 + $0x508] sm:$0xff]
    %v184 = vld [vmem:[%s1 + $0x510] sm:$0xff]
    %v185 = vld [vmem:[%s1 + $0x518] sm:$0xff]
    %v186 = vld [vmem:[%s1 + $0x520] sm:$0xff]
    %v187 = vld [vmem:[%s1 + $0x528] sm:$0xff]
    %v188 = vld [vmem:[%s1 + $0x530] sm:$0xff]
    %v189 = vld [vmem:[%s1 + $0x538] sm:$0xff]
    %v190 = vld [vmem:[%s1 + $0x540] sm:$0xff]
    %v191 = vld [vmem:[%s1 + $0x548] sm:$0xff]
    %v192 = vld [vmem:[%s1 + $0x550] sm:$0xff]
    %v193 = vld [vmem:[%s1 + $0x558] sm:$0xff]
    %v194 = vld [vmem:[%s1 + $0x560] sm:$0xff]
    %v195 = vld [vmem:[%s1 + $0x568] sm:$0xff]
    %v196 = vld [vmem:[%s1 + $0x570] sm:$0xff]
    %v197 = vld [vmem:[%s1 + $0x578] sm:$0xff]
    %v198 = vld [vmem:[%s1 + $0x580] sm:$0xff]
    %v199 = vld [vmem:[%s1 + $0x588] sm:$0xff]
    %v200 = vld [vmem:[%s1 + $0x590] sm:$0xff]
    %v201 = vld [vmem:[%s1 + $0x598] sm:$0xff]
    %v202 = vld [vmem:[%s1 + $0x5a0] sm:$0xff]
    %v203 = vld [vmem:[%s1 + $0x5a8] sm:$0xff]
    %v204 = vld [vmem:[%s1 + $0x5b0] sm:$0xff]
    %v205 = vld [vmem:[%s1 + $0x5b8] sm:$0xff]
    %v206 = vld [vmem:[%s1 + $0x5c0] sm:$0xff]
    %v207 = vld [vmem:[%s1 + $0x5c8] sm:$0xff]
    %v208 = vld [vmem:[%s1 + $0x5d0] sm:$0xff]
    %v209 = vld [vmem:[%s1 + $0x5d8] sm:$0xff]
    %v210 = vld [vmem:[%s1 + $0x5e0] sm:$0xff]
    %v211 = vld [vmem:[%s1 + $0x5e8] sm:$0xff]
    %v212 = vld [vmem:[%s1 + $0x5f0] sm:$0xff]
    %v213 = vld [vmem:[%s1 + $0x5f8] sm:$0xff]
    %v214 = vld [vmem:[%s1 + $0x600] sm:$0xff]
    %v215 = vld [vmem:[%s1 + $0x608] sm:$0xff]
    %v216 = vld [vmem:[%s1 + $0x610] sm:$0xff]
    %v217 = vld [vmem:[%s1 + $0x618] sm:$0xff]
    %v218 = vld [vmem:[%s1 + $0x620] sm:$0xff]
    %v219 = vld [vmem:[%s1 + $0x628] sm:$0xff]
    %v220 = vld [vmem:[%s1 + $0x630] sm:$0xff]
    %v221 = vld [vmem:[%s1 + $0x638] sm:$0xff]
    %v222 = vld [vmem:[%s1 + $0x640] sm:$0xff]
    %v223 = vld [vmem:[%s1 + $0x648] sm:$0xff]
    %v224 = vld [vmem:[%s1 + $0x650] sm:$0xff]
    %v225 = vld [vmem:[%s1 + $0x658] sm:$0xff]
    %v226 = vld [vmem:[%s1 + $0x660] sm:$0xff]
    %v227 = vld [vmem:[%s1 + $0x668] sm:$0xff]
    %v228 = vld [vmem:[%s1 + $0x670] sm:$0xff]
    %v229 = vld [vmem:[%s1 + $0x678] sm:$0xff]
    %v230 = vld [vmem:[%s1 + $0x680] sm:$0xff]
    %v231 = vld [vmem:[%s1 + $0x688] sm:$0xff]
    %v232 = vld [vmem:[%s1 + $0x690] sm:$0xff]
    %v233 = vld [vmem:[%s1 + $0x698] sm:$0xff]
    %v234 = vld [vmem:[%s1 + $0x6a0] sm:$0xff]
    %v235 = vld [vmem:[%s1 + $0x6a8] sm:$0xff]
    %v236 = vld [vmem:[%s1 + $0x6b0] sm:$0xff]
    %v237 = vld [vmem:[%s1 + $0x6b8] sm:$0xff]
    %v238 = vld [vmem:[%s1 + $0x6c0] sm:$0xff]
    %v239 = vld [vmem:[%s1 + $0x6c8] sm:$0xff]
    %v240 = vld [vmem:[%s1 + $0x6d0] sm:$0xff]
    %v241 = vld [vmem:[%s1 + $0x6d8] sm:$0xff]
    %v242 = vld [vmem:[%s1 + $0x6e0] sm:$0xff]
    %v243 = vld [vmem:[%s1 + $0x6e8] sm:$0xff]
    %v244 = vld [vmem:[%s1 + $0x6f0] sm:$0xff]
    %v245 = vld [vmem:[%s1 + $0x6f8] sm:$0xff]
    %v246 = vld [vmem:[%s1 + $0x700] sm:$0xff]
    %v247 = vld [vmem:[%s1 + $0x708] sm:$0xff]
    %v248 = vld [vmem:[%s1 + $0x710] sm:$0xff]
    %v249 = vld [vmem:[%s1 + $0x718] sm:$0xff]
    %v250 = vld [vmem:[%s1 + $0x720] sm:$0xff]
    %v251 = vld [vmem:[%s1 + $0x728] sm:$0xff]
    %v252 = vld [vmem:[%s1 + $0x730] sm:$0xff]
    %v253 = vld [vmem:[%s1 + $0x738] sm:$0xff]
    %v254 = vld [vmem:[%s1 + $0x740] sm:$0xff]
    %v255 = vld [vmem:[%s1 + $0x748] sm:$0xff]
    %v256 = vld [vmem:[%s1 + $0x750] sm:$0xff]
    %v257 = vld [vmem:[%s1 + $0x758] sm:$0xff]
    %v258 = vld [vmem:[%s1 + $0x760] sm:$0xff]
    %v259 = vld [vmem:[%s1 + $0x768] sm:$0xff]
    %v260 = vld [vmem:[%s1 + $0x770] sm:$0xff]
    %v261 = vld [vmem:[%s1 + $0x778] sm:$0xff]
    %v262 = vld [vmem:[%s1 + $0x780] sm:$0xff]
    %v263 = vld [vmem:[%s1 + $0x788] sm:$0xff]
    %v264 = vld [vmem:[%s1 + $0x790] sm:$0xff]
    %v265 = vld [vmem:[%s1 + $0x798] sm:$0xff]
    %v266 = vld [vmem:[%s1 + $0x7a0] sm:$0xff]
    %v267 = vld [vmem:[%s1 + $0x7a8] sm:$0xff]
    %v268 = vld [vmem:[%s1 + $0x7b0] sm:$0xff]
    %v269 = vld [vmem:[%s1 + $0x7b8] sm:$0xff]
    %v270 = vld [vmem:[%s1 + $0x7c0] sm:$0xff]
    %v271 = vld [vmem:[%s1 + $0x7c8] sm:$0xff]
    %v272 = vld [vmem:[%s1 + $0x7d0] sm:$0xff]
    %v273 = vld [vmem:[%s1 + $0x7d8] sm:$0xff]
    %v274 = vld [vmem:[%s1 + $0x7e0] sm:$0xff]
    %v275 = vld [vmem:[%s1 + $0x7e8] sm:$0xff]
    %v276 = vld [vmem:[%s1 + $0x7f0] sm:$0xff]
    %v277 = vld [vmem:[%s1 + $0x7f8] sm:$0xff]
    %v278 = vld [vmem:[%s2] sm:$0xf]
    %v280 = vperm.slane %v278, 0
    %v281 = vperm.slane %v278, 1
    %v282 = vperm.slane %v278, 2
    %v283 = vperm.slane %v278, 3
    %289 = vst [vmem:[#allocation1] ss:$9 sm:$0xff] %v21
    %v290 = vld [vmem:[#allocation1] sm:$0xff]
    %v291 = vld [vmem:[#allocation1 + $0x9] sm:$0xff]
    %v292 = vld [vmem:[#allocation1 + $0x12] sm:$0xff]
    %v293 = vld [vmem:[#allocation1 + $0x1b] sm:$0xff]
    %v294 = vld [vmem:[#allocation1 + $0x24] sm:$0xff]
    %v295 = vld [vmem:[#allocation1 + $0x2d] sm:$0xff]
    %v296 = vld [vmem:[#allocation1 + $0x36] sm:$0xff]
    %v297 = vld [vmem:[#allocation1 + $0x3f] sm:$0xff]
    %v562 = vunpack.c.l.b16 %v22
    %v563 = vunpack.c.h.b16 %v22
    %v564 = vunpack.c.l.b16 %v23
    %v565 = vunpack.c.h.b16 %v23
    %v566 = vunpack.c.l.b16 %v24
    %v567 = vunpack.c.h.b16 %v24
    %v568 = vunpack.c.l.b16 %v25
    %v569 = vunpack.c.h.b16 %v25
    %v570 = vunpack.c.l.b16 %v26
    %v571 = vunpack.c.h.b16 %v26
    %v572 = vunpack.c.l.b16 %v27
    %v573 = vunpack.c.h.b16 %v27
    %v574 = vunpack.c.l.b16 %v28
    %v575 = vunpack.c.h.b16 %v28
    %v576 = vunpack.c.l.b16 %v29
    %v577 = vunpack.c.h.b16 %v29
    %v578 = vunpack.c.l.b16 %v30
    %v579 = vunpack.c.h.b16 %v30
    %v580 = vunpack.c.l.b16 %v31
    %v581 = vunpack.c.h.b16 %v31
    %v582 = vunpack.c.l.b16 %v32
    %v583 = vunpack.c.h.b16 %v32
    %v584 = vunpack.c.l.b16 %v33
    %v585 = vunpack.c.h.b16 %v33
    %v586 = vunpack.c.l.b16 %v34
    %v587 = vunpack.c.h.b16 %v34
    %v588 = vunpack.c.l.b16 %v35
    %v589 = vunpack.c.h.b16 %v35
    %v590 = vunpack.c.l.b16 %v36
    %v591 = vunpack.c.h.b16 %v36
    %v592 = vunpack.c.l.b16 %v37
    %v593 = vunpack.c.h.b16 %v37
    %v594 = vunpack.c.l.b16 %v38
    %v595 = vunpack.c.h.b16 %v38
    %v596 = vunpack.c.l.b16 %v39
    %v597 = vunpack.c.h.b16 %v39
    %v598 = vunpack.c.l.b16 %v40
    %v599 = vunpack.c.h.b16 %v40
    %v600 = vunpack.c.l.b16 %v41
    %v601 = vunpack.c.h.b16 %v41
    %v602 = vunpack.c.l.b16 %v42
    %v603 = vunpack.c.h.b16 %v42
    %v604 = vunpack.c.l.b16 %v43
    %v605 = vunpack.c.h.b16 %v43
    %v606 = vunpack.c.l.b16 %v44
    %v607 = vunpack.c.h.b16 %v44
    %v608 = vunpack.c.l.b16 %v45
    %v609 = vunpack.c.h.b16 %v45
    %v610 = vunpack.c.l.b16 %v46
    %v611 = vunpack.c.h.b16 %v46
    %v612 = vunpack.c.l.b16 %v47
    %v613 = vunpack.c.h.b16 %v47
    %v614 = vunpack.c.l.b16 %v48
    %v615 = vunpack.c.h.b16 %v48
    %v616 = vunpack.c.l.b16 %v49
    %v617 = vunpack.c.h.b16 %v49
    %v618 = vunpack.c.l.b16 %v50
    %v619 = vunpack.c.h.b16 %v50
    %v620 = vunpack.c.l.b16 %v51
    %v621 = vunpack.c.h.b16 %v51
    %v622 = vunpack.c.l.b16 %v52
    %v623 = vunpack.c.h.b16 %v52
    %v624 = vunpack.c.l.b16 %v53
    %v625 = vunpack.c.h.b16 %v53
    %v626 = vunpack.c.l.b16 %v54
    %v627 = vunpack.c.h.b16 %v54
    %v628 = vunpack.c.l.b16 %v55
    %v629 = vunpack.c.h.b16 %v55
    %v630 = vunpack.c.l.b16 %v56
    %v631 = vunpack.c.h.b16 %v56
    %v632 = vunpack.c.l.b16 %v57
    %v633 = vunpack.c.h.b16 %v57
    %v634 = vunpack.c.l.b16 %v58
    %v635 = vunpack.c.h.b16 %v58
    %v636 = vunpack.c.l.b16 %v59
    %v637 = vunpack.c.h.b16 %v59
    %v638 = vunpack.c.l.b16 %v60
    %v639 = vunpack.c.h.b16 %v60
    %v640 = vunpack.c.l.b16 %v61
    %v641 = vunpack.c.h.b16 %v61
    %v642 = vunpack.c.l.b16 %v62
    %v643 = vunpack.c.h.b16 %v62
    %v644 = vunpack.c.l.b16 %v63
    %v645 = vunpack.c.h.b16 %v63
    %v646 = vunpack.c.l.b16 %v64
    %v647 = vunpack.c.h.b16 %v64
    %v648 = vunpack.c.l.b16 %v65
    %v649 = vunpack.c.h.b16 %v65
    %v650 = vunpack.c.l.b16 %v66
    %v651 = vunpack.c.h.b16 %v66
    %v652 = vunpack.c.l.b16 %v67
    %v653 = vunpack.c.h.b16 %v67
    %v654 = vunpack.c.l.b16 %v68
    %v655 = vunpack.c.h.b16 %v68
    %v656 = vunpack.c.l.b16 %v69
    %v657 = vunpack.c.h.b16 %v69
    %v658 = vunpack.c.l.b16 %v70
    %v659 = vunpack.c.h.b16 %v70
    %v660 = vunpack.c.l.b16 %v71
    %v661 = vunpack.c.h.b16 %v71
    %v662 = vunpack.c.l.b16 %v72
    %v663 = vunpack.c.h.b16 %v72
    %v664 = vunpack.c.l.b16 %v73
    %v665 = vunpack.c.h.b16 %v73
    %v666 = vunpack.c.l.b16 %v74
    %v667 = vunpack.c.h.b16 %v74
    %v668 = vunpack.c.l.b16 %v75
    %v669 = vunpack.c.h.b16 %v75
    %v670 = vunpack.c.l.b16 %v76
    %v671 = vunpack.c.h.b16 %v76
    %v672 = vunpack.c.l.b16 %v77
    %v673 = vunpack.c.h.b16 %v77
    %v674 = vunpack.c.l.b16 %v78
    %v675 = vunpack.c.h.b16 %v78
    %v676 = vunpack.c.l.b16 %v79
    %v677 = vunpack.c.h.b16 %v79
    %v678 = vunpack.c.l.b16 %v80
    %v679 = vunpack.c.h.b16 %v80
    %v680 = vunpack.c.l.b16 %v81
    %v681 = vunpack.c.h.b16 %v81
    %v682 = vunpack.c.l.b16 %v82
    %v683 = vunpack.c.h.b16 %v82
    %v684 = vunpack.c.l.b16 %v83
    %v685 = vunpack.c.h.b16 %v83
    %v686 = vunpack.c.l.b16 %v84
    %v687 = vunpack.c.h.b16 %v84
    %v688 = vunpack.c.l.b16 %v85
    %v689 = vunpack.c.h.b16 %v85
    %v690 = vunpack.c.l.b16 %v86
    %v691 = vunpack.c.h.b16 %v86
    %v692 = vunpack.c.l.b16 %v87
    %v693 = vunpack.c.h.b16 %v87
    %v694 = vunpack.c.l.b16 %v88
    %v695 = vunpack.c.h.b16 %v88
    %v696 = vunpack.c.l.b16 %v89
    %v697 = vunpack.c.h.b16 %v89
    %v698 = vunpack.c.l.b16 %v90
    %v699 = vunpack.c.h.b16 %v90
    %v700 = vunpack.c.l.b16 %v91
    %v701 = vunpack.c.h.b16 %v91
    %v702 = vunpack.c.l.b16 %v92
    %v703 = vunpack.c.h.b16 %v92
    %v704 = vunpack.c.l.b16 %v93
    %v705 = vunpack.c.h.b16 %v93
    %v706 = vunpack.c.l.b16 %v94
    %v707 = vunpack.c.h.b16 %v94
    %v708 = vunpack.c.l.b16 %v95
    %v709 = vunpack.c.h.b16 %v95
    %v710 = vunpack.c.l.b16 %v96
    %v711 = vunpack.c.h.b16 %v96
    %v712 = vunpack.c.l.b16 %v97
    %v713 = vunpack.c.h.b16 %v97
    %v714 = vunpack.c.l.b16 %v98
    %v715 = vunpack.c.h.b16 %v98
    %v716 = vunpack.c.l.b16 %v99
    %v717 = vunpack.c.h.b16 %v99
    %v718 = vunpack.c.l.b16 %v100
    %v719 = vunpack.c.h.b16 %v100
    %v720 = vunpack.c.l.b16 %v101
    %v721 = vunpack.c.h.b16 %v101
    %v722 = vunpack.c.l.b16 %v102
    %v723 = vunpack.c.h.b16 %v102
    %v724 = vunpack.c.l.b16 %v103
    %v725 = vunpack.c.h.b16 %v103
    %v726 = vunpack.c.l.b16 %v104
    %v727 = vunpack.c.h.b16 %v104
    %v728 = vunpack.c.l.b16 %v105
    %v729 = vunpack.c.h.b16 %v105
    %v730 = vunpack.c.l.b16 %v106
    %v731 = vunpack.c.h.b16 %v106
    %v732 = vunpack.c.l.b16 %v107
    %v733 = vunpack.c.h.b16 %v107
    %v734 = vunpack.c.l.b16 %v108
    %v735 = vunpack.c.h.b16 %v108
    %v736 = vunpack.c.l.b16 %v109
    %v737 = vunpack.c.h.b16 %v109
    %v738 = vunpack.c.l.b16 %v110
    %v739 = vunpack.c.h.b16 %v110
    %v740 = vunpack.c.l.b16 %v111
    %v741 = vunpack.c.h.b16 %v111
    %v742 = vunpack.c.l.b16 %v112
    %v743 = vunpack.c.h.b16 %v112
    %v744 = vunpack.c.l.b16 %v113
    %v745 = vunpack.c.h.b16 %v113
    %v746 = vunpack.c.l.b16 %v114
    %v747 = vunpack.c.h.b16 %v114
    %v748 = vunpack.c.l.b16 %v115
    %v749 = vunpack.c.h.b16 %v115
    %v750 = vunpack.c.l.b16 %v116
    %v751 = vunpack.c.h.b16 %v116
    %v752 = vunpack.c.l.b16 %v117
    %v753 = vunpack.c.h.b16 %v117
    %v754 = vunpack.c.l.b16 %v118
    %v755 = vunpack.c.h.b16 %v118
    %v756 = vunpack.c.l.b16 %v119
    %v757 = vunpack.c.h.b16 %v119
    %v758 = vunpack.c.l.b16 %v120
    %v759 = vunpack.c.h.b16 %v120
    %v760 = vunpack.c.l.b16 %v121
    %v761 = vunpack.c.h.b16 %v121
    %v762 = vunpack.c.l.b16 %v122
    %v763 = vunpack.c.h.b16 %v122
    %v764 = vunpack.c.l.b16 %v123
    %v765 = vunpack.c.h.b16 %v123
    %v766 = vunpack.c.l.b16 %v124
    %v767 = vunpack.c.h.b16 %v124
    %v768 = vunpack.c.l.b16 %v125
    %v769 = vunpack.c.h.b16 %v125
    %v770 = vunpack.c.l.b16 %v126
    %v771 = vunpack.c.h.b16 %v126
    %v772 = vunpack.c.l.b16 %v127
    %v773 = vunpack.c.h.b16 %v127
    %v774 = vunpack.c.l.b16 %v128
    %v775 = vunpack.c.h.b16 %v128
    %v776 = vunpack.c.l.b16 %v129
    %v777 = vunpack.c.h.b16 %v129
    %v778 = vunpack.c.l.b16 %v130
    %v779 = vunpack.c.h.b16 %v130
    %v780 = vunpack.c.l.b16 %v131
    %v781 = vunpack.c.h.b16 %v131
    %v782 = vunpack.c.l.b16 %v132
    %v783 = vunpack.c.h.b16 %v132
    %v784 = vunpack.c.l.b16 %v133
    %v785 = vunpack.c.h.b16 %v133
    %v786 = vunpack.c.l.b16 %v134
    %v787 = vunpack.c.h.b16 %v134
    %v788 = vunpack.c.l.b16 %v135
    %v789 = vunpack.c.h.b16 %v135
    %v790 = vunpack.c.l.b16 %v136
    %v791 = vunpack.c.h.b16 %v136
    %v792 = vunpack.c.l.b16 %v137
    %v793 = vunpack.c.h.b16 %v137
    %v794 = vunpack.c.l.b16 %v138
    %v795 = vunpack.c.h.b16 %v138
    %v796 = vunpack.c.l.b16 %v139
    %v797 = vunpack.c.h.b16 %v139
    %v798 = vunpack.c.l.b16 %v140
    %v799 = vunpack.c.h.b16 %v140
    %v800 = vunpack.c.l.b16 %v141
    %v801 = vunpack.c.h.b16 %v141
    %v802 = vunpack.c.l.b16 %v142
    %v803 = vunpack.c.h.b16 %v142
    %v804 = vunpack.c.l.b16 %v143
    %v805 = vunpack.c.h.b16 %v143
    %v806 = vunpack.c.l.b16 %v144
    %v807 = vunpack.c.h.b16 %v144
    %v808 = vunpack.c.l.b16 %v145
    %v809 = vunpack.c.h.b16 %v145
    %v810 = vunpack.c.l.b16 %v146
    %v811 = vunpack.c.h.b16 %v146
    %v812 = vunpack.c.l.b16 %v147
    %v813 = vunpack.c.h.b16 %v147
    %v814 = vunpack.c.l.b16 %v148
    %v815 = vunpack.c.h.b16 %v148
    %v816 = vunpack.c.l.b16 %v149
    %v817 = vunpack.c.h.b16 %v149
    %v818 = vunpack.c.l.b16 %v150
    %v819 = vunpack.c.h.b16 %v150
    %v820 = vunpack.c.l.b16 %v151
    %v821 = vunpack.c.h.b16 %v151
    %v822 = vunpack.c.l.b16 %v152
    %v823 = vunpack.c.h.b16 %v152
    %v824 = vunpack.c.l.b16 %v153
    %v825 = vunpack.c.h.b16 %v153
    %v826 = vunpack.c.l.b16 %v154
    %v827 = vunpack.c.h.b16 %v154
    %v828 = vunpack.c.l.b16 %v155
    %v829 = vunpack.c.h.b16 %v155
    %v830 = vunpack.c.l.b16 %v156
    %v831 = vunpack.c.h.b16 %v156
    %v832 = vunpack.c.l.b16 %v157
    %v833 = vunpack.c.h.b16 %v157
    %v834 = vunpack.c.l.b16 %v158
    %v835 = vunpack.c.h.b16 %v158
    %v836 = vunpack.c.l.b16 %v159
    %v837 = vunpack.c.h.b16 %v159
    %v838 = vunpack.c.l.b16 %v160
    %v839 = vunpack.c.h.b16 %v160
    %v840 = vunpack.c.l.b16 %v161
    %v841 = vunpack.c.h.b16 %v161
    %v842 = vunpack.c.l.b16 %v162
    %v843 = vunpack.c.h.b16 %v162
    %v844 = vunpack.c.l.b16 %v163
    %v845 = vunpack.c.h.b16 %v163
    %v846 = vunpack.c.l.b16 %v164
    %v847 = vunpack.c.h.b16 %v164
    %v848 = vunpack.c.l.b16 %v165
    %v849 = vunpack.c.h.b16 %v165
    %v850 = vunpack.c.l.b16 %v166
    %v851 = vunpack.c.h.b16 %v166
    %v852 = vunpack.c.l.b16 %v167
    %v853 = vunpack.c.h.b16 %v167
    %v854 = vunpack.c.l.b16 %v168
    %v855 = vunpack.c.h.b16 %v168
    %v856 = vunpack.c.l.b16 %v169
    %v857 = vunpack.c.h.b16 %v169
    %v858 = vunpack.c.l.b16 %v170
    %v859 = vunpack.c.h.b16 %v170
    %v860 = vunpack.c.l.b16 %v171
    %v861 = vunpack.c.h.b16 %v171
    %v862 = vunpack.c.l.b16 %v172
    %v863 = vunpack.c.h.b16 %v172
    %v864 = vunpack.c.l.b16 %v173
    %v865 = vunpack.c.h.b16 %v173
    %v866 = vunpack.c.l.b16 %v174
    %v867 = vunpack.c.h.b16 %v174
    %v868 = vunpack.c.l.b16 %v175
    %v869 = vunpack.c.h.b16 %v175
    %v870 = vunpack.c.l.b16 %v176
    %v871 = vunpack.c.h.b16 %v176
    %v872 = vunpack.c.l.b16 %v177
    %v873 = vunpack.c.h.b16 %v177
    %v874 = vunpack.c.l.b16 %v178
    %v875 = vunpack.c.h.b16 %v178
    %v876 = vunpack.c.l.b16 %v179
    %v877 = vunpack.c.h.b16 %v179
    %v878 = vunpack.c.l.b16 %v180
    %v879 = vunpack.c.h.b16 %v180
    %v880 = vunpack.c.l.b16 %v181
    %v881 = vunpack.c.h.b16 %v181
    %v882 = vunpack.c.l.b16 %v182
    %v883 = vunpack.c.h.b16 %v182
    %v884 = vunpack.c.l.b16 %v183
    %v885 = vunpack.c.h.b16 %v183
    %v886 = vunpack.c.l.b16 %v184
    %v887 = vunpack.c.h.b16 %v184
    %v888 = vunpack.c.l.b16 %v185
    %v889 = vunpack.c.h.b16 %v185
    %v890 = vunpack.c.l.b16 %v186
    %v891 = vunpack.c.h.b16 %v186
    %v892 = vunpack.c.l.b16 %v187
    %v893 = vunpack.c.h.b16 %v187
    %v894 = vunpack.c.l.b16 %v188
    %v895 = vunpack.c.h.b16 %v188
    %v896 = vunpack.c.l.b16 %v189
    %v897 = vunpack.c.h.b16 %v189
    %v898 = vunpack.c.l.b16 %v190
    %v899 = vunpack.c.h.b16 %v190
    %v900 = vunpack.c.l.b16 %v191
    %v901 = vunpack.c.h.b16 %v191
    %v902 = vunpack.c.l.b16 %v192
    %v903 = vunpack.c.h.b16 %v192
    %v904 = vunpack.c.l.b16 %v193
    %v905 = vunpack.c.h.b16 %v193
    %v906 = vunpack.c.l.b16 %v194
    %v907 = vunpack.c.h.b16 %v194
    %v908 = vunpack.c.l.b16 %v195
    %v909 = vunpack.c.h.b16 %v195
    %v910 = vunpack.c.l.b16 %v196
    %v911 = vunpack.c.h.b16 %v196
    %v912 = vunpack.c.l.b16 %v197
    %v913 = vunpack.c.h.b16 %v197
    %v914 = vunpack.c.l.b16 %v198
    %v915 = vunpack.c.h.b16 %v198
    %v916 = vunpack.c.l.b16 %v199
    %v917 = vunpack.c.h.b16 %v199
    %v918 = vunpack.c.l.b16 %v200
    %v919 = vunpack.c.h.b16 %v200
    %v920 = vunpack.c.l.b16 %v201
    %v921 = vunpack.c.h.b16 %v201
    %v922 = vunpack.c.l.b16 %v202
    %v923 = vunpack.c.h.b16 %v202
    %v924 = vunpack.c.l.b16 %v203
    %v925 = vunpack.c.h.b16 %v203
    %v926 = vunpack.c.l.b16 %v204
    %v927 = vunpack.c.h.b16 %v204
    %v928 = vunpack.c.l.b16 %v205
    %v929 = vunpack.c.h.b16 %v205
    %v930 = vunpack.c.l.b16 %v206
    %v931 = vunpack.c.h.b16 %v206
    %v932 = vunpack.c.l.b16 %v207
    %v933 = vunpack.c.h.b16 %v207
    %v934 = vunpack.c.l.b16 %v208
    %v935 = vunpack.c.h.b16 %v208
    %v936 = vunpack.c.l.b16 %v209
    %v937 = vunpack.c.h.b16 %v209
    %v938 = vunpack.c.l.b16 %v210
    %v939 = vunpack.c.h.b16 %v210
    %v940 = vunpack.c.l.b16 %v211
    %v941 = vunpack.c.h.b16 %v211
    %v942 = vunpack.c.l.b16 %v212
    %v943 = vunpack.c.h.b16 %v212
    %v944 = vunpack.c.l.b16 %v213
    %v945 = vunpack.c.h.b16 %v213
    %v946 = vunpack.c.l.b16 %v214
    %v947 = vunpack.c.h.b16 %v214
    %v948 = vunpack.c.l.b16 %v215
    %v949 = vunpack.c.h.b16 %v215
    %v950 = vunpack.c.l.b16 %v216
    %v951 = vunpack.c.h.b16 %v216
    %v952 = vunpack.c.l.b16 %v217
    %v953 = vunpack.c.h.b16 %v217
    %v954 = vunpack.c.l.b16 %v218
    %v955 = vunpack.c.h.b16 %v218
    %v956 = vunpack.c.l.b16 %v219
    %v957 = vunpack.c.h.b16 %v219
    %v958 = vunpack.c.l.b16 %v220
    %v959 = vunpack.c.h.b16 %v220
    %v960 = vunpack.c.l.b16 %v221
    %v961 = vunpack.c.h.b16 %v221
    %v962 = vunpack.c.l.b16 %v222
    %v963 = vunpack.c.h.b16 %v222
    %v964 = vunpack.c.l.b16 %v223
    %v965 = vunpack.c.h.b16 %v223
    %v966 = vunpack.c.l.b16 %v224
    %v967 = vunpack.c.h.b16 %v224
    %v968 = vunpack.c.l.b16 %v225
    %v969 = vunpack.c.h.b16 %v225
    %v970 = vunpack.c.l.b16 %v226
    %v971 = vunpack.c.h.b16 %v226
    %v972 = vunpack.c.l.b16 %v227
    %v973 = vunpack.c.h.b16 %v227
    %v974 = vunpack.c.l.b16 %v228
    %v975 = vunpack.c.h.b16 %v228
    %v976 = vunpack.c.l.b16 %v229
    %v977 = vunpack.c.h.b16 %v229
    %v978 = vunpack.c.l.b16 %v230
    %v979 = vunpack.c.h.b16 %v230
    %v980 = vunpack.c.l.b16 %v231
    %v981 = vunpack.c.h.b16 %v231
    %v982 = vunpack.c.l.b16 %v232
    %v983 = vunpack.c.h.b16 %v232
    %v984 = vunpack.c.l.b16 %v233
    %v985 = vunpack.c.h.b16 %v233
    %v986 = vunpack.c.l.b16 %v234
    %v987 = vunpack.c.h.b16 %v234
    %v988 = vunpack.c.l.b16 %v235
    %v989 = vunpack.c.h.b16 %v235
    %v990 = vunpack.c.l.b16 %v236
    %v991 = vunpack.c.h.b16 %v236
    %v992 = vunpack.c.l.b16 %v237
    %v993 = vunpack.c.h.b16 %v237
    %v994 = vunpack.c.l.b16 %v238
    %v995 = vunpack.c.h.b16 %v238
    %v996 = vunpack.c.l.b16 %v239
    %v997 = vunpack.c.h.b16 %v239
    %v998 = vunpack.c.l.b16 %v240
    %v999 = vunpack.c.h.b16 %v240
    %v1000 = vunpack.c.l.b16 %v241
    %v1001 = vunpack.c.h.b16 %v241
    %v1002 = vunpack.c.l.b16 %v242
    %v1003 = vunpack.c.h.b16 %v242
    %v1004 = vunpack.c.l.b16 %v243
    %v1005 = vunpack.c.h.b16 %v243
    %v1006 = vunpack.c.l.b16 %v244
    %v1007 = vunpack.c.h.b16 %v244
    %v1008 = vunpack.c.l.b16 %v245
    %v1009 = vunpack.c.h.b16 %v245
    %v1010 = vunpack.c.l.b16 %v246
    %v1011 = vunpack.c.h.b16 %v246
    %v1012 = vunpack.c.l.b16 %v247
    %v1013 = vunpack.c.h.b16 %v247
    %v1014 = vunpack.c.l.b16 %v248
    %v1015 = vunpack.c.h.b16 %v248
    %v1016 = vunpack.c.l.b16 %v249
    %v1017 = vunpack.c.h.b16 %v249
    %v1018 = vunpack.c.l.b16 %v250
    %v1019 = vunpack.c.h.b16 %v250
    %v1020 = vunpack.c.l.b16 %v251
    %v1021 = vunpack.c.h.b16 %v251
    %v1022 = vunpack.c.l.b16 %v252
    %v1023 = vunpack.c.h.b16 %v252
    %v1024 = vunpack.c.l.b16 %v253
    %v1025 = vunpack.c.h.b16 %v253
    %v1026 = vunpack.c.l.b16 %v254
    %v1027 = vunpack.c.h.b16 %v254
    %v1028 = vunpack.c.l.b16 %v255
    %v1029 = vunpack.c.h.b16 %v255
    %v1030 = vunpack.c.l.b16 %v256
    %v1031 = vunpack.c.h.b16 %v256
    %v1032 = vunpack.c.l.b16 %v257
    %v1033 = vunpack.c.h.b16 %v257
    %v1034 = vunpack.c.l.b16 %v258
    %v1035 = vunpack.c.h.b16 %v258
    %v1036 = vunpack.c.l.b16 %v259
    %v1037 = vunpack.c.h.b16 %v259
    %v1038 = vunpack.c.l.b16 %v260
    %v1039 = vunpack.c.h.b16 %v260
    %v1040 = vunpack.c.l.b16 %v261
    %v1041 = vunpack.c.h.b16 %v261
    %v1042 = vunpack.c.l.b16 %v262
    %v1043 = vunpack.c.h.b16 %v262
    %v1044 = vunpack.c.l.b16 %v263
    %v1045 = vunpack.c.h.b16 %v263
    %v1046 = vunpack.c.l.b16 %v264
    %v1047 = vunpack.c.h.b16 %v264
    %v1048 = vunpack.c.l.b16 %v265
    %v1049 = vunpack.c.h.b16 %v265
    %v1050 = vunpack.c.l.b16 %v266
    %v1051 = vunpack.c.h.b16 %v266
    %v1052 = vunpack.c.l.b16 %v267
    %v1053 = vunpack.c.h.b16 %v267
    %v1054 = vunpack.c.l.b16 %v268
    %v1055 = vunpack.c.h.b16 %v268
    %v1056 = vunpack.c.l.b16 %v269
    %v1057 = vunpack.c.h.b16 %v269
    %v1058 = vunpack.c.l.b16 %v270
    %v1059 = vunpack.c.h.b16 %v270
    %v1060 = vunpack.c.l.b16 %v271
    %v1061 = vunpack.c.h.b16 %v271
    %v1062 = vunpack.c.l.b16 %v272
    %v1063 = vunpack.c.h.b16 %v272
    %v1064 = vunpack.c.l.b16 %v273
    %v1065 = vunpack.c.h.b16 %v273
    %v1066 = vunpack.c.l.b16 %v274
    %v1067 = vunpack.c.h.b16 %v274
    %v1068 = vunpack.c.l.b16 %v275
    %v1069 = vunpack.c.h.b16 %v275
    %v1070 = vunpack.c.l.b16 %v276
    %v1071 = vunpack.c.h.b16 %v276
    %v1072 = vunpack.c.l.b16 %v277
    %v1073 = vunpack.c.h.b16 %v277
    %v1074 = vpack.c.b16 %v566, %v562
    %v1075 = vpack.c.b16 %v567, %v563
    %v1076 = vpack.c.b16 %v568, %v564
    %v1077 = vpack.c.b16 %v569, %v565
    %v1078 = vpack.c.b16 %v574, %v570
    %v1079 = vpack.c.b16 %v575, %v571
    %v1080 = vpack.c.b16 %v576, %v572
    %v1081 = vpack.c.b16 %v577, %v573
    %v1082 = vpack.c.b16 %v582, %v578
    %v1083 = vpack.c.b16 %v583, %v579
    %v1084 = vpack.c.b16 %v584, %v580
    %v1085 = vpack.c.b16 %v585, %v581
    %v1086 = vpack.c.b16 %v590, %v586
    %v1087 = vpack.c.b16 %v591, %v587
    %v1088 = vpack.c.b16 %v592, %v588
    %v1089 = vpack.c.b16 %v593, %v589
    %v1090 = vpack.c.b16 %v598, %v594
    %v1091 = vpack.c.b16 %v599, %v595
    %v1092 = vpack.c.b16 %v600, %v596
    %v1093 = vpack.c.b16 %v601, %v597
    %v1094 = vpack.c.b16 %v606, %v602
    %v1095 = vpack.c.b16 %v607, %v603
    %v1096 = vpack.c.b16 %v608, %v604
    %v1097 = vpack.c.b16 %v609, %v605
    %v1098 = vpack.c.b16 %v614, %v610
    %v1099 = vpack.c.b16 %v615, %v611
    %v1100 = vpack.c.b16 %v616, %v612
    %v1101 = vpack.c.b16 %v617, %v613
    %v1102 = vpack.c.b16 %v622, %v618
    %v1103 = vpack.c.b16 %v623, %v619
    %v1104 = vpack.c.b16 %v624, %v620
    %v1105 = vpack.c.b16 %v625, %v621
    %v1106 = vpack.c.b16 %v630, %v626
    %v1107 = vpack.c.b16 %v631, %v627
    %v1108 = vpack.c.b16 %v632, %v628
    %v1109 = vpack.c.b16 %v633, %v629
    %v1110 = vpack.c.b16 %v638, %v634
    %v1111 = vpack.c.b16 %v639, %v635
    %v1112 = vpack.c.b16 %v640, %v636
    %v1113 = vpack.c.b16 %v641, %v637
    %v1114 = vpack.c.b16 %v646, %v642
    %v1115 = vpack.c.b16 %v647, %v643
    %v1116 = vpack.c.b16 %v648, %v644
    %v1117 = vpack.c.b16 %v649, %v645
    %v1118 = vpack.c.b16 %v654, %v650
    %v1119 = vpack.c.b16 %v655, %v651
    %v1120 = vpack.c.b16 %v656, %v652
    %v1121 = vpack.c.b16 %v657, %v653
    %v1122 = vpack.c.b16 %v662, %v658
    %v1123 = vpack.c.b16 %v663, %v659
    %v1124 = vpack.c.b16 %v664, %v660
    %v1125 = vpack.c.b16 %v665, %v661
    %v1126 = vpack.c.b16 %v670, %v666
    %v1127 = vpack.c.b16 %v671, %v667
    %v1128 = vpack.c.b16 %v672, %v668
    %v1129 = vpack.c.b16 %v673, %v669
    %v1130 = vpack.c.b16 %v678, %v674
    %v1131 = vpack.c.b16 %v679, %v675
    %v1132 = vpack.c.b16 %v680, %v676
    %v1133 = vpack.c.b16 %v681, %v677
    %v1134 = vpack.c.b16 %v686, %v682
    %v1135 = vpack.c.b16 %v687, %v683
    %v1136 = vpack.c.b16 %v688, %v684
    %v1137 = vpack.c.b16 %v689, %v685
    %v1138 = vpack.c.b16 %v694, %v690
    %v1139 = vpack.c.b16 %v695, %v691
    %v1140 = vpack.c.b16 %v696, %v692
    %v1141 = vpack.c.b16 %v697, %v693
    %v1142 = vpack.c.b16 %v702, %v698
    %v1143 = vpack.c.b16 %v703, %v699
    %v1144 = vpack.c.b16 %v704, %v700
    %v1145 = vpack.c.b16 %v705, %v701
    %v1146 = vpack.c.b16 %v710, %v706
    %v1147 = vpack.c.b16 %v711, %v707
    %v1148 = vpack.c.b16 %v712, %v708
    %v1149 = vpack.c.b16 %v713, %v709
    %v1150 = vpack.c.b16 %v718, %v714
    %v1151 = vpack.c.b16 %v719, %v715
    %v1152 = vpack.c.b16 %v720, %v716
    %v1153 = vpack.c.b16 %v721, %v717
    %v1154 = vpack.c.b16 %v726, %v722
    %v1155 = vpack.c.b16 %v727, %v723
    %v1156 = vpack.c.b16 %v728, %v724
    %v1157 = vpack.c.b16 %v729, %v725
    %v1158 = vpack.c.b16 %v734, %v730
    %v1159 = vpack.c.b16 %v735, %v731
    %v1160 = vpack.c.b16 %v736, %v732
    %v1161 = vpack.c.b16 %v737, %v733
    %v1162 = vpack.c.b16 %v742, %v738
    %v1163 = vpack.c.b16 %v743, %v739
    %v1164 = vpack.c.b16 %v744, %v740
    %v1165 = vpack.c.b16 %v745, %v741
    %v1166 = vpack.c.b16 %v750, %v746
    %v1167 = vpack.c.b16 %v751, %v747
    %v1168 = vpack.c.b16 %v752, %v748
    %v1169 = vpack.c.b16 %v753, %v749
    %v1170 = vpack.c.b16 %v758, %v754
    %v1171 = vpack.c.b16 %v759, %v755
    %v1172 = vpack.c.b16 %v760, %v756
    %v1173 = vpack.c.b16 %v761, %v757
    %v1174 = vpack.c.b16 %v766, %v762
    %v1175 = vpack.c.b16 %v767, %v763
    %v1176 = vpack.c.b16 %v768, %v764
    %v1177 = vpack.c.b16 %v769, %v765
    %v1178 = vpack.c.b16 %v774, %v770
    %v1179 = vpack.c.b16 %v775, %v771
    %v1180 = vpack.c.b16 %v776, %v772
    %v1181 = vpack.c.b16 %v777, %v773
    %v1182 = vpack.c.b16 %v782, %v778
    %v1183 = vpack.c.b16 %v783, %v779
    %v1184 = vpack.c.b16 %v784, %v780
    %v1185 = vpack.c.b16 %v785, %v781
    %v1186 = vpack.c.b16 %v790, %v786
    %v1187 = vpack.c.b16 %v791, %v787
    %v1188 = vpack.c.b16 %v792, %v788
    %v1189 = vpack.c.b16 %v793, %v789
    %v1190 = vpack.c.b16 %v798, %v794
    %v1191 = vpack.c.b16 %v799, %v795
    %v1192 = vpack.c.b16 %v800, %v796
    %v1193 = vpack.c.b16 %v801, %v797
    %v1194 = vpack.c.b16 %v806, %v802
    %v1195 = vpack.c.b16 %v807, %v803
    %v1196 = vpack.c.b16 %v808, %v804
    %v1197 = vpack.c.b16 %v809, %v805
    %v1198 = vpack.c.b16 %v814, %v810
    %v1199 = vpack.c.b16 %v815, %v811
    %v1200 = vpack.c.b16 %v816, %v812
    %v1201 = vpack.c.b16 %v817, %v813
    %v1202 = vpack.c.b16 %v822, %v818
    %v1203 = vpack.c.b16 %v823, %v819
    %v1204 = vpack.c.b16 %v824, %v820
    %v1205 = vpack.c.b16 %v825, %v821
    %v1206 = vpack.c.b16 %v830, %v826
    %v1207 = vpack.c.b16 %v831, %v827
    %v1208 = vpack.c.b16 %v832, %v828
    %v1209 = vpack.c.b16 %v833, %v829
    %v1210 = vpack.c.b16 %v838, %v834
    %v1211 = vpack.c.b16 %v839, %v835
    %v1212 = vpack.c.b16 %v840, %v836
    %v1213 = vpack.c.b16 %v841, %v837
    %v1214 = vpack.c.b16 %v846, %v842
    %v1215 = vpack.c.b16 %v847, %v843
    %v1216 = vpack.c.b16 %v848, %v844
    %v1217 = vpack.c.b16 %v849, %v845
    %v1218 = vpack.c.b16 %v854, %v850
    %v1219 = vpack.c.b16 %v855, %v851
    %v1220 = vpack.c.b16 %v856, %v852
    %v1221 = vpack.c.b16 %v857, %v853
    %v1222 = vpack.c.b16 %v862, %v858
    %v1223 = vpack.c.b16 %v863, %v859
    %v1224 = vpack.c.b16 %v864, %v860
    %v1225 = vpack.c.b16 %v865, %v861
    %v1226 = vpack.c.b16 %v870, %v866
    %v1227 = vpack.c.b16 %v871, %v867
    %v1228 = vpack.c.b16 %v872, %v868
    %v1229 = vpack.c.b16 %v873, %v869
    %v1230 = vpack.c.b16 %v878, %v874
    %v1231 = vpack.c.b16 %v879, %v875
    %v1232 = vpack.c.b16 %v880, %v876
    %v1233 = vpack.c.b16 %v881, %v877
    %v1234 = vpack.c.b16 %v886, %v882
    %v1235 = vpack.c.b16 %v887, %v883
    %v1236 = vpack.c.b16 %v888, %v884
    %v1237 = vpack.c.b16 %v889, %v885
    %v1238 = vpack.c.b16 %v894, %v890
    %v1239 = vpack.c.b16 %v895, %v891
    %v1240 = vpack.c.b16 %v896, %v892
    %v1241 = vpack.c.b16 %v897, %v893
    %v1242 = vpack.c.b16 %v902, %v898
    %v1243 = vpack.c.b16 %v903, %v899
    %v1244 = vpack.c.b16 %v904, %v900
    %v1245 = vpack.c.b16 %v905, %v901
    %v1246 = vpack.c.b16 %v910, %v906
    %v1247 = vpack.c.b16 %v911, %v907
    %v1248 = vpack.c.b16 %v912, %v908
    %v1249 = vpack.c.b16 %v913, %v909
    %v1250 = vpack.c.b16 %v918, %v914
    %v1251 = vpack.c.b16 %v919, %v915
    %v1252 = vpack.c.b16 %v920, %v916
    %v1253 = vpack.c.b16 %v921, %v917
    %v1254 = vpack.c.b16 %v926, %v922
    %v1255 = vpack.c.b16 %v927, %v923
    %v1256 = vpack.c.b16 %v928, %v924
    %v1257 = vpack.c.b16 %v929, %v925
    %v1258 = vpack.c.b16 %v934, %v930
    %v1259 = vpack.c.b16 %v935, %v931
    %v1260 = vpack.c.b16 %v936, %v932
    %v1261 = vpack.c.b16 %v937, %v933
    %v1262 = vpack.c.b16 %v942, %v938
    %v1263 = vpack.c.b16 %v943, %v939
    %v1264 = vpack.c.b16 %v944, %v940
    %v1265 = vpack.c.b16 %v945, %v941
    %v1266 = vpack.c.b16 %v950, %v946
    %v1267 = vpack.c.b16 %v951, %v947
    %v1268 = vpack.c.b16 %v952, %v948
    %v1269 = vpack.c.b16 %v953, %v949
    %v1270 = vpack.c.b16 %v958, %v954
    %v1271 = vpack.c.b16 %v959, %v955
    %v1272 = vpack.c.b16 %v960, %v956
    %v1273 = vpack.c.b16 %v961, %v957
    %v1274 = vpack.c.b16 %v966, %v962
    %v1275 = vpack.c.b16 %v967, %v963
    %v1276 = vpack.c.b16 %v968, %v964
    %v1277 = vpack.c.b16 %v969, %v965
    %v1278 = vpack.c.b16 %v974, %v970
    %v1279 = vpack.c.b16 %v975, %v971
    %v1280 = vpack.c.b16 %v976, %v972
    %v1281 = vpack.c.b16 %v977, %v973
    %v1282 = vpack.c.b16 %v982, %v978
    %v1283 = vpack.c.b16 %v983, %v979
    %v1284 = vpack.c.b16 %v984, %v980
    %v1285 = vpack.c.b16 %v985, %v981
    %v1286 = vpack.c.b16 %v990, %v986
    %v1287 = vpack.c.b16 %v991, %v987
    %v1288 = vpack.c.b16 %v992, %v988
    %v1289 = vpack.c.b16 %v993, %v989
    %v1290 = vpack.c.b16 %v998, %v994
    %v1291 = vpack.c.b16 %v999, %v995
    %v1292 = vpack.c.b16 %v1000, %v996
    %v1293 = vpack.c.b16 %v1001, %v997
    %v1294 = vpack.c.b16 %v1006, %v1002
    %v1295 = vpack.c.b16 %v1007, %v1003
    %v1296 = vpack.c.b16 %v1008, %v1004
    %v1297 = vpack.c.b16 %v1009, %v1005
    %v1298 = vpack.c.b16 %v1014, %v1010
    %v1299 = vpack.c.b16 %v1015, %v1011
    %v1300 = vpack.c.b16 %v1016, %v1012
    %v1301 = vpack.c.b16 %v1017, %v1013
    %v1302 = vpack.c.b16 %v1022, %v1018
    %v1303 = vpack.c.b16 %v1023, %v1019
    %v1304 = vpack.c.b16 %v1024, %v1020
    %v1305 = vpack.c.b16 %v1025, %v1021
    %v1306 = vpack.c.b16 %v1030, %v1026
    %v1307 = vpack.c.b16 %v1031, %v1027
    %v1308 = vpack.c.b16 %v1032, %v1028
    %v1309 = vpack.c.b16 %v1033, %v1029
    %v1310 = vpack.c.b16 %v1038, %v1034
    %v1311 = vpack.c.b16 %v1039, %v1035
    %v1312 = vpack.c.b16 %v1040, %v1036
    %v1313 = vpack.c.b16 %v1041, %v1037
    %v1314 = vpack.c.b16 %v1046, %v1042
    %v1315 = vpack.c.b16 %v1047, %v1043
    %v1316 = vpack.c.b16 %v1048, %v1044
    %v1317 = vpack.c.b16 %v1049, %v1045
    %v1318 = vpack.c.b16 %v1054, %v1050
    %v1319 = vpack.c.b16 %v1055, %v1051
    %v1320 = vpack.c.b16 %v1056, %v1052
    %v1321 = vpack.c.b16 %v1057, %v1053
    %v1322 = vpack.c.b16 %v1062, %v1058
    %v1323 = vpack.c.b16 %v1063, %v1059
    %v1324 = vpack.c.b16 %v1064, %v1060
    %v1325 = vpack.c.b16 %v1065, %v1061
    %v1326 = vpack.c.b16 %v1070, %v1066
    %v1327 = vpack.c.b16 %v1071, %v1067
    %v1328 = vpack.c.b16 %v1072, %v1068
    %v1329 = vpack.c.b16 %v1073, %v1069
    %1586 = vmatpush.bf16.msra.mxu0 %v1102
    %1587 = vmatpush.bf16.msra.mxu0 %v1098
    %1588 = vmatpush.bf16.msra.mxu0 %v1094
    %1589 = vmatpush.bf16.msra.mxu0 %v1090
    %1590 = vmatpush.bf16.msra.mxu0 %v1086
    %1591 = vmatpush.bf16.msra.mxu0 %v1082
    %1592 = vmatpush.bf16.msra.mxu0 %v1078
    %1593 = vmatpush.bf16.msra.mxu0 %v1074
    %1594 = vmatmul.bf16.gmra.mxu0 %v290
    %v1595 = vpop.f32.mrf.mxu0
    %v1596 = vadd.f32 %v280, %v1595
    %v1597 = vpop.f32.mrf.mxu0
    %1598 = vdwg.mxu0
    %1599 = vmatpush.bf16.msra.mxu0 %v1134
    %1600 = vmatpush.bf16.msra.mxu0 %v1130
    %1601 = vmatpush.bf16.msra.mxu0 %v1126
    %1602 = vmatpush.bf16.msra.mxu0 %v1122
    %1603 = vmatpush.bf16.msra.mxu0 %v1118
    %1604 = vmatpush.bf16.msra.mxu0 %v1114
    %1605 = vmatpush.bf16.msra.mxu0 %v1110
    %1606 = vmatpush.bf16.msra.mxu0 %v1106
    %1607 = vmatmul.bf16.gmra.mxu0 %v291
    %v1608 = vpop.f32.mrf.mxu0
    %v1609 = vadd.f32 %v1596, %v1608
    %v1610 = vpop.f32.mrf.mxu0
    %1611 = vdwg.mxu0
    %1612 = vmatpush.bf16.msra.mxu0 %v1166
    %1613 = vmatpush.bf16.msra.mxu0 %v1162
    %1614 = vmatpush.bf16.msra.mxu0 %v1158
    %1615 = vmatpush.bf16.msra.mxu0 %v1154
    %1616 = vmatpush.bf16.msra.mxu0 %v1150
    %1617 = vmatpush.bf16.msra.mxu0 %v1146
    %1618 = vmatpush.bf16.msra.mxu0 %v1142
    %1619 = vmatpush.bf16.msra.mxu0 %v1138
    %1620 = vmatmul.bf16.gmra.mxu0 %v292
    %v1621 = vpop.f32.mrf.mxu0
    %v1622 = vadd.f32 %v1609, %v1621
    %v1623 = vpop.f32.mrf.mxu0
    %1624 = vdwg.mxu0
    %1625 = vmatpush.bf16.msra.mxu0 %v1198
    %1626 = vmatpush.bf16.msra.mxu0 %v1194
    %1627 = vmatpush.bf16.msra.mxu0 %v1190
    %1628 = vmatpush.bf16.msra.mxu0 %v1186
    %1629 = vmatpush.bf16.msra.mxu0 %v1182
    %1630 = vmatpush.bf16.msra.mxu0 %v1178
    %1631 = vmatpush.bf16.msra.mxu0 %v1174
    %1632 = vmatpush.bf16.msra.mxu0 %v1170
    %1633 = vmatmul.bf16.gmra.mxu0 %v293
    %v1634 = vpop.f32.mrf.mxu0
    %v1635 = vadd.f32 %v1622, %v1634
    %v1636 = vpop.f32.mrf.mxu0
    %1637 = vdwg.mxu0
    %1638 = vmatpush.bf16.msra.mxu0 %v1230
    %1639 = vmatpush.bf16.msra.mxu0 %v1226
    %1640 = vmatpush.bf16.msra.mxu0 %v1222
    %1641 = vmatpush.bf16.msra.mxu0 %v1218
    %1642 = vmatpush.bf16.msra.mxu0 %v1214
    %1643 = vmatpush.bf16.msra.mxu0 %v1210
    %1644 = vmatpush.bf16.msra.mxu0 %v1206
    %1645 = vmatpush.bf16.msra.mxu0 %v1202
    %1646 = vmatmul.bf16.gmra.mxu0 %v294
    %v1647 = vpop.f32.mrf.mxu0
    %v1648 = vadd.f32 %v1635, %v1647
    %v1649 = vpop.f32.mrf.mxu0
    %1650 = vdwg.mxu0
    %1651 = vmatpush.bf16.msra.mxu0 %v1262
    %1652 = vmatpush.bf16.msra.mxu0 %v1258
    %1653 = vmatpush.bf16.msra.mxu0 %v1254
    %1654 = vmatpush.bf16.msra.mxu0 %v1250
    %1655 = vmatpush.bf16.msra.mxu0 %v1246
    %1656 = vmatpush.bf16.msra.mxu0 %v1242
    %1657 = vmatpush.bf16.msra.mxu0 %v1238
    %1658 = vmatpush.bf16.msra.mxu0 %v1234
    %1659 = vmatmul.bf16.gmra.mxu0 %v295
    %v1660 = vpop.f32.mrf.mxu0
    %v1661 = vadd.f32 %v1648, %v1660
    %v1662 = vpop.f32.mrf.mxu0
    %1663 = vdwg.mxu0
    %1664 = vmatpush.bf16.msra.mxu0 %v1294
    %1665 = vmatpush.bf16.msra.mxu0 %v1290
    %1666 = vmatpush.bf16.msra.mxu0 %v1286
    %1667 = vmatpush.bf16.msra.mxu0 %v1282
    %1668 = vmatpush.bf16.msra.mxu0 %v1278
    %1669 = vmatpush.bf16.msra.mxu0 %v1274
    %1670 = vmatpush.bf16.msra.mxu0 %v1270
    %1671 = vmatpush.bf16.msra.mxu0 %v1266
    %1672 = vmatmul.bf16.gmra.mxu0 %v296
    %v1673 = vpop.f32.mrf.mxu0
    %v1674 = vadd.f32 %v1661, %v1673
    %v1675 = vpop.f32.mrf.mxu0
    %1676 = vdwg.mxu0
    %1677 = vmatpush.bf16.msra.mxu0 %v1326
    %1678 = vmatpush.bf16.msra.mxu0 %v1322
    %1679 = vmatpush.bf16.msra.mxu0 %v1318
    %1680 = vmatpush.bf16.msra.mxu0 %v1314
    %1681 = vmatpush.bf16.msra.mxu0 %v1310
    %1682 = vmatpush.bf16.msra.mxu0 %v1306
    %1683 = vmatpush.bf16.msra.mxu0 %v1302
    %1684 = vmatpush.bf16.msra.mxu0 %v1298
    %1685 = vmatmul.bf16.gmra.mxu0 %v297
    %v1686 = vpop.f32.mrf.mxu0
    %v1687 = vadd.f32 %v1674, %v1686
    %v1688 = vpop.f32.mrf.mxu0
    %1689 = vdwg.mxu0
    %1690 = vmatpush.bf16.msra.mxu0 %v1103
    %1691 = vmatpush.bf16.msra.mxu0 %v1099
    %1692 = vmatpush.bf16.msra.mxu0 %v1095
    %1693 = vmatpush.bf16.msra.mxu0 %v1091
    %1694 = vmatpush.bf16.msra.mxu0 %v1087
    %1695 = vmatpush.bf16.msra.mxu0 %v1083
    %1696 = vmatpush.bf16.msra.mxu0 %v1079
    %1697 = vmatpush.bf16.msra.mxu0 %v1075
    %1698 = vmatmul.bf16.gmra.mxu0 %v290
    %v1699 = vpop.f32.mrf.mxu0
    %v1700 = vadd.f32 %v281, %v1699
    %v1701 = vpop.f32.mrf.mxu0
    %1702 = vdwg.mxu0
    %1703 = vmatpush.bf16.msra.mxu0 %v1135
    %1704 = vmatpush.bf16.msra.mxu0 %v1131
    %1705 = vmatpush.bf16.msra.mxu0 %v1127
    %1706 = vmatpush.bf16.msra.mxu0 %v1123
    %1707 = vmatpush.bf16.msra.mxu0 %v1119
    %1708 = vmatpush.bf16.msra.mxu0 %v1115
    %1709 = vmatpush.bf16.msra.mxu0 %v1111
    %1710 = vmatpush.bf16.msra.mxu0 %v1107
    %1711 = vmatmul.bf16.gmra.mxu0 %v291
    %v1712 = vpop.f32.mrf.mxu0
    %v1713 = vadd.f32 %v1700, %v1712
    %v1714 = vpop.f32.mrf.mxu0
    %1715 = vdwg.mxu0
    %1716 = vmatpush.bf16.msra.mxu0 %v1167
    %1717 = vmatpush.bf16.msra.mxu0 %v1163
    %1718 = vmatpush.bf16.msra.mxu0 %v1159
    %1719 = vmatpush.bf16.msra.mxu0 %v1155
    %1720 = vmatpush.bf16.msra.mxu0 %v1151
    %1721 = vmatpush.bf16.msra.mxu0 %v1147
    %1722 = vmatpush.bf16.msra.mxu0 %v1143
    %1723 = vmatpush.bf16.msra.mxu0 %v1139
    %1724 = vmatmul.bf16.gmra.mxu0 %v292
    %v1725 = vpop.f32.mrf.mxu0
    %v1726 = vadd.f32 %v1713, %v1725
    %v1727 = vpop.f32.mrf.mxu0
    %1728 = vdwg.mxu0
    %1729 = vmatpush.bf16.msra.mxu0 %v1199
    %1730 = vmatpush.bf16.msra.mxu0 %v1195
    %1731 = vmatpush.bf16.msra.mxu0 %v1191
    %1732 = vmatpush.bf16.msra.mxu0 %v1187
    %1733 = vmatpush.bf16.msra.mxu0 %v1183
    %1734 = vmatpush.bf16.msra.mxu0 %v1179
    %1735 = vmatpush.bf16.msra.mxu0 %v1175
    %1736 = vmatpush.bf16.msra.mxu0 %v1171
    %1737 = vmatmul.bf16.gmra.mxu0 %v293
    %v1738 = vpop.f32.mrf.mxu0
    %v1739 = vadd.f32 %v1726, %v1738
    %v1740 = vpop.f32.mrf.mxu0
    %1741 = vdwg.mxu0
    %1742 = vmatpush.bf16.msra.mxu0 %v1231
    %1743 = vmatpush.bf16.msra.mxu0 %v1227
    %1744 = vmatpush.bf16.msra.mxu0 %v1223
    %1745 = vmatpush.bf16.msra.mxu0 %v1219
    %1746 = vmatpush.bf16.msra.mxu0 %v1215
    %1747 = vmatpush.bf16.msra.mxu0 %v1211
    %1748 = vmatpush.bf16.msra.mxu0 %v1207
    %1749 = vmatpush.bf16.msra.mxu0 %v1203
    %1750 = vmatmul.bf16.gmra.mxu0 %v294
    %v1751 = vpop.f32.mrf.mxu0
    %v1752 = vadd.f32 %v1739, %v1751
    %v1753 = vpop.f32.mrf.mxu0
    %1754 = vdwg.mxu0
    %1755 = vmatpush.bf16.msra.mxu0 %v1263
    %1756 = vmatpush.bf16.msra.mxu0 %v1259
    %1757 = vmatpush.bf16.msra.mxu0 %v1255
    %1758 = vmatpush.bf16.msra.mxu0 %v1251
    %1759 = vmatpush.bf16.msra.mxu0 %v1247
    %1760 = vmatpush.bf16.msra.mxu0 %v1243
    %1761 = vmatpush.bf16.msra.mxu0 %v1239
    %1762 = vmatpush.bf16.msra.mxu0 %v1235
    %1763 = vmatmul.bf16.gmra.mxu0 %v295
    %v1764 = vpop.f32.mrf.mxu0
    %v1765 = vadd.f32 %v1752, %v1764
    %v1766 = vpop.f32.mrf.mxu0
    %1767 = vdwg.mxu0
    %1768 = vmatpush.bf16.msra.mxu0 %v1295
    %1769 = vmatpush.bf16.msra.mxu0 %v1291
    %1770 = vmatpush.bf16.msra.mxu0 %v1287
    %1771 = vmatpush.bf16.msra.mxu0 %v1283
    %1772 = vmatpush.bf16.msra.mxu0 %v1279
    %1773 = vmatpush.bf16.msra.mxu0 %v1275
    %1774 = vmatpush.bf16.msra.mxu0 %v1271
    %1775 = vmatpush.bf16.msra.mxu0 %v1267
    %1776 = vmatmul.bf16.gmra.mxu0 %v296
    %v1777 = vpop.f32.mrf.mxu0
    %v1778 = vadd.f32 %v1765, %v1777
    %v1779 = vpop.f32.mrf.mxu0
    %1780 = vdwg.mxu0
    %1781 = vmatpush.bf16.msra.mxu0 %v1327
    %1782 = vmatpush.bf16.msra.mxu0 %v1323
    %1783 = vmatpush.bf16.msra.mxu0 %v1319
    %1784 = vmatpush.bf16.msra.mxu0 %v1315
    %1785 = vmatpush.bf16.msra.mxu0 %v1311
    %1786 = vmatpush.bf16.msra.mxu0 %v1307
    %1787 = vmatpush.bf16.msra.mxu0 %v1303
    %1788 = vmatpush.bf16.msra.mxu0 %v1299
    %1789 = vmatmul.bf16.gmra.mxu0 %v297
    %v1790 = vpop.f32.mrf.mxu0
    %v1791 = vadd.f32 %v1778, %v1790
    %v1792 = vpop.f32.mrf.mxu0
    %1793 = vdwg.mxu0
    %1794 = vmatpush.bf16.msra.mxu0 %v1104
    %1795 = vmatpush.bf16.msra.mxu0 %v1100
    %1796 = vmatpush.bf16.msra.mxu0 %v1096
    %1797 = vmatpush.bf16.msra.mxu0 %v1092
    %1798 = vmatpush.bf16.msra.mxu0 %v1088
    %1799 = vmatpush.bf16.msra.mxu0 %v1084
    %1800 = vmatpush.bf16.msra.mxu0 %v1080
    %1801 = vmatpush.bf16.msra.mxu0 %v1076
    %1802 = vmatmul.bf16.gmra.mxu0 %v290
    %v1803 = vpop.f32.mrf.mxu0
    %v1804 = vadd.f32 %v282, %v1803
    %v1805 = vpop.f32.mrf.mxu0
    %1806 = vdwg.mxu0
    %1807 = vmatpush.bf16.msra.mxu0 %v1136
    %1808 = vmatpush.bf16.msra.mxu0 %v1132
    %1809 = vmatpush.bf16.msra.mxu0 %v1128
    %1810 = vmatpush.bf16.msra.mxu0 %v1124
    %1811 = vmatpush.bf16.msra.mxu0 %v1120
    %1812 = vmatpush.bf16.msra.mxu0 %v1116
    %1813 = vmatpush.bf16.msra.mxu0 %v1112
    %1814 = vmatpush.bf16.msra.mxu0 %v1108
    %1815 = vmatmul.bf16.gmra.mxu0 %v291
    %v1816 = vpop.f32.mrf.mxu0
    %v1817 = vadd.f32 %v1804, %v1816
    %v1818 = vpop.f32.mrf.mxu0
    %1819 = vdwg.mxu0
    %1820 = vmatpush.bf16.msra.mxu0 %v1168
    %1821 = vmatpush.bf16.msra.mxu0 %v1164
    %1822 = vmatpush.bf16.msra.mxu0 %v1160
    %1823 = vmatpush.bf16.msra.mxu0 %v1156
    %1824 = vmatpush.bf16.msra.mxu0 %v1152
    %1825 = vmatpush.bf16.msra.mxu0 %v1148
    %1826 = vmatpush.bf16.msra.mxu0 %v1144
    %1827 = vmatpush.bf16.msra.mxu0 %v1140
    %1828 = vmatmul.bf16.gmra.mxu0 %v292
    %v1829 = vpop.f32.mrf.mxu0
    %v1830 = vadd.f32 %v1817, %v1829
    %v1831 = vpop.f32.mrf.mxu0
    %1832 = vdwg.mxu0
    %1833 = vmatpush.bf16.msra.mxu0 %v1200
    %1834 = vmatpush.bf16.msra.mxu0 %v1196
    %1835 = vmatpush.bf16.msra.mxu0 %v1192
    %1836 = vmatpush.bf16.msra.mxu0 %v1188
    %1837 = vmatpush.bf16.msra.mxu0 %v1184
    %1838 = vmatpush.bf16.msra.mxu0 %v1180
    %1839 = vmatpush.bf16.msra.mxu0 %v1176
    %1840 = vmatpush.bf16.msra.mxu0 %v1172
    %1841 = vmatmul.bf16.gmra.mxu0 %v293
    %v1842 = vpop.f32.mrf.mxu0
    %v1843 = vadd.f32 %v1830, %v1842
    %v1844 = vpop.f32.mrf.mxu0
    %1845 = vdwg.mxu0
    %1846 = vmatpush.bf16.msra.mxu0 %v1232
    %1847 = vmatpush.bf16.msra.mxu0 %v1228
    %1848 = vmatpush.bf16.msra.mxu0 %v1224
    %1849 = vmatpush.bf16.msra.mxu0 %v1220
    %1850 = vmatpush.bf16.msra.mxu0 %v1216
    %1851 = vmatpush.bf16.msra.mxu0 %v1212
    %1852 = vmatpush.bf16.msra.mxu0 %v1208
    %1853 = vmatpush.bf16.msra.mxu0 %v1204
    %1854 = vmatmul.bf16.gmra.mxu0 %v294
    %v1855 = vpop.f32.mrf.mxu0
    %v1856 = vadd.f32 %v1843, %v1855
    %v1857 = vpop.f32.mrf.mxu0
    %1858 = vdwg.mxu0
    %1859 = vmatpush.bf16.msra.mxu0 %v1264
    %1860 = vmatpush.bf16.msra.mxu0 %v1260
    %1861 = vmatpush.bf16.msra.mxu0 %v1256
    %1862 = vmatpush.bf16.msra.mxu0 %v1252
    %1863 = vmatpush.bf16.msra.mxu0 %v1248
    %1864 = vmatpush.bf16.msra.mxu0 %v1244
    %1865 = vmatpush.bf16.msra.mxu0 %v1240
    %1866 = vmatpush.bf16.msra.mxu0 %v1236
    %1867 = vmatmul.bf16.gmra.mxu0 %v295
    %v1868 = vpop.f32.mrf.mxu0
    %v1869 = vadd.f32 %v1856, %v1868
    %v1870 = vpop.f32.mrf.mxu0
    %1871 = vdwg.mxu0
    %1872 = vmatpush.bf16.msra.mxu0 %v1296
    %1873 = vmatpush.bf16.msra.mxu0 %v1292
    %1874 = vmatpush.bf16.msra.mxu0 %v1288
    %1875 = vmatpush.bf16.msra.mxu0 %v1284
    %1876 = vmatpush.bf16.msra.mxu0 %v1280
    %1877 = vmatpush.bf16.msra.mxu0 %v1276
    %1878 = vmatpush.bf16.msra.mxu0 %v1272
    %1879 = vmatpush.bf16.msra.mxu0 %v1268
    %1880 = vmatmul.bf16.gmra.mxu0 %v296
    %v1881 = vpop.f32.mrf.mxu0
    %v1882 = vadd.f32 %v1869, %v1881
    %v1883 = vpop.f32.mrf.mxu0
    %1884 = vdwg.mxu0
    %1885 = vmatpush.bf16.msra.mxu0 %v1328
    %1886 = vmatpush.bf16.msra.mxu0 %v1324
    %1887 = vmatpush.bf16.msra.mxu0 %v1320
    %1888 = vmatpush.bf16.msra.mxu0 %v1316
    %1889 = vmatpush.bf16.msra.mxu0 %v1312
    %1890 = vmatpush.bf16.msra.mxu0 %v1308
    %1891 = vmatpush.bf16.msra.mxu0 %v1304
    %1892 = vmatpush.bf16.msra.mxu0 %v1300
    %1893 = vmatmul.bf16.gmra.mxu0 %v297
    %v1894 = vpop.f32.mrf.mxu0
    %v1895 = vadd.f32 %v1882, %v1894
    %v1896 = vpop.f32.mrf.mxu0
    %1897 = vdwg.mxu0
    %1898 = vmatpush.bf16.msra.mxu0 %v1105
    %1899 = vmatpush.bf16.msra.mxu0 %v1101
    %1900 = vmatpush.bf16.msra.mxu0 %v1097
    %1901 = vmatpush.bf16.msra.mxu0 %v1093
    %1902 = vmatpush.bf16.msra.mxu0 %v1089
    %1903 = vmatpush.bf16.msra.mxu0 %v1085
    %1904 = vmatpush.bf16.msra.mxu0 %v1081
    %1905 = vmatpush.bf16.msra.mxu0 %v1077
    %1906 = vmatmul.bf16.gmra.mxu0 %v290
    %v1907 = vpop.f32.mrf.mxu0
    %v1908 = vadd.f32 %v283, %v1907
    %v1909 = vpop.f32.mrf.mxu0
    %1910 = vdwg.mxu0
    %1911 = vmatpush.bf16.msra.mxu0 %v1137
    %1912 = vmatpush.bf16.msra.mxu0 %v1133
    %1913 = vmatpush.bf16.msra.mxu0 %v1129
    %1914 = vmatpush.bf16.msra.mxu0 %v1125
    %1915 = vmatpush.bf16.msra.mxu0 %v1121
    %1916 = vmatpush.bf16.msra.mxu0 %v1117
    %1917 = vmatpush.bf16.msra.mxu0 %v1113
    %1918 = vmatpush.bf16.msra.mxu0 %v1109
    %1919 = vmatmul.bf16.gmra.mxu0 %v291
    %v1920 = vpop.f32.mrf.mxu0
    %v1921 = vadd.f32 %v1908, %v1920
    %v1922 = vpop.f32.mrf.mxu0
    %1923 = vdwg.mxu0
    %1924 = vmatpush.bf16.msra.mxu0 %v1169
    %1925 = vmatpush.bf16.msra.mxu0 %v1165
    %1926 = vmatpush.bf16.msra.mxu0 %v1161
    %1927 = vmatpush.bf16.msra.mxu0 %v1157
    %1928 = vmatpush.bf16.msra.mxu0 %v1153
    %1929 = vmatpush.bf16.msra.mxu0 %v1149
    %1930 = vmatpush.bf16.msra.mxu0 %v1145
    %1931 = vmatpush.bf16.msra.mxu0 %v1141
    %1932 = vmatmul.bf16.gmra.mxu0 %v292
    %v1933 = vpop.f32.mrf.mxu0
    %v1934 = vadd.f32 %v1921, %v1933
    %v1935 = vpop.f32.mrf.mxu0
    %1936 = vdwg.mxu0
    %1937 = vmatpush.bf16.msra.mxu0 %v1201
    %1938 = vmatpush.bf16.msra.mxu0 %v1197
    %1939 = vmatpush.bf16.msra.mxu0 %v1193
    %1940 = vmatpush.bf16.msra.mxu0 %v1189
    %1941 = vmatpush.bf16.msra.mxu0 %v1185
    %1942 = vmatpush.bf16.msra.mxu0 %v1181
    %1943 = vmatpush.bf16.msra.mxu0 %v1177
    %1944 = vmatpush.bf16.msra.mxu0 %v1173
    %1945 = vmatmul.bf16.gmra.mxu0 %v293
    %v1946 = vpop.f32.mrf.mxu0
    %v1947 = vadd.f32 %v1934, %v1946
    %v1948 = vpop.f32.mrf.mxu0
    %1949 = vdwg.mxu0
    %1950 = vmatpush.bf16.msra.mxu0 %v1233
    %1951 = vmatpush.bf16.msra.mxu0 %v1229
    %1952 = vmatpush.bf16.msra.mxu0 %v1225
    %1953 = vmatpush.bf16.msra.mxu0 %v1221
    %1954 = vmatpush.bf16.msra.mxu0 %v1217
    %1955 = vmatpush.bf16.msra.mxu0 %v1213
    %1956 = vmatpush.bf16.msra.mxu0 %v1209
    %1957 = vmatpush.bf16.msra.mxu0 %v1205
    %1958 = vmatmul.bf16.gmra.mxu0 %v294
    %v1959 = vpop.f32.mrf.mxu0
    %v1960 = vadd.f32 %v1947, %v1959
    %v1961 = vpop.f32.mrf.mxu0
    %1962 = vdwg.mxu0
    %1963 = vmatpush.bf16.msra.mxu0 %v1265
    %1964 = vmatpush.bf16.msra.mxu0 %v1261
    %1965 = vmatpush.bf16.msra.mxu0 %v1257
    %1966 = vmatpush.bf16.msra.mxu0 %v1253
    %1967 = vmatpush.bf16.msra.mxu0 %v1249
    %1968 = vmatpush.bf16.msra.mxu0 %v1245
    %1969 = vmatpush.bf16.msra.mxu0 %v1241
    %1970 = vmatpush.bf16.msra.mxu0 %v1237
    %1971 = vmatmul.bf16.gmra.mxu0 %v295
    %v1972 = vpop.f32.mrf.mxu0
    %v1973 = vadd.f32 %v1960, %v1972
    %v1974 = vpop.f32.mrf.mxu0
    %1975 = vdwg.mxu0
    %1976 = vmatpush.bf16.msra.mxu0 %v1297
    %1977 = vmatpush.bf16.msra.mxu0 %v1293
    %1978 = vmatpush.bf16.msra.mxu0 %v1289
    %1979 = vmatpush.bf16.msra.mxu0 %v1285
    %1980 = vmatpush.bf16.msra.mxu0 %v1281
    %1981 = vmatpush.bf16.msra.mxu0 %v1277
    %1982 = vmatpush.bf16.msra.mxu0 %v1273
    %1983 = vmatpush.bf16.msra.mxu0 %v1269
    %1984 = vmatmul.bf16.gmra.mxu0 %v296
    %v1985 = vpop.f32.mrf.mxu0
    %v1986 = vadd.f32 %v1973, %v1985
    %v1987 = vpop.f32.mrf.mxu0
    %1988 = vdwg.mxu0
    %1989 = vmatpush.bf16.msra.mxu0 %v1329
    %1990 = vmatpush.bf16.msra.mxu0 %v1325
    %1991 = vmatpush.bf16.msra.mxu0 %v1321
    %1992 = vmatpush.bf16.msra.mxu0 %v1317
    %1993 = vmatpush.bf16.msra.mxu0 %v1313
    %1994 = vmatpush.bf16.msra.mxu0 %v1309
    %1995 = vmatpush.bf16.msra.mxu0 %v1305
    %1996 = vmatpush.bf16.msra.mxu0 %v1301
    %1997 = vmatmul.bf16.gmra.mxu0 %v297
    %v1998 = vpop.f32.mrf.mxu0
    %v1999 = vadd.f32 %v1986, %v1998
    %v2000 = vpop.f32.mrf.mxu0
    %2001 = vdwg.mxu0
    %v2002 = vmax.f32 %v1687, 0.0
    %v2003 = vmax.f32 %v1791, 0.0
    %v2004 = vmax.f32 %v1895, 0.0
    %v2005 = vmax.f32 %v1999, 0.0
    %v2006 = vpack.c.bf16 %v2002, %v2002
    %v2007 = vpack.c.bf16 %v2003, %v2003
    %v2008 = vpack.c.bf16 %v2004, %v2004
    %v2009 = vpack.c.bf16 %v2005, %v2005
    %v2010 = vld [vmem:[%s3] sm:$0xf]
    %v2011 = vld [vmem:[%s3 + $0x4] sm:$0xf]
    %v2012 = vld [vmem:[%s3 + $0x8] sm:$0xf]
    %v2013 = vld [vmem:[%s3 + $0xc] sm:$0xf]
    %v2014 = vld [vmem:[%s3 + $0x10] sm:$0xf]
    %v2015 = vld [vmem:[%s3 + $0x14] sm:$0xf]
    %v2016 = vld [vmem:[%s3 + $0x18] sm:$0xf]
    %v2017 = vld [vmem:[%s3 + $0x1c] sm:$0xf]
    %v2018 = vld [vmem:[%s3 + $0x20] sm:$0xf]
    %v2019 = vld [vmem:[%s3 + $0x24] sm:$0xf]
    %v2020 = vld [vmem:[%s3 + $0x28] sm:$0xf]
    %v2021 = vld [vmem:[%s3 + $0x2c] sm:$0xf]
    %v2022 = vld [vmem:[%s3 + $0x30] sm:$0xf]
    %v2023 = vld [vmem:[%s3 + $0x34] sm:$0xf]
    %v2024 = vld [vmem:[%s3 + $0x38] sm:$0xf]
    %v2025 = vld [vmem:[%s3 + $0x3c] sm:$0xf]
    %v2026 = vld [vmem:[%s3 + $0x40] sm:$0xf]
    %v2027 = vld [vmem:[%s3 + $0x44] sm:$0xf]
    %v2028 = vld [vmem:[%s3 + $0x48] sm:$0xf]
    %v2029 = vld [vmem:[%s3 + $0x4c] sm:$0xf]
    %v2030 = vld [vmem:[%s3 + $0x50] sm:$0xf]
    %v2031 = vld [vmem:[%s3 + $0x54] sm:$0xf]
    %v2032 = vld [vmem:[%s3 + $0x58] sm:$0xf]
    %v2033 = vld [vmem:[%s3 + $0x5c] sm:$0xf]
    %v2034 = vld [vmem:[%s3 + $0x60] sm:$0xf]
    %v2035 = vld [vmem:[%s3 + $0x64] sm:$0xf]
    %v2036 = vld [vmem:[%s3 + $0x68] sm:$0xf]
    %v2037 = vld [vmem:[%s3 + $0x6c] sm:$0xf]
    %v2038 = vld [vmem:[%s3 + $0x70] sm:$0xf]
    %v2039 = vld [vmem:[%s3 + $0x74] sm:$0xf]
    %v2040 = vld [vmem:[%s3 + $0x78] sm:$0xf]
    %v2041 = vld [vmem:[%s3 + $0x7c] sm:$0xf]
    %v2042 = vld [vmem:[%s3 + $0x80] sm:$0xf]
    %v2043 = vld [vmem:[%s3 + $0x84] sm:$0xf]
    %v2044 = vld [vmem:[%s3 + $0x88] sm:$0xf]
    %v2045 = vld [vmem:[%s3 + $0x8c] sm:$0xf]
    %v2046 = vld [vmem:[%s3 + $0x90] sm:$0xf]
    %v2047 = vld [vmem:[%s3 + $0x94] sm:$0xf]
    %v2048 = vld [vmem:[%s3 + $0x98] sm:$0xf]
    %v2049 = vld [vmem:[%s3 + $0x9c] sm:$0xf]
    %v2050 = vld [vmem:[%s3 + $0xa0] sm:$0xf]
    %v2051 = vld [vmem:[%s3 + $0xa4] sm:$0xf]
    %v2052 = vld [vmem:[%s3 + $0xa8] sm:$0xf]
    %v2053 = vld [vmem:[%s3 + $0xac] sm:$0xf]
    %v2054 = vld [vmem:[%s3 + $0xb0] sm:$0xf]
    %v2055 = vld [vmem:[%s3 + $0xb4] sm:$0xf]
    %v2056 = vld [vmem:[%s3 + $0xb8] sm:$0xf]
    %v2057 = vld [vmem:[%s3 + $0xbc] sm:$0xf]
    %v2058 = vld [vmem:[%s3 + $0xc0] sm:$0xf]
    %v2059 = vld [vmem:[%s3 + $0xc4] sm:$0xf]
    %v2060 = vld [vmem:[%s3 + $0xc8] sm:$0xf]
    %v2061 = vld [vmem:[%s3 + $0xcc] sm:$0xf]
    %v2062 = vld [vmem:[%s3 + $0xd0] sm:$0xf]
    %v2063 = vld [vmem:[%s3 + $0xd4] sm:$0xf]
    %v2064 = vld [vmem:[%s3 + $0xd8] sm:$0xf]
    %v2065 = vld [vmem:[%s3 + $0xdc] sm:$0xf]
    %v2066 = vld [vmem:[%s3 + $0xe0] sm:$0xf]
    %v2067 = vld [vmem:[%s3 + $0xe4] sm:$0xf]
    %v2068 = vld [vmem:[%s3 + $0xe8] sm:$0xf]
    %v2069 = vld [vmem:[%s3 + $0xec] sm:$0xf]
    %v2070 = vld [vmem:[%s3 + $0xf0] sm:$0xf]
    %v2071 = vld [vmem:[%s3 + $0xf4] sm:$0xf]
    %v2072 = vld [vmem:[%s3 + $0xf8] sm:$0xf]
    %v2073 = vld [vmem:[%s3 + $0xfc] sm:$0xf]
    %v2074 = vld [vmem:[%s4] sm:$0x1]
    %v2076 = vperm.slane %v2074, 0
    %v2142 = vunpack.c.l.b16 %v2010
    %v2143 = vunpack.c.l.b16 %v2011
    %v2144 = vunpack.c.l.b16 %v2012
    %v2145 = vunpack.c.l.b16 %v2013
    %v2146 = vunpack.c.l.b16 %v2014
    %v2147 = vunpack.c.l.b16 %v2015
    %v2148 = vunpack.c.l.b16 %v2016
    %v2149 = vunpack.c.l.b16 %v2017
    %v2150 = vunpack.c.l.b16 %v2018
    %v2151 = vunpack.c.l.b16 %v2019
    %v2152 = vunpack.c.l.b16 %v2020
    %v2153 = vunpack.c.l.b16 %v2021
    %v2154 = vunpack.c.l.b16 %v2022
    %v2155 = vunpack.c.l.b16 %v2023
    %v2156 = vunpack.c.l.b16 %v2024
    %v2157 = vunpack.c.l.b16 %v2025
    %v2158 = vunpack.c.l.b16 %v2026
    %v2159 = vunpack.c.l.b16 %v2027
    %v2160 = vunpack.c.l.b16 %v2028
    %v2161 = vunpack.c.l.b16 %v2029
    %v2162 = vunpack.c.l.b16 %v2030
    %v2163 = vunpack.c.l.b16 %v2031
    %v2164 = vunpack.c.l.b16 %v2032
    %v2165 = vunpack.c.l.b16 %v2033
    %v2166 = vunpack.c.l.b16 %v2034
    %v2167 = vunpack.c.l.b16 %v2035
    %v2168 = vunpack.c.l.b16 %v2036
    %v2169 = vunpack.c.l.b16 %v2037
    %v2170 = vunpack.c.l.b16 %v2038
    %v2171 = vunpack.c.l.b16 %v2039
    %v2172 = vunpack.c.l.b16 %v2040
    %v2173 = vunpack.c.l.b16 %v2041
    %v2174 = vunpack.c.l.b16 %v2042
    %v2175 = vunpack.c.l.b16 %v2043
    %v2176 = vunpack.c.l.b16 %v2044
    %v2177 = vunpack.c.l.b16 %v2045
    %v2178 = vunpack.c.l.b16 %v2046
    %v2179 = vunpack.c.l.b16 %v2047
    %v2180 = vunpack.c.l.b16 %v2048
    %v2181 = vunpack.c.l.b16 %v2049
    %v2182 = vunpack.c.l.b16 %v2050
    %v2183 = vunpack.c.l.b16 %v2051
    %v2184 = vunpack.c.l.b16 %v2052
    %v2185 = vunpack.c.l.b16 %v2053
    %v2186 = vunpack.c.l.b16 %v2054
    %v2187 = vunpack.c.l.b16 %v2055
    %v2188 = vunpack.c.l.b16 %v2056
    %v2189 = vunpack.c.l.b16 %v2057
    %v2190 = vunpack.c.l.b16 %v2058
    %v2191 = vunpack.c.l.b16 %v2059
    %v2192 = vunpack.c.l.b16 %v2060
    %v2193 = vunpack.c.l.b16 %v2061
    %v2194 = vunpack.c.l.b16 %v2062
    %v2195 = vunpack.c.l.b16 %v2063
    %v2196 = vunpack.c.l.b16 %v2064
    %v2197 = vunpack.c.l.b16 %v2065
    %v2198 = vunpack.c.l.b16 %v2066
    %v2199 = vunpack.c.l.b16 %v2067
    %v2200 = vunpack.c.l.b16 %v2068
    %v2201 = vunpack.c.l.b16 %v2069
    %v2202 = vunpack.c.l.b16 %v2070
    %v2203 = vunpack.c.l.b16 %v2071
    %v2204 = vunpack.c.l.b16 %v2072
    %v2205 = vunpack.c.l.b16 %v2073
    %v2206 = vpack.c.b16 %v2143, %v2142
    %v2207 = vpack.c.b16 %v2145, %v2144
    %v2208 = vpack.c.b16 %v2147, %v2146
    %v2209 = vpack.c.b16 %v2149, %v2148
    %v2210 = vpack.c.b16 %v2151, %v2150
    %v2211 = vpack.c.b16 %v2153, %v2152
    %v2212 = vpack.c.b16 %v2155, %v2154
    %v2213 = vpack.c.b16 %v2157, %v2156
    %v2214 = vpack.c.b16 %v2159, %v2158
    %v2215 = vpack.c.b16 %v2161, %v2160
    %v2216 = vpack.c.b16 %v2163, %v2162
    %v2217 = vpack.c.b16 %v2165, %v2164
    %v2218 = vpack.c.b16 %v2167, %v2166
    %v2219 = vpack.c.b16 %v2169, %v2168
    %v2220 = vpack.c.b16 %v2171, %v2170
    %v2221 = vpack.c.b16 %v2173, %v2172
    %v2222 = vpack.c.b16 %v2175, %v2174
    %v2223 = vpack.c.b16 %v2177, %v2176
    %v2224 = vpack.c.b16 %v2179, %v2178
    %v2225 = vpack.c.b16 %v2181, %v2180
    %v2226 = vpack.c.b16 %v2183, %v2182
    %v2227 = vpack.c.b16 %v2185, %v2184
    %v2228 = vpack.c.b16 %v2187, %v2186
    %v2229 = vpack.c.b16 %v2189, %v2188
    %v2230 = vpack.c.b16 %v2191, %v2190
    %v2231 = vpack.c.b16 %v2193, %v2192
    %v2232 = vpack.c.b16 %v2195, %v2194
    %v2233 = vpack.c.b16 %v2197, %v2196
    %v2234 = vpack.c.b16 %v2199, %v2198
    %v2235 = vpack.c.b16 %v2201, %v2200
    %v2236 = vpack.c.b16 %v2203, %v2202
    %v2237 = vpack.c.b16 %v2205, %v2204
    %2270 = vmatpush.bf16.msra.mxu0 %v2213
    %2271 = vmatpush.bf16.msra.mxu0 %v2212
    %2272 = vmatpush.bf16.msra.mxu0 %v2211
    %2273 = vmatpush.bf16.msra.mxu0 %v2210
    %2274 = vmatpush.bf16.msra.mxu0 %v2209
    %2275 = vmatpush.bf16.msra.mxu0 %v2208
    %2276 = vmatpush.bf16.msra.mxu0 %v2207
    %2277 = vmatpush.bf16.msra.mxu0 %v2206
    %2278 = vmatmul.bf16.gmra.mxu0 %v2006
    %v2279 = vpop.f32.mrf.mxu0
    %v2280 = vadd.f32 %v2076, %v2279
    %v2281 = vpop.f32.mrf.mxu0
    %2282 = vdwg.mxu0
    %2283 = vmatpush.bf16.msra.mxu0 %v2221
    %2284 = vmatpush.bf16.msra.mxu0 %v2220
    %2285 = vmatpush.bf16.msra.mxu0 %v2219
    %2286 = vmatpush.bf16.msra.mxu0 %v2218
    %2287 = vmatpush.bf16.msra.mxu0 %v2217
    %2288 = vmatpush.bf16.msra.mxu0 %v2216
    %2289 = vmatpush.bf16.msra.mxu0 %v2215
    %2290 = vmatpush.bf16.msra.mxu0 %v2214
    %2291 = vmatmul.bf16.gmra.mxu0 %v2007
    %v2292 = vpop.f32.mrf.mxu0
    %v2293 = vadd.f32 %v2280, %v2292
    %v2294 = vpop.f32.mrf.mxu0
    %2295 = vdwg.mxu0
    %2296 = vmatpush.bf16.msra.mxu0 %v2229
    %2297 = vmatpush.bf16.msra.mxu0 %v2228
    %2298 = vmatpush.bf16.msra.mxu0 %v2227
    %2299 = vmatpush.bf16.msra.mxu0 %v2226
    %2300 = vmatpush.bf16.msra.mxu0 %v2225
    %2301 = vmatpush.bf16.msra.mxu0 %v2224
    %2302 = vmatpush.bf16.msra.mxu0 %v2223
    %2303 = vmatpush.bf16.msra.mxu0 %v2222
    %2304 = vmatmul.bf16.gmra.mxu0 %v2008
    %v2305 = vpop.f32.mrf.mxu0
    %v2306 = vadd.f32 %v2293, %v2305
    %v2307 = vpop.f32.mrf.mxu0
    %2308 = vdwg.mxu0
    %2309 = vmatpush.bf16.msra.mxu0 %v2237
    %2310 = vmatpush.bf16.msra.mxu0 %v2236
    %2311 = vmatpush.bf16.msra.mxu0 %v2235
    %2312 = vmatpush.bf16.msra.mxu0 %v2234
    %2313 = vmatpush.bf16.msra.mxu0 %v2233
    %2314 = vmatpush.bf16.msra.mxu0 %v2232
    %2315 = vmatpush.bf16.msra.mxu0 %v2231
    %2316 = vmatpush.bf16.msra.mxu0 %v2230
    %2317 = vmatmul.bf16.gmra.mxu0 %v2009
    %v2318 = vpop.f32.mrf.mxu0
    %v2319 = vadd.f32 %v2306, %v2318
    %v2320 = vpop.f32.mrf.mxu0
    %2321 = vdwg.mxu0
    %vm2322 = vcmask 25600
    %2323 = vst.msk [vmem:[#allocation2] sm:$0x3] %vm2322, %v2319
    // Predicated region
    $region22: #{small_cnn_forward.7} parent=1 // pred_check
      _
    $region23: #{small_cnn_forward.7} parent=1 // pred_check_branch
      %2325 = sbr.rel (0) target = $region25
    $region24: #{small_cnn_forward.7} parent=1 // pred_region
      %2327 = vsyncadd [#allocation3], 0
      %s2329 = sshll.u32 [#allocation2], 4
      %s2330 = int_to_ptr.vmem [resolvable:$true] %s2329
      %s2331 = sshll.u32 %s5, 4
      %s2332 = int_to_ptr.hbm [resolvable:$true] %s2331
      %2334 = dma.vmem_to_hbm [thread:$0]  %s2330, 32, %s2332, [#allocation3]
    $region25: #{small_cnn_forward.7} parent=1 // pred_fallthru
      _
    // Predicated region
    $region26: #{small_cnn_forward.7} parent=1 // pred_check
      _
    $region27: #{small_cnn_forward.7} parent=1 // pred_check_branch
      %2336 = sbr.rel (0) target = $region29
    $region28: #{small_cnn_forward.7} parent=1 // pred_region
      %2338 = dma.done [#allocation3], 32
    $region29: #{small_cnn_forward.7} parent=1 // pred_fallthru
      _
    %2339 = vsyncpa [#allocation3], 1

</llo_original>
